<compile_context>
chip_gen: v7x
topology: tpu7x:2x2x1
jax: 0.10.0
libtpu: 0.0.40
codegen_flags: <defaults>
</compile_context>

<pallas_src>
import jax
import jax.numpy as jnp
from jax.experimental import pallas as pl
from jax.experimental.pallas import tpu as pltpu

H_BERT = 768         # BERT hidden size (fc1 input)
H_FC1 = 512          # fc1 output
N_CLASSES = 2        # fc2 output
N_CLASSES_PAD = 128  # lane-dense padded class dimension
NEG_INF = -1e30      # padding value for fc2 bias columns (kills padded logits)


def bert_head_kernel(pooled_ref, wp_ref, bp_ref, w1_ref, b1_ref,
                     w2_ref, b2_ref, out_ref):
    """Pooler dense + tanh -> fc1 -> ReLU -> (dropout=id) -> fc2 -> log_softmax."""
    x = pooled_ref[...].astype(jnp.bfloat16)                              # [TB, 768]

    # ---- synthetic BERT pooler dense + tanh -> pooler_output (f32) ----------
    p = jnp.dot(x, wp_ref[...], preferred_element_type=jnp.float32) + bp_ref[...]
    p = jnp.tanh(p)                                                       # [TB, 768]

    # ---- fc1 + ReLU  (nn.Dropout(0.1) is identity at inference) -------------
    # TODO(synk): training-mode stochastic dropout not implemented.
    h1 = jnp.dot(p.astype(jnp.bfloat16), w1_ref[...],
                 preferred_element_type=jnp.float32) + b1_ref[...]        # [TB, 512]
    h1 = jnp.maximum(h1, 0.0)

    # ---- fc2 (lane-padded to 128); padded bias columns are -1e30 ------------
    logits = jnp.dot(h1.astype(jnp.bfloat16), w2_ref[...],
                     preferred_element_type=jnp.float32) + b2_ref[...]    # [TB, 128]

    # ---- LogSoftmax(dim=1) in f32 (padded logits contribute exp(-1e30)=0) ---
    mx = jnp.max(logits, axis=-1, keepdims=True)
    z = logits - mx
    lse = jnp.log(jnp.sum(jnp.exp(z), axis=-1, keepdims=True))
    out_ref[...] = (z - lse).astype(out_ref.dtype)


def init_params(vocab_size=30, seed=0):
    k = jax.random.PRNGKey(seed)
    ks = jax.random.split(k, 7)
    scale = 0.02
    return {
        "emb_table": scale * jax.random.normal(ks[0], (vocab_size, H_BERT), jnp.float32),
        "wp": scale * jax.random.normal(ks[1], (H_BERT, H_BERT), jnp.float32),
        "bp": scale * jax.random.normal(ks[2], (1, H_BERT), jnp.float32),
        "w1": scale * jax.random.normal(ks[3], (H_BERT, H_FC1), jnp.float32),
        "b1": scale * jax.random.normal(ks[4], (1, H_FC1), jnp.float32),
        "w2": scale * jax.random.normal(ks[5], (H_FC1, N_CLASSES), jnp.float32),
        "b2": scale * jax.random.normal(ks[6], (1, N_CLASSES), jnp.float32),
    }


def _round_up(x, m):
    return ((x + m - 1) // m) * m


def bert_arch_forward(sent_id, mask, params, *, tb=128):
    B, S = sent_id.shape

    # ---- synthetic backbone: embedding gather + masked-mean pooling (fused by XLA;
    #      avoids materializing [B, S, 768] in HBM for the kernel to re-read) -------
    emb = jnp.take(params["emb_table"], sent_id, axis=0)                  # [B, S, H]
    m = mask.astype(jnp.float32)
    inv = 1.0 / jnp.maximum(jnp.sum(m, axis=-1, keepdims=True), 1.0)      # [B, 1]
    pooled = jnp.einsum("bsh,bs->bh", emb, m) * inv                       # [B, H] f32

    # ---- batch tiling: largest tile <= tb (multiple of 8) that covers the batch ---
    tb = max(8, _round_up(min(int(tb), _round_up(B, 8)), 8))
    Bp = _round_up(B, tb)
    if Bp != B:
        pooled = jnp.pad(pooled, ((0, Bp - B), (0, 0)))

    # ---- weights: bf16 MXU operands, f32 biases, lane-dense padded fc2 ------------
    wp = params["wp"].astype(jnp.bfloat16)
    w1 = params["w1"].astype(jnp.bfloat16)
    w2 = jnp.zeros((H_FC1, N_CLASSES_PAD), jnp.bfloat16).at[:, :N_CLASSES].set(
        params["w2"].astype(jnp.bfloat16))
    b2 = jnp.full((1, N_CLASSES_PAD), NEG_INF, jnp.float32).at[:, :N_CLASSES].set(
        params["b2"])

    grid = (Bp // tb,)
    out = pl.pallas_call(
        bert_head_kernel,
        out_shape=jax.ShapeDtypeStruct((Bp, N_CLASSES_PAD), jnp.float32),
        grid_spec=pltpu.PrefetchScalarGridSpec(
            num_scalar_prefetch=0,
            grid=grid,
            in_specs=[
                pl.BlockSpec((tb, H_BERT), lambda i: (i, 0)),             # pooled tile
                pl.BlockSpec((H_BERT, H_BERT), lambda i: (0, 0)),         # pooler W (bf16)
                pl.BlockSpec((1, H_BERT), lambda i: (0, 0)),              # pooler b (f32)
                pl.BlockSpec((H_BERT, H_FC1), lambda i: (0, 0)),          # fc1 W (bf16)
                pl.BlockSpec((1, H_FC1), lambda i: (0, 0)),               # fc1 b (f32)
                pl.BlockSpec((H_FC1, N_CLASSES_PAD), lambda i: (0, 0)),   # fc2 W padded
                pl.BlockSpec((1, N_CLASSES_PAD), lambda i: (0, 0)),       # fc2 b padded
            ],
            out_specs=pl.BlockSpec((tb, N_CLASSES_PAD), lambda i: (i, 0)),
        ),
        compiler_params=pltpu.CompilerParams(
            dimension_semantics=("parallel",),
            vmem_limit_bytes=32 * 1024 * 1024,   # ~6 MiB actually used at tb=256; safe on v5e/v6e/v7x
        ),
    )(pooled, wp, params["bp"], w1, params["b1"], w2, b2)

    return out[:B, :N_CLASSES]


def reference_forward(sent_id, mask, params):
    """Pure-JAX f32 reference mirroring the forward pass (for correctness check)."""
    emb = jnp.take(params["emb_table"], sent_id, axis=0).astype(jnp.float32)
    m = mask.astype(jnp.float32)
    msum = jnp.maximum(jnp.sum(m, axis=-1, keepdims=True), 1.0)
    pooled = jnp.sum(emb * m[:, :, None], axis=1) / msum
    pooler_out = jnp.tanh(pooled @ params["wp"] + params["bp"])
    h1 = jnp.maximum(pooler_out @ params["w1"] + params["b1"], 0.0)
    logits = h1 @ params["w2"] + params["b2"]
    return jax.nn.log_softmax(logits, axis=1)


if __name__ == "__main__":
    B, S, VOCAB = 8, 8, 30
    key = jax.random.PRNGKey(0)
    k_id, k_len = jax.random.split(key)

    sent_id = jax.random.randint(k_id, (B, S), 0, VOCAB, dtype=jnp.int32)
    lens = jax.random.randint(k_len, (B,), 2, S + 1, dtype=jnp.int32)
    mask = (jnp.arange(S)[None, :] < lens[:, None]).astype(jnp.int32)     # [B, S]

    params = init_params(vocab_size=VOCAB, seed=0)

    out = bert_arch_forward(sent_id, mask, params)
    out = jax.block_until_ready(out)

    ref = reference_forward(sent_id, mask, params)
    assert out.shape == (B, N_CLASSES)
    # bf16 MXU operands with f32 accumulation -> tolerance loosened vs f32 reference.
    assert jnp.allclose(out, ref, atol=2e-2, rtol=2e-2), "mismatch vs reference"

    print("KERNEL_OK")
</pallas_src>

<mosaic_0001>
module attributes {stable_mosaic.version = 11 : i64} {
  func.func @bert_head_kernel(%arg0: i32, %arg1: memref<8x768xf32, #tpu.memory_space<vmem>>, %arg2: memref<768x768xbf16, #tpu.memory_space<vmem>>, %arg3: memref<1x768xf32, #tpu.memory_space<vmem>>, %arg4: memref<768x512xbf16, #tpu.memory_space<vmem>>, %arg5: memref<1x512xf32, #tpu.memory_space<vmem>>, %arg6: memref<512x128xbf16, #tpu.memory_space<vmem>>, %arg7: memref<1x128xf32, #tpu.memory_space<vmem>>, %arg8: memref<8x128xf32, #tpu.memory_space<vmem>>) attributes {dimension_semantics = [#tpu.dimension_semantics<parallel>], iteration_bounds = array<i64: 1>, scalar_prefetch = 0 : i64, scratch_operands = 0 : i64, tpu.core_type = #tpu.core_type<tc>, window_params = [{transform_indices = @transform_0, window_bounds = array<i64: 8, 768>}, {pipeline_mode = #tpu.pipeline_mode<synchronous>, transform_indices = @transform_1, window_bounds = array<i64: 768, 768>}, {pipeline_mode = #tpu.pipeline_mode<synchronous>, transform_indices = @transform_2, window_bounds = array<i64: 1, 768>}, {pipeline_mode = #tpu.pipeline_mode<synchronous>, transform_indices = @transform_3, window_bounds = array<i64: 768, 512>}, {pipeline_mode = #tpu.pipeline_mode<synchronous>, transform_indices = @transform_4, window_bounds = array<i64: 1, 512>}, {pipeline_mode = #tpu.pipeline_mode<synchronous>, transform_indices = @transform_5, window_bounds = array<i64: 512, 128>}, {pipeline_mode = #tpu.pipeline_mode<synchronous>, transform_indices = @transform_6, window_bounds = array<i64: 1, 128>}, {transform_indices = @transform_7, window_bounds = array<i64: 8, 128>}]} {
    %c0 = arith.constant 0 : index
    %c0_0 = arith.constant 0 : index
    %0 = vector.load %arg1[%c0, %c0_0] : memref<8x768xf32, #tpu.memory_space<vmem>>, vector<8x768xf32>
    %1 = arith.truncf %0 : vector<8x768xf32> to vector<8x768xbf16>
    %c0_1 = arith.constant 0 : index
    %c0_2 = arith.constant 0 : index
    %2 = vector.load %arg2[%c0_1, %c0_2] : memref<768x768xbf16, #tpu.memory_space<vmem>>, vector<768x768xbf16>
    %cst = arith.constant dense<0.000000e+00> : vector<8x768xf32>
    %3 = tpu.matmul %1, %2, %cst {dimension_numbers = #tpu.dot_dimension_numbers<[1], [0], [0], [1], [0, 0, 1, 1], [], []>} : vector<8x768xbf16>, vector<768x768xbf16>, vector<8x768xf32> -> vector<8x768xf32>
    %c0_3 = arith.constant 0 : index
    %c0_4 = arith.constant 0 : index
    %4 = vector.load %arg3[%c0_3, %c0_4] : memref<1x768xf32, #tpu.memory_space<vmem>>, vector<1x768xf32>
    %5 = vector.broadcast %4 : vector<1x768xf32> to vector<8x768xf32>
    %6 = arith.addf %3, %5 : vector<8x768xf32>
    %7 = math.tanh %6 : vector<8x768xf32>
    %8 = arith.truncf %7 : vector<8x768xf32> to vector<8x768xbf16>
    %c0_5 = arith.constant 0 : index
    %c0_6 = arith.constant 0 : index
    %9 = vector.load %arg4[%c0_5, %c0_6] : memref<768x512xbf16, #tpu.memory_space<vmem>>, vector<768x512xbf16>
    %cst_7 = arith.constant dense<0.000000e+00> : vector<8x512xf32>
    %10 = tpu.matmul %8, %9, %cst_7 {dimension_numbers = #tpu.dot_dimension_numbers<[1], [0], [0], [1], [0, 0, 1, 1], [], []>} : vector<8x768xbf16>, vector<768x512xbf16>, vector<8x512xf32> -> vector<8x512xf32>
    %c0_8 = arith.constant 0 : index
    %c0_9 = arith.constant 0 : index
    %11 = vector.load %arg5[%c0_8, %c0_9] : memref<1x512xf32, #tpu.memory_space<vmem>>, vector<1x512xf32>
    %12 = vector.broadcast %11 : vector<1x512xf32> to vector<8x512xf32>
    %13 = arith.addf %10, %12 : vector<8x512xf32>
    %cst_10 = arith.constant 0.000000e+00 : f32
    %14 = vector.broadcast %cst_10 : f32 to vector<8x512xf32>
    %15 = arith.maximumf %13, %14 : vector<8x512xf32>
    %16 = arith.truncf %15 : vector<8x512xf32> to vector<8x512xbf16>
    %c0_11 = arith.constant 0 : index
    %c0_12 = arith.constant 0 : index
    %17 = vector.load %arg6[%c0_11, %c0_12] : memref<512x128xbf16, #tpu.memory_space<vmem>>, vector<512x128xbf16>
    %cst_13 = arith.constant dense<0.000000e+00> : vector<8x128xf32>
    %18 = tpu.matmul %16, %17, %cst_13 {dimension_numbers = #tpu.dot_dimension_numbers<[1], [0], [0], [1], [0, 0, 1, 1], [], []>} : vector<8x512xbf16>, vector<512x128xbf16>, vector<8x128xf32> -> vector<8x128xf32>
    %c0_14 = arith.constant 0 : index
    %c0_15 = arith.constant 0 : index
    %19 = vector.load %arg7[%c0_14, %c0_15] : memref<1x128xf32, #tpu.memory_space<vmem>>, vector<1x128xf32>
    %20 = vector.broadcast %19 : vector<1x128xf32> to vector<8x128xf32>
    %21 = arith.addf %18, %20 : vector<8x128xf32>
    %cst_16 = arith.constant dense<0xFF800000> : vector<8xf32>
    %22 = vector.multi_reduction <maximumf>, %21, %cst_16 [1] : vector<8x128xf32> to vector<8xf32>
    %23 = vector.shape_cast %22 : vector<8xf32> to vector<8x1xf32>
    %24 = vector.broadcast %23 : vector<8x1xf32> to vector<8x128xf32>
    %25 = arith.subf %21, %24 : vector<8x128xf32>
    %26 = math.exp %25 : vector<8x128xf32>
    %cst_17 = arith.constant dense<0.000000e+00> : vector<8xf32>
    %27 = vector.multi_reduction <add>, %26, %cst_17 [1] : vector<8x128xf32> to vector<8xf32>
    %28 = vector.shape_cast %27 : vector<8xf32> to vector<8x1xf32>
    %29 = math.log %28 : vector<8x1xf32>
    %30 = vector.broadcast %29 : vector<8x1xf32> to vector<8x128xf32>
    %31 = arith.subf %25, %30 : vector<8x128xf32>
    %c0_18 = arith.constant 0 : index
    %c0_19 = arith.constant 0 : index
    %32 = vector.load %arg8[%c0_18, %c0_19] : memref<8x128xf32, #tpu.memory_space<vmem>>, vector<8x128xf32>
    tpu.vector_store %arg8[%c0_18, %c0_19], %31 {strides = array<i32>} : memref<8x128xf32, #tpu.memory_space<vmem>>, vector<8x128xf32>,
    return
  }
  func.func @transform_0(%arg0: i32) -> (i32, i32) {
    %c0_i32 = arith.constant 0 : i32
    %c0_i32_0 = arith.constant 0 : i32
    return %arg0, %c0_i32 : i32, i32
  }
  func.func @transform_1(%arg0: i32) -> (i32, i32) {
    %c0_i32 = arith.constant 0 : i32
    %c0_i32_0 = arith.constant 0 : i32
    %c0_i32_1 = arith.constant 0 : i32
    return %c0_i32, %c0_i32_0 : i32, i32
  }
  func.func @transform_2(%arg0: i32) -> (i32, i32) {
    %c0_i32 = arith.constant 0 : i32
    %c0_i32_0 = arith.constant 0 : i32
    %c0_i32_1 = arith.constant 0 : i32
    return %c0_i32, %c0_i32_0 : i32, i32
  }
  func.func @transform_3(%arg0: i32) -> (i32, i32) {
    %c0_i32 = arith.constant 0 : i32
    %c0_i32_0 = arith.constant 0 : i32
    %c0_i32_1 = arith.constant 0 : i32
    return %c0_i32, %c0_i32_0 : i32, i32
  }
  func.func @transform_4(%arg0: i32) -> (i32, i32) {
    %c0_i32 = arith.constant 0 : i32
    %c0_i32_0 = arith.constant 0 : i32
    %c0_i32_1 = arith.constant 0 : i32
    return %c0_i32, %c0_i32_0 : i32, i32
  }
  func.func @transform_5(%arg0: i32) -> (i32, i32) {
    %c0_i32 = arith.constant 0 : i32
    %c0_i32_0 = arith.constant 0 : i32
    %c0_i32_1 = arith.constant 0 : i32
    return %c0_i32, %c0_i32_0 : i32, i32
  }
  func.func @transform_6(%arg0: i32) -> (i32, i32) {
    %c0_i32 = arith.constant 0 : i32
    %c0_i32_0 = arith.constant 0 : i32
    %c0_i32_1 = arith.constant 0 : i32
    return %c0_i32, %c0_i32_0 : i32, i32
  }
  func.func @transform_7(%arg0: i32) -> (i32, i32) {
    %c0_i32 = arith.constant 0 : i32
    %c0_i32_0 = arith.constant 0 : i32
    return %arg0, %c0_i32 : i32, i32
  }
}

</mosaic_0001>

<llo_original>
// kernel: tpu_custom_call.1
$region0: #{tpu_custom_call.1}
  #allocation0 [shape = 'u32[]', space=smem, size = 0x4, offset = 0x4, fixed_abs, tag = 'smem constant byte address 0x4 - core index']
  #allocation1 [shape = 'u32[144,128]{1,0:T(1,128)}', space=vmem, size = 0x12000, scoped, tag = 'internal scratch']
  %s0 = inlined_call_operand.hbm [shape: f32[8,768], index: 0, kind: input, shape index: {}]
  %s1 = inlined_call_operand.hbm [shape: bf16[768,768], index: 1, kind: input, shape index: {}]
  %s2 = inlined_call_operand.hbm [shape: f32[1,768], index: 2, kind: input, shape index: {}]
  %s3 = inlined_call_operand.hbm [shape: bf16[768,512], index: 3, kind: input, shape index: {}]
  %s4 = inlined_call_operand.hbm [shape: f32[1,512], index: 4, kind: input, shape index: {}]
  %s5 = inlined_call_operand.hbm [shape: bf16[512,128], index: 5, kind: input, shape index: {}]
  %s6 = inlined_call_operand.hbm [shape: f32[1,128], index: 6, kind: input, shape index: {}]
  %s7 = inlined_call_operand.hbm [shape: f32[8,128], index: 7, kind: output, shape index: {}]
  %s8 = sld [smem:[#allocation0]]
  $region66: #{tpu_custom_call.1} parent=0
    _
  %s10 = ssub.s32 1, %s8
  %s11 = scalar_select 0, %s10, %s8
  $region1: #{tpu_custom_call.1} parent=0
    #allocation2 [shape = 'u8[24576]{0}', space=vmem, size = 0x6000, scoped, tag = 'input window, operand 0, single buffered']
    #allocation3 [shape = 's32[1]{0}', space=sflag, size = 0x4, scoped, tag = 'scoped memory for tpu_custom_call.1']
    #allocation4 [shape = 's32[1]{0}', space=sflag, size = 0x4, scoped, tag = 'scoped memory for tpu_custom_call.1']
    #allocation5 [shape = 'u8[1179648]{0}', space=vmem, size = 0x120000, scoped, tag = 'input window, operand 1, single buffered']
    #allocation6 [shape = 's32[1]{0}', space=sflag, size = 0x4, scoped, tag = 'scoped memory for tpu_custom_call.1']
    #allocation7 [shape = 'u8[3072]{0}', space=vmem, size = 0xc00, scoped, tag = 'input window, operand 2, single buffered']
    #allocation8 [shape = 'u8[786432]{0}', space=vmem, size = 0xc0000, scoped, tag = 'input window, operand 3, single buffered']
    #allocation9 [shape = 's32[1]{0}', space=sflag, size = 0x4, scoped, tag = 'scoped memory for tpu_custom_call.1']
    #allocation10 [shape = 'u8[2048]{0}', space=vmem, size = 0x800, scoped, tag = 'input window, operand 4, single buffered']
    #allocation11 [shape = 'u8[131072]{0}', space=vmem, size = 0x20000, scoped, tag = 'input window, operand 5, single buffered']
    #allocation12 [shape = 's32[1]{0}', space=sflag, size = 0x4, scoped, tag = 'scoped memory for tpu_custom_call.1']
    #allocation13 [shape = 'u8[512]{0}', space=vmem, size = 0x400, scoped, tag = 'input window, operand 6, single buffered']
    #allocation14 [shape = 'u8[4096]{0}', space=vmem, size = 0x1000, scoped, tag = 'output window, operand 0, single buffered']
    %12 = vsyncpa [#allocation3], 0
    %13 = vsyncpa [#allocation6], 0
    %14 = vsyncpa [#allocation9], 0
    %15 = vsyncpa [#allocation12], 0
    %16 = vsyncpa [#allocation4], 0
    // Predicated region
    $region2: #{tpu_custom_call.1} parent=1 // pred_check
      _
    $region3: #{tpu_custom_call.1} parent=1 // pred_check_branch
      %18 = sbr.rel (0) target = $region5
    $region4: #{tpu_custom_call.1} parent=1 // pred_region
      %s20 = ssub.s32 768, 768
      %21 = vsyncadd [#allocation3], %s20
      %s23 = sshll.u32 [#allocation2], 4
      %s24 = int_to_ptr.vmem [resolvable:$true] %s23
      %26 = dma.hbm_to_vmem [thread:$0]  %s0, 768, %s24, [#allocation3]
    $region5: #{tpu_custom_call.1} parent=1 // pred_fallthru
      _
    // Predicated region
    $region6: #{tpu_custom_call.1} parent=1 // pred_check
      _
    $region7: #{tpu_custom_call.1} parent=1 // pred_check_branch
      %28 = sbr.rel (0) target = $region9
    $region8: #{tpu_custom_call.1} parent=1 // pred_region
      %s30 = ssub.s32 36864, 36864
      %31 = vsyncadd [#allocation6], %s30
      %s32 = sshll.u32 [#allocation5], 4
      %s33 = int_to_ptr.vmem [resolvable:$true] %s32
      %38 = dma.hbm_to_vmem [thread:$0]  %s1, 36864, %s33, [#allocation6], 384, 384, 24
    $region9: #{tpu_custom_call.1} parent=1 // pred_fallthru
      _
    // Predicated region
    $region10: #{tpu_custom_call.1} parent=1 // pred_check
      _
    $region11: #{tpu_custom_call.1} parent=1 // pred_check_branch
      %40 = sbr.rel (0) target = $region13
    $region12: #{tpu_custom_call.1} parent=1 // pred_region
      %s42 = ssub.s32 96, 96
      %43 = vsyncadd [#allocation6], %s42
      %s45 = sshll.u32 [#allocation7], 4
      %s46 = int_to_ptr.vmem [resolvable:$true] %s45
      %48 = dma.hbm_to_vmem [thread:$0]  %s2, 96, %s46, [#allocation6]
    $region13: #{tpu_custom_call.1} parent=1 // pred_fallthru
      _
    // Predicated region
    $region14: #{tpu_custom_call.1} parent=1 // pred_check
      _
    $region15: #{tpu_custom_call.1} parent=1 // pred_check_branch
      %50 = sbr.rel (0) target = $region17
    $region16: #{tpu_custom_call.1} parent=1 // pred_region
      %s52 = ssub.s32 24576, 24576
      %53 = vsyncadd [#allocation9], %s52
      %s54 = sshll.u32 [#allocation8], 4
      %s55 = int_to_ptr.vmem [resolvable:$true] %s54
      %60 = dma.hbm_to_vmem [thread:$0]  %s3, 24576, %s55, [#allocation9], 256, 256, 16
    $region17: #{tpu_custom_call.1} parent=1 // pred_fallthru
      _
    // Predicated region
    $region18: #{tpu_custom_call.1} parent=1 // pred_check
      _
    $region19: #{tpu_custom_call.1} parent=1 // pred_check_branch
      %62 = sbr.rel (0) target = $region21
    $region20: #{tpu_custom_call.1} parent=1 // pred_region
      %s64 = ssub.s32 64, 64
      %65 = vsyncadd [#allocation9], %s64
      %s67 = sshll.u32 [#allocation10], 4
      %s68 = int_to_ptr.vmem [resolvable:$true] %s67
      %70 = dma.hbm_to_vmem [thread:$0]  %s4, 64, %s68, [#allocation9]
    $region21: #{tpu_custom_call.1} parent=1 // pred_fallthru
      _
    // Predicated region
    $region22: #{tpu_custom_call.1} parent=1 // pred_check
      _
    $region23: #{tpu_custom_call.1} parent=1 // pred_check_branch
      %72 = sbr.rel (0) target = $region25
    $region24: #{tpu_custom_call.1} parent=1 // pred_region
      %s74 = ssub.s32 4096, 4096
      %75 = vsyncadd [#allocation12], %s74
      %s76 = sshll.u32 [#allocation11], 4
      %s77 = int_to_ptr.vmem [resolvable:$true] %s76
      %82 = dma.hbm_to_vmem [thread:$0]  %s5, 4096, %s77, [#allocation12], 64, 64, 4
    $region25: #{tpu_custom_call.1} parent=1 // pred_fallthru
      _
    // Predicated region
    $region26: #{tpu_custom_call.1} parent=1 // pred_check
      _
    $region27: #{tpu_custom_call.1} parent=1 // pred_check_branch
      %84 = sbr.rel (0) target = $region29
    $region28: #{tpu_custom_call.1} parent=1 // pred_region
      %s86 = ssub.s32 16, 16
      %87 = vsyncadd [#allocation12], %s86
      %s89 = sshll.u32 [#allocation13], 4
      %s90 = int_to_ptr.vmem [resolvable:$true] %s89
      %92 = dma.hbm_to_vmem [thread:$0]  %s6, 16, %s90, [#allocation12]
    $region29: #{tpu_custom_call.1} parent=1 // pred_fallthru
      _
    // Predicated region
    $region30: #{tpu_custom_call.1} parent=1 // pred_check
      _
    $region31: #{tpu_custom_call.1} parent=1 // pred_check_branch
      %94 = sbr.rel (0) target = $region33
    $region32: #{tpu_custom_call.1} parent=1 // pred_region
      %95 = dma.done [#allocation3], 768
    $region33: #{tpu_custom_call.1} parent=1 // pred_fallthru
      _
    // Predicated region
    $region34: #{tpu_custom_call.1} parent=1 // pred_check
      _
    $region35: #{tpu_custom_call.1} parent=1 // pred_check_branch
      %97 = sbr.rel (0) target = $region37
    $region36: #{tpu_custom_call.1} parent=1 // pred_region
      %98 = dma.done [#allocation6], 36864
    $region37: #{tpu_custom_call.1} parent=1 // pred_fallthru
      _
    // Predicated region
    $region38: #{tpu_custom_call.1} parent=1 // pred_check
      _
    $region39: #{tpu_custom_call.1} parent=1 // pred_check_branch
      %100 = sbr.rel (0) target = $region41
    $region40: #{tpu_custom_call.1} parent=1 // pred_region
      %101 = dma.done [#allocation6], 96
    $region41: #{tpu_custom_call.1} parent=1 // pred_fallthru
      _
    // Predicated region
    $region42: #{tpu_custom_call.1} parent=1 // pred_check
      _
    $region43: #{tpu_custom_call.1} parent=1 // pred_check_branch
      %103 = sbr.rel (0) target = $region45
    $region44: #{tpu_custom_call.1} parent=1 // pred_region
      %104 = dma.done [#allocation9], 24576
    $region45: #{tpu_custom_call.1} parent=1 // pred_fallthru
      _
    // Predicated region
    $region46: #{tpu_custom_call.1} parent=1 // pred_check
      _
    $region47: #{tpu_custom_call.1} parent=1 // pred_check_branch
      %106 = sbr.rel (0) target = $region49
    $region48: #{tpu_custom_call.1} parent=1 // pred_region
      %107 = dma.done [#allocation9], 64
    $region49: #{tpu_custom_call.1} parent=1 // pred_fallthru
      _
    // Predicated region
    $region50: #{tpu_custom_call.1} parent=1 // pred_check
      _
    $region51: #{tpu_custom_call.1} parent=1 // pred_check_branch
      %109 = sbr.rel (0) target = $region53
    $region52: #{tpu_custom_call.1} parent=1 // pred_region
      %110 = dma.done [#allocation12], 4096
    $region53: #{tpu_custom_call.1} parent=1 // pred_fallthru
      _
    // Predicated region
    $region54: #{tpu_custom_call.1} parent=1 // pred_check
      _
    $region55: #{tpu_custom_call.1} parent=1 // pred_check_branch
      %112 = sbr.rel (0) target = $region57
    $region56: #{tpu_custom_call.1} parent=1 // pred_region
      %113 = dma.done [#allocation12], 16
    $region57: #{tpu_custom_call.1} parent=1 // pred_fallthru
      _
    %v115 = vld [vmem:[#allocation2] sm:$0xff]
    %v116 = vld [vmem:[#allocation2 + $0x8] sm:$0xff]
    %v117 = vld [vmem:[#allocation2 + $0x10] sm:$0xff]
    %v118 = vld [vmem:[#allocation2 + $0x18] sm:$0xff]
    %v119 = vld [vmem:[#allocation2 + $0x20] sm:$0xff]
    %v120 = vld [vmem:[#allocation2 + $0x28] sm:$0xff]
    %v121 = vpack.c.bf16 %v115, %v115
    %v122 = vpack.c.bf16 %v116, %v116
    %v123 = vpack.c.bf16 %v117, %v117
    %v124 = vpack.c.bf16 %v118, %v118
    %v125 = vpack.c.bf16 %v119, %v119
    %v126 = vpack.c.bf16 %v120, %v120
    %v127 = vld [vmem:[#allocation5] sm:$0xff]
    %v128 = vld [vmem:[#allocation5 + $0x8] sm:$0xff]
    %v129 = vld [vmem:[#allocation5 + $0x10] sm:$0xff]
    %v130 = vld [vmem:[#allocation5 + $0x18] sm:$0xff]
    %v131 = vld [vmem:[#allocation5 + $0x20] sm:$0xff]
    %v132 = vld [vmem:[#allocation5 + $0x28] sm:$0xff]
    %v133 = vld [vmem:[#allocation5 + $0x30] sm:$0xff]
    %v134 = vld [vmem:[#allocation5 + $0x38] sm:$0xff]
    %v135 = vld [vmem:[#allocation5 + $0x40] sm:$0xff]
    %v136 = vld [vmem:[#allocation5 + $0x48] sm:$0xff]
    %v137 = vld [vmem:[#allocation5 + $0x50] sm:$0xff]
    %v138 = vld [vmem:[#allocation5 + $0x58] sm:$0xff]
    %v139 = vld [vmem:[#allocation5 + $0x60] sm:$0xff]
    %v140 = vld [vmem:[#allocation5 + $0x68] sm:$0xff]
    %v141 = vld [vmem:[#allocation5 + $0x70] sm:$0xff]
    %v142 = vld [vmem:[#allocation5 + $0x78] sm:$0xff]
    %v143 = vld [vmem:[#allocation5 + $0x80] sm:$0xff]
    %v144 = vld [vmem:[#allocation5 + $0x88] sm:$0xff]
    %v145 = vld [vmem:[#allocation5 + $0x90] sm:$0xff]
    %v146 = vld [vmem:[#allocation5 + $0x98] sm:$0xff]
    %v147 = vld [vmem:[#allocation5 + $0xa0] sm:$0xff]
    %v148 = vld [vmem:[#allocation5 + $0xa8] sm:$0xff]
    %v149 = vld [vmem:[#allocation5 + $0xb0] sm:$0xff]
    %v150 = vld [vmem:[#allocation5 + $0xb8] sm:$0xff]
    %v151 = vld [vmem:[#allocation5 + $0xc0] sm:$0xff]
    %v152 = vld [vmem:[#allocation5 + $0xc8] sm:$0xff]
    %v153 = vld [vmem:[#allocation5 + $0xd0] sm:$0xff]
    %v154 = vld [vmem:[#allocation5 + $0xd8] sm:$0xff]
    %v155 = vld [vmem:[#allocation5 + $0xe0] sm:$0xff]
    %v156 = vld [vmem:[#allocation5 + $0xe8] sm:$0xff]
    %v157 = vld [vmem:[#allocation5 + $0xf0] sm:$0xff]
    %v158 = vld [vmem:[#allocation5 + $0xf8] sm:$0xff]
    %v159 = vld [vmem:[#allocation5 + $0x100] sm:$0xff]
    %v160 = vld [vmem:[#allocation5 + $0x108] sm:$0xff]
    %v161 = vld [vmem:[#allocation5 + $0x110] sm:$0xff]
    %v162 = vld [vmem:[#allocation5 + $0x118] sm:$0xff]
    %v163 = vld [vmem:[#allocation5 + $0x120] sm:$0xff]
    %v164 = vld [vmem:[#allocation5 + $0x128] sm:$0xff]
    %v165 = vld [vmem:[#allocation5 + $0x130] sm:$0xff]
    %v166 = vld [vmem:[#allocation5 + $0x138] sm:$0xff]
    %v167 = vld [vmem:[#allocation5 + $0x140] sm:$0xff]
    %v168 = vld [vmem:[#allocation5 + $0x148] sm:$0xff]
    %v169 = vld [vmem:[#allocation5 + $0x150] sm:$0xff]
    %v170 = vld [vmem:[#allocation5 + $0x158] sm:$0xff]
    %v171 = vld [vmem:[#allocation5 + $0x160] sm:$0xff]
    %v172 = vld [vmem:[#allocation5 + $0x168] sm:$0xff]
    %v173 = vld [vmem:[#allocation5 + $0x170] sm:$0xff]
    %v174 = vld [vmem:[#allocation5 + $0x178] sm:$0xff]
    %v175 = vld [vmem:[#allocation5 + $0x180] sm:$0xff]
    %v176 = vld [vmem:[#allocation5 + $0x188] sm:$0xff]
    %v177 = vld [vmem:[#allocation5 + $0x190] sm:$0xff]
    %v178 = vld [vmem:[#allocation5 + $0x198] sm:$0xff]
    %v179 = vld [vmem:[#allocation5 + $0x1a0] sm:$0xff]
    %v180 = vld [vmem:[#allocation5 + $0x1a8] sm:$0xff]
    %v181 = vld [vmem:[#allocation5 + $0x1b0] sm:$0xff]
    %v182 = vld [vmem:[#allocation5 + $0x1b8] sm:$0xff]
    %v183 = vld [vmem:[#allocation5 + $0x1c0] sm:$0xff]
    %v184 = vld [vmem:[#allocation5 + $0x1c8] sm:$0xff]
    %v185 = vld [vmem:[#allocation5 + $0x1d0] sm:$0xff]
    %v186 = vld [vmem:[#allocation5 + $0x1d8] sm:$0xff]
    %v187 = vld [vmem:[#allocation5 + $0x1e0] sm:$0xff]
    %v188 = vld [vmem:[#allocation5 + $0x1e8] sm:$0xff]
    %v189 = vld [vmem:[#allocation5 + $0x1f0] sm:$0xff]
    %v190 = vld [vmem:[#allocation5 + $0x1f8] sm:$0xff]
    %v191 = vld [vmem:[#allocation5 + $0x200] sm:$0xff]
    %v192 = vld [vmem:[#allocation5 + $0x208] sm:$0xff]
    %v193 = vld [vmem:[#allocation5 + $0x210] sm:$0xff]
    %v194 = vld [vmem:[#allocation5 + $0x218] sm:$0xff]
    %v195 = vld [vmem:[#allocation5 + $0x220] sm:$0xff]
    %v196 = vld [vmem:[#allocation5 + $0x228] sm:$0xff]
    %v197 = vld [vmem:[#allocation5 + $0x230] sm:$0xff]
    %v198 = vld [vmem:[#allocation5 + $0x238] sm:$0xff]
    %v199 = vld [vmem:[#allocation5 + $0x240] sm:$0xff]
    %v200 = vld [vmem:[#allocation5 + $0x248] sm:$0xff]
    %v201 = vld [vmem:[#allocation5 + $0x250] sm:$0xff]
    %v202 = vld [vmem:[#allocation5 + $0x258] sm:$0xff]
    %v203 = vld [vmem:[#allocation5 + $0x260] sm:$0xff]
    %v204 = vld [vmem:[#allocation5 + $0x268] sm:$0xff]
    %v205 = vld [vmem:[#allocation5 + $0x270] sm:$0xff]
    %v206 = vld [vmem:[#allocation5 + $0x278] sm:$0xff]
    %v207 = vld [vmem:[#allocation5 + $0x280] sm:$0xff]
    %v208 = vld [vmem:[#allocation5 + $0x288] sm:$0xff]
    %v209 = vld [vmem:[#allocation5 + $0x290] sm:$0xff]
    %v210 = vld [vmem:[#allocation5 + $0x298] sm:$0xff]
    %v211 = vld [vmem:[#allocation5 + $0x2a0] sm:$0xff]
    %v212 = vld [vmem:[#allocation5 + $0x2a8] sm:$0xff]
    %v213 = vld [vmem:[#allocation5 + $0x2b0] sm:$0xff]
    %v214 = vld [vmem:[#allocation5 + $0x2b8] sm:$0xff]
    %v215 = vld [vmem:[#allocation5 + $0x2c0] sm:$0xff]
    %v216 = vld [vmem:[#allocation5 + $0x2c8] sm:$0xff]
    %v217 = vld [vmem:[#allocation5 + $0x2d0] sm:$0xff]
    %v218 = vld [vmem:[#allocation5 + $0x2d8] sm:$0xff]
    %v219 = vld [vmem:[#allocation5 + $0x2e0] sm:$0xff]
    %v220 = vld [vmem:[#allocation5 + $0x2e8] sm:$0xff]
    %v221 = vld [vmem:[#allocation5 + $0x2f0] sm:$0xff]
    %v222 = vld [vmem:[#allocation5 + $0x2f8] sm:$0xff]
    %v223 = vld [vmem:[#allocation5 + $0x300] sm:$0xff]
    %v224 = vld [vmem:[#allocation5 + $0x308] sm:$0xff]
    %v225 = vld [vmem:[#allocation5 + $0x310] sm:$0xff]
    %v226 = vld [vmem:[#allocation5 + $0x318] sm:$0xff]
    %v227 = vld [vmem:[#allocation5 + $0x320] sm:$0xff]
    %v228 = vld [vmem:[#allocation5 + $0x328] sm:$0xff]
    %v229 = vld [vmem:[#allocation5 + $0x330] sm:$0xff]
    %v230 = vld [vmem:[#allocation5 + $0x338] sm:$0xff]
    %v231 = vld [vmem:[#allocation5 + $0x340] sm:$0xff]
    %v232 = vld [vmem:[#allocation5 + $0x348] sm:$0xff]
    %v233 = vld [vmem:[#allocation5 + $0x350] sm:$0xff]
    %v234 = vld [vmem:[#allocation5 + $0x358] sm:$0xff]
    %v235 = vld [vmem:[#allocation5 + $0x360] sm:$0xff]
    %v236 = vld [vmem:[#allocation5 + $0x368] sm:$0xff]
    %v237 = vld [vmem:[#allocation5 + $0x370] sm:$0xff]
    %v238 = vld [vmem:[#allocation5 + $0x378] sm:$0xff]
    %v239 = vld [vmem:[#allocation5 + $0x380] sm:$0xff]
    %v240 = vld [vmem:[#allocation5 + $0x388] sm:$0xff]
    %v241 = vld [vmem:[#allocation5 + $0x390] sm:$0xff]
    %v242 = vld [vmem:[#allocation5 + $0x398] sm:$0xff]
    %v243 = vld [vmem:[#allocation5 + $0x3a0] sm:$0xff]
    %v244 = vld [vmem:[#allocation5 + $0x3a8] sm:$0xff]
    %v245 = vld [vmem:[#allocation5 + $0x3b0] sm:$0xff]
    %v246 = vld [vmem:[#allocation5 + $0x3b8] sm:$0xff]
    %v247 = vld [vmem:[#allocation5 + $0x3c0] sm:$0xff]
    %v248 = vld [vmem:[#allocation5 + $0x3c8] sm:$0xff]
    %v249 = vld [vmem:[#allocation5 + $0x3d0] sm:$0xff]
    %v250 = vld [vmem:[#allocation5 + $0x3d8] sm:$0xff]
    %v251 = vld [vmem:[#allocation5 + $0x3e0] sm:$0xff]
    %v252 = vld [vmem:[#allocation5 + $0x3e8] sm:$0xff]
    %v253 = vld [vmem:[#allocation5 + $0x3f0] sm:$0xff]
    %v254 = vld [vmem:[#allocation5 + $0x3f8] sm:$0xff]
    %v255 = vld [vmem:[#allocation5 + $0x400] sm:$0xff]
    %v256 = vld [vmem:[#allocation5 + $0x408] sm:$0xff]
    %v257 = vld [vmem:[#allocation5 + $0x410] sm:$0xff]
    %v258 = vld [vmem:[#allocation5 + $0x418] sm:$0xff]
    %v259 = vld [vmem:[#allocation5 + $0x420] sm:$0xff]
    %v260 = vld [vmem:[#allocation5 + $0x428] sm:$0xff]
    %v261 = vld [vmem:[#allocation5 + $0x430] sm:$0xff]
    %v262 = vld [vmem:[#allocation5 + $0x438] sm:$0xff]
    %v263 = vld [vmem:[#allocation5 + $0x440] sm:$0xff]
    %v264 = vld [vmem:[#allocation5 + $0x448] sm:$0xff]
    %v265 = vld [vmem:[#allocation5 + $0x450] sm:$0xff]
    %v266 = vld [vmem:[#allocation5 + $0x458] sm:$0xff]
    %v267 = vld [vmem:[#allocation5 + $0x460] sm:$0xff]
    %v268 = vld [vmem:[#allocation5 + $0x468] sm:$0xff]
    %v269 = vld [vmem:[#allocation5 + $0x470] sm:$0xff]
    %v270 = vld [vmem:[#allocation5 + $0x478] sm:$0xff]
    %v271 = vld [vmem:[#allocation5 + $0x480] sm:$0xff]
    %v272 = vld [vmem:[#allocation5 + $0x488] sm:$0xff]
    %v273 = vld [vmem:[#allocation5 + $0x490] sm:$0xff]
    %v274 = vld [vmem:[#allocation5 + $0x498] sm:$0xff]
    %v275 = vld [vmem:[#allocation5 + $0x4a0] sm:$0xff]
    %v276 = vld [vmem:[#allocation5 + $0x4a8] sm:$0xff]
    %v277 = vld [vmem:[#allocation5 + $0x4b0] sm:$0xff]
    %v278 = vld [vmem:[#allocation5 + $0x4b8] sm:$0xff]
    %v279 = vld [vmem:[#allocation5 + $0x4c0] sm:$0xff]
    %v280 = vld [vmem:[#allocation5 + $0x4c8] sm:$0xff]
    %v281 = vld [vmem:[#allocation5 + $0x4d0] sm:$0xff]
    %v282 = vld [vmem:[#allocation5 + $0x4d8] sm:$0xff]
    %v283 = vld [vmem:[#allocation5 + $0x4e0] sm:$0xff]
    %v284 = vld [vmem:[#allocation5 + $0x4e8] sm:$0xff]
    %v285 = vld [vmem:[#allocation5 + $0x4f0] sm:$0xff]
    %v286 = vld [vmem:[#allocation5 + $0x4f8] sm:$0xff]
    %v287 = vld [vmem:[#allocation5 + $0x500] sm:$0xff]
    %v288 = vld [vmem:[#allocation5 + $0x508] sm:$0xff]
    %v289 = vld [vmem:[#allocation5 + $0x510] sm:$0xff]
    %v290 = vld [vmem:[#allocation5 + $0x518] sm:$0xff]
    %v291 = vld [vmem:[#allocation5 + $0x520] sm:$0xff]
    %v292 = vld [vmem:[#allocation5 + $0x528] sm:$0xff]
    %v293 = vld [vmem:[#allocation5 + $0x530] sm:$0xff]
    %v294 = vld [vmem:[#allocation5 + $0x538] sm:$0xff]
    %v295 = vld [vmem:[#allocation5 + $0x540] sm:$0xff]
    %v296 = vld [vmem:[#allocation5 + $0x548] sm:$0xff]
    %v297 = vld [vmem:[#allocation5 + $0x550] sm:$0xff]
    %v298 = vld [vmem:[#allocation5 + $0x558] sm:$0xff]
    %v299 = vld [vmem:[#allocation5 + $0x560] sm:$0xff]
    %v300 = vld [vmem:[#allocation5 + $0x568] sm:$0xff]
    %v301 = vld [vmem:[#allocation5 + $0x570] sm:$0xff]
    %v302 = vld [vmem:[#allocation5 + $0x578] sm:$0xff]
    %v303 = vld [vmem:[#allocation5 + $0x580] sm:$0xff]
    %v304 = vld [vmem:[#allocation5 + $0x588] sm:$0xff]
    %v305 = vld [vmem:[#allocation5 + $0x590] sm:$0xff]
    %v306 = vld [vmem:[#allocation5 + $0x598] sm:$0xff]
    %v307 = vld [vmem:[#allocation5 + $0x5a0] sm:$0xff]
    %v308 = vld [vmem:[#allocation5 + $0x5a8] sm:$0xff]
    %v309 = vld [vmem:[#allocation5 + $0x5b0] sm:$0xff]
    %v310 = vld [vmem:[#allocation5 + $0x5b8] sm:$0xff]
    %v311 = vld [vmem:[#allocation5 + $0x5c0] sm:$0xff]
    %v312 = vld [vmem:[#allocation5 + $0x5c8] sm:$0xff]
    %v313 = vld [vmem:[#allocation5 + $0x5d0] sm:$0xff]
    %v314 = vld [vmem:[#allocation5 + $0x5d8] sm:$0xff]
    %v315 = vld [vmem:[#allocation5 + $0x5e0] sm:$0xff]
    %v316 = vld [vmem:[#allocation5 + $0x5e8] sm:$0xff]
    %v317 = vld [vmem:[#allocation5 + $0x5f0] sm:$0xff]
    %v318 = vld [vmem:[#allocation5 + $0x5f8] sm:$0xff]
    %v319 = vld [vmem:[#allocation5 + $0x600] sm:$0xff]
    %v320 = vld [vmem:[#allocation5 + $0x608] sm:$0xff]
    %v321 = vld [vmem:[#allocation5 + $0x610] sm:$0xff]
    %v322 = vld [vmem:[#allocation5 + $0x618] sm:$0xff]
    %v323 = vld [vmem:[#allocation5 + $0x620] sm:$0xff]
    %v324 = vld [vmem:[#allocation5 + $0x628] sm:$0xff]
    %v325 = vld [vmem:[#allocation5 + $0x630] sm:$0xff]
    %v326 = vld [vmem:[#allocation5 + $0x638] sm:$0xff]
    %v327 = vld [vmem:[#allocation5 + $0x640] sm:$0xff]
    %v328 = vld [vmem:[#allocation5 + $0x648] sm:$0xff]
    %v329 = vld [vmem:[#allocation5 + $0x650] sm:$0xff]
    %v330 = vld [vmem:[#allocation5 + $0x658] sm:$0xff]
    %v331 = vld [vmem:[#allocation5 + $0x660] sm:$0xff]
    %v332 = vld [vmem:[#allocation5 + $0x668] sm:$0xff]
    %v333 = vld [vmem:[#allocation5 + $0x670] sm:$0xff]
    %v334 = vld [vmem:[#allocation5 + $0x678] sm:$0xff]
    %v335 = vld [vmem:[#allocation5 + $0x680] sm:$0xff]
    %v336 = vld [vmem:[#allocation5 + $0x688] sm:$0xff]
    %v337 = vld [vmem:[#allocation5 + $0x690] sm:$0xff]
    %v338 = vld [vmem:[#allocation5 + $0x698] sm:$0xff]
    %v339 = vld [vmem:[#allocation5 + $0x6a0] sm:$0xff]
    %v340 = vld [vmem:[#allocation5 + $0x6a8] sm:$0xff]
    %v341 = vld [vmem:[#allocation5 + $0x6b0] sm:$0xff]
    %v342 = vld [vmem:[#allocation5 + $0x6b8] sm:$0xff]
    %v343 = vld [vmem:[#allocation5 + $0x6c0] sm:$0xff]
    %v344 = vld [vmem:[#allocation5 + $0x6c8] sm:$0xff]
    %v345 = vld [vmem:[#allocation5 + $0x6d0] sm:$0xff]
    %v346 = vld [vmem:[#allocation5 + $0x6d8] sm:$0xff]
    %v347 = vld [vmem:[#allocation5 + $0x6e0] sm:$0xff]
    %v348 = vld [vmem:[#allocation5 + $0x6e8] sm:$0xff]
    %v349 = vld [vmem:[#allocation5 + $0x6f0] sm:$0xff]
    %v350 = vld [vmem:[#allocation5 + $0x6f8] sm:$0xff]
    %v351 = vld [vmem:[#allocation5 + $0x700] sm:$0xff]
    %v352 = vld [vmem:[#allocation5 + $0x708] sm:$0xff]
    %v353 = vld [vmem:[#allocation5 + $0x710] sm:$0xff]
    %v354 = vld [vmem:[#allocation5 + $0x718] sm:$0xff]
    %v355 = vld [vmem:[#allocation5 + $0x720] sm:$0xff]
    %v356 = vld [vmem:[#allocation5 + $0x728] sm:$0xff]
    %v357 = vld [vmem:[#allocation5 + $0x730] sm:$0xff]
    %v358 = vld [vmem:[#allocation5 + $0x738] sm:$0xff]
    %v359 = vld [vmem:[#allocation5 + $0x740] sm:$0xff]
    %v360 = vld [vmem:[#allocation5 + $0x748] sm:$0xff]
    %v361 = vld [vmem:[#allocation5 + $0x750] sm:$0xff]
    %v362 = vld [vmem:[#allocation5 + $0x758] sm:$0xff]
    %v363 = vld [vmem:[#allocation5 + $0x760] sm:$0xff]
    %v364 = vld [vmem:[#allocation5 + $0x768] sm:$0xff]
    %v365 = vld [vmem:[#allocation5 + $0x770] sm:$0xff]
    %v366 = vld [vmem:[#allocation5 + $0x778] sm:$0xff]
    %v367 = vld [vmem:[#allocation5 + $0x780] sm:$0xff]
    %v368 = vld [vmem:[#allocation5 + $0x788] sm:$0xff]
    %v369 = vld [vmem:[#allocation5 + $0x790] sm:$0xff]
    %v370 = vld [vmem:[#allocation5 + $0x798] sm:$0xff]
    %v371 = vld [vmem:[#allocation5 + $0x7a0] sm:$0xff]
    %v372 = vld [vmem:[#allocation5 + $0x7a8] sm:$0xff]
    %v373 = vld [vmem:[#allocation5 + $0x7b0] sm:$0xff]
    %v374 = vld [vmem:[#allocation5 + $0x7b8] sm:$0xff]
    %v375 = vld [vmem:[#allocation5 + $0x7c0] sm:$0xff]
    %v376 = vld [vmem:[#allocation5 + $0x7c8] sm:$0xff]
    %v377 = vld [vmem:[#allocation5 + $0x7d0] sm:$0xff]
    %v378 = vld [vmem:[#allocation5 + $0x7d8] sm:$0xff]
    %v379 = vld [vmem:[#allocation5 + $0x7e0] sm:$0xff]
    %v380 = vld [vmem:[#allocation5 + $0x7e8] sm:$0xff]
    %v381 = vld [vmem:[#allocation5 + $0x7f0] sm:$0xff]
    %v382 = vld [vmem:[#allocation5 + $0x7f8] sm:$0xff]
    %v383 = vld [vmem:[#allocation5 + $0x800] sm:$0xff]
    %v384 = vld [vmem:[#allocation5 + $0x808] sm:$0xff]
    %v385 = vld [vmem:[#allocation5 + $0x810] sm:$0xff]
    %v386 = vld [vmem:[#allocation5 + $0x818] sm:$0xff]
    %v387 = vld [vmem:[#allocation5 + $0x820] sm:$0xff]
    %v388 = vld [vmem:[#allocation5 + $0x828] sm:$0xff]
    %v389 = vld [vmem:[#allocation5 + $0x830] sm:$0xff]
    %v390 = vld [vmem:[#allocation5 + $0x838] sm:$0xff]
    %v391 = vld [vmem:[#allocation5 + $0x840] sm:$0xff]
    %v392 = vld [vmem:[#allocation5 + $0x848] sm:$0xff]
    %v393 = vld [vmem:[#allocation5 + $0x850] sm:$0xff]
    %v394 = vld [vmem:[#allocation5 + $0x858] sm:$0xff]
    %v395 = vld [vmem:[#allocation5 + $0x860] sm:$0xff]
    %v396 = vld [vmem:[#allocation5 + $0x868] sm:$0xff]
    %v397 = vld [vmem:[#allocation5 + $0x870] sm:$0xff]
    %v398 = vld [vmem:[#allocation5 + $0x878] sm:$0xff]
    %v399 = vld [vmem:[#allocation5 + $0x880] sm:$0xff]
    %v400 = vld [vmem:[#allocation5 + $0x888] sm:$0xff]
    %v401 = vld [vmem:[#allocation5 + $0x890] sm:$0xff]
    %v402 = vld [vmem:[#allocation5 + $0x898] sm:$0xff]
    %v403 = vld [vmem:[#allocation5 + $0x8a0] sm:$0xff]
    %v404 = vld [vmem:[#allocation5 + $0x8a8] sm:$0xff]
    %v405 = vld [vmem:[#allocation5 + $0x8b0] sm:$0xff]
    %v406 = vld [vmem:[#allocation5 + $0x8b8] sm:$0xff]
    %v407 = vld [vmem:[#allocation5 + $0x8c0] sm:$0xff]
    %v408 = vld [vmem:[#allocation5 + $0x8c8] sm:$0xff]
    %v409 = vld [vmem:[#allocation5 + $0x8d0] sm:$0xff]
    %v410 = vld [vmem:[#allocation5 + $0x8d8] sm:$0xff]
    %v411 = vld [vmem:[#allocation5 + $0x8e0] sm:$0xff]
    %v412 = vld [vmem:[#allocation5 + $0x8e8] sm:$0xff]
    %v413 = vld [vmem:[#allocation5 + $0x8f0] sm:$0xff]
    %v414 = vld [vmem:[#allocation5 + $0x8f8] sm:$0xff]
    %v415 = vld [vmem:[#allocation7] sm:$0x3f]
    %v417 = vlaneseq
    %v418 = vshrl.u32 %v417, 7
    %v419 = vsub.s32 0, %v418
    %v420 = vrot.slane %v415, %v419
    %v421 = vlaneseq
    %v422 = vshrl.u32 %v421, 7
    %v423 = vsub.s32 1, %v422
    %v424 = vrot.slane %v415, %v423
    %v425 = vlaneseq
    %v426 = vshrl.u32 %v425, 7
    %v427 = vsub.s32 2, %v426
    %v428 = vrot.slane %v415, %v427
    %v429 = vlaneseq
    %v430 = vshrl.u32 %v429, 7
    %v431 = vsub.s32 3, %v430
    %v432 = vrot.slane %v415, %v431
    %v433 = vlaneseq
    %v434 = vshrl.u32 %v433, 7
    %v435 = vsub.s32 4, %v434
    %v436 = vrot.slane %v415, %v435
    %v437 = vlaneseq
    %v438 = vshrl.u32 %v437, 7
    %v439 = vsub.s32 5, %v438
    %v440 = vrot.slane %v415, %v439
    %v735 = vunpack.c.l.b16 %v127
    %v736 = vunpack.c.h.b16 %v127
    %v737 = vunpack.c.l.b16 %v128
    %v738 = vunpack.c.h.b16 %v128
    %v739 = vunpack.c.l.b16 %v129
    %v740 = vunpack.c.h.b16 %v129
    %v741 = vunpack.c.l.b16 %v130
    %v742 = vunpack.c.h.b16 %v130
    %v743 = vunpack.c.l.b16 %v131
    %v744 = vunpack.c.h.b16 %v131
    %v745 = vunpack.c.l.b16 %v132
    %v746 = vunpack.c.h.b16 %v132
    %v747 = vunpack.c.l.b16 %v133
    %v748 = vunpack.c.h.b16 %v133
    %v749 = vunpack.c.l.b16 %v134
    %v750 = vunpack.c.h.b16 %v134
    %v751 = vunpack.c.l.b16 %v135
    %v752 = vunpack.c.h.b16 %v135
    %v753 = vunpack.c.l.b16 %v136
    %v754 = vunpack.c.h.b16 %v136
    %v755 = vunpack.c.l.b16 %v137
    %v756 = vunpack.c.h.b16 %v137
    %v757 = vunpack.c.l.b16 %v138
    %v758 = vunpack.c.h.b16 %v138
    %v759 = vunpack.c.l.b16 %v139
    %v760 = vunpack.c.h.b16 %v139
    %v761 = vunpack.c.l.b16 %v140
    %v762 = vunpack.c.h.b16 %v140
    %v763 = vunpack.c.l.b16 %v141
    %v764 = vunpack.c.h.b16 %v141
    %v765 = vunpack.c.l.b16 %v142
    %v766 = vunpack.c.h.b16 %v142
    %v767 = vunpack.c.l.b16 %v143
    %v768 = vunpack.c.h.b16 %v143
    %v769 = vunpack.c.l.b16 %v144
    %v770 = vunpack.c.h.b16 %v144
    %v771 = vunpack.c.l.b16 %v145
    %v772 = vunpack.c.h.b16 %v145
    %v773 = vunpack.c.l.b16 %v146
    %v774 = vunpack.c.h.b16 %v146
    %v775 = vunpack.c.l.b16 %v147
    %v776 = vunpack.c.h.b16 %v147
    %v777 = vunpack.c.l.b16 %v148
    %v778 = vunpack.c.h.b16 %v148
    %v779 = vunpack.c.l.b16 %v149
    %v780 = vunpack.c.h.b16 %v149
    %v781 = vunpack.c.l.b16 %v150
    %v782 = vunpack.c.h.b16 %v150
    %v783 = vunpack.c.l.b16 %v151
    %v784 = vunpack.c.h.b16 %v151
    %v785 = vunpack.c.l.b16 %v152
    %v786 = vunpack.c.h.b16 %v152
    %v787 = vunpack.c.l.b16 %v153
    %v788 = vunpack.c.h.b16 %v153
    %v789 = vunpack.c.l.b16 %v154
    %v790 = vunpack.c.h.b16 %v154
    %v791 = vunpack.c.l.b16 %v155
    %v792 = vunpack.c.h.b16 %v155
    %v793 = vunpack.c.l.b16 %v156
    %v794 = vunpack.c.h.b16 %v156
    %v795 = vunpack.c.l.b16 %v157
    %v796 = vunpack.c.h.b16 %v157
    %v797 = vunpack.c.l.b16 %v158
    %v798 = vunpack.c.h.b16 %v158
    %v799 = vunpack.c.l.b16 %v159
    %v800 = vunpack.c.h.b16 %v159
    %v801 = vunpack.c.l.b16 %v160
    %v802 = vunpack.c.h.b16 %v160
    %v803 = vunpack.c.l.b16 %v161
    %v804 = vunpack.c.h.b16 %v161
    %v805 = vunpack.c.l.b16 %v162
    %v806 = vunpack.c.h.b16 %v162
    %v807 = vunpack.c.l.b16 %v163
    %v808 = vunpack.c.h.b16 %v163
    %v809 = vunpack.c.l.b16 %v164
    %v810 = vunpack.c.h.b16 %v164
    %v811 = vunpack.c.l.b16 %v165
    %v812 = vunpack.c.h.b16 %v165
    %v813 = vunpack.c.l.b16 %v166
    %v814 = vunpack.c.h.b16 %v166
    %v815 = vunpack.c.l.b16 %v167
    %v816 = vunpack.c.h.b16 %v167
    %v817 = vunpack.c.l.b16 %v168
    %v818 = vunpack.c.h.b16 %v168
    %v819 = vunpack.c.l.b16 %v169
    %v820 = vunpack.c.h.b16 %v169
    %v821 = vunpack.c.l.b16 %v170
    %v822 = vunpack.c.h.b16 %v170
    %v823 = vunpack.c.l.b16 %v171
    %v824 = vunpack.c.h.b16 %v171
    %v825 = vunpack.c.l.b16 %v172
    %v826 = vunpack.c.h.b16 %v172
    %v827 = vunpack.c.l.b16 %v173
    %v828 = vunpack.c.h.b16 %v173
    %v829 = vunpack.c.l.b16 %v174
    %v830 = vunpack.c.h.b16 %v174
    %v831 = vunpack.c.l.b16 %v175
    %v832 = vunpack.c.h.b16 %v175
    %v833 = vunpack.c.l.b16 %v176
    %v834 = vunpack.c.h.b16 %v176
    %v835 = vunpack.c.l.b16 %v177
    %v836 = vunpack.c.h.b16 %v177
    %v837 = vunpack.c.l.b16 %v178
    %v838 = vunpack.c.h.b16 %v178
    %v839 = vunpack.c.l.b16 %v179
    %v840 = vunpack.c.h.b16 %v179
    %v841 = vunpack.c.l.b16 %v180
    %v842 = vunpack.c.h.b16 %v180
    %v843 = vunpack.c.l.b16 %v181
    %v844 = vunpack.c.h.b16 %v181
    %v845 = vunpack.c.l.b16 %v182
    %v846 = vunpack.c.h.b16 %v182
    %v847 = vunpack.c.l.b16 %v183
    %v848 = vunpack.c.h.b16 %v183
    %v849 = vunpack.c.l.b16 %v184
    %v850 = vunpack.c.h.b16 %v184
    %v851 = vunpack.c.l.b16 %v185
    %v852 = vunpack.c.h.b16 %v185
    %v853 = vunpack.c.l.b16 %v186
    %v854 = vunpack.c.h.b16 %v186
    %v855 = vunpack.c.l.b16 %v187
    %v856 = vunpack.c.h.b16 %v187
    %v857 = vunpack.c.l.b16 %v188
    %v858 = vunpack.c.h.b16 %v188
    %v859 = vunpack.c.l.b16 %v189
    %v860 = vunpack.c.h.b16 %v189
    %v861 = vunpack.c.l.b16 %v190
    %v862 = vunpack.c.h.b16 %v190
    %v863 = vunpack.c.l.b16 %v191
    %v864 = vunpack.c.h.b16 %v191
    %v865 = vunpack.c.l.b16 %v192
    %v866 = vunpack.c.h.b16 %v192
    %v867 = vunpack.c.l.b16 %v193
    %v868 = vunpack.c.h.b16 %v193
    %v869 = vunpack.c.l.b16 %v194
    %v870 = vunpack.c.h.b16 %v194
    %v871 = vunpack.c.l.b16 %v195
    %v872 = vunpack.c.h.b16 %v195
    %v873 = vunpack.c.l.b16 %v196
    %v874 = vunpack.c.h.b16 %v196
    %v875 = vunpack.c.l.b16 %v197
    %v876 = vunpack.c.h.b16 %v197
    %v877 = vunpack.c.l.b16 %v198
    %v878 = vunpack.c.h.b16 %v198
    %v879 = vunpack.c.l.b16 %v199
    %v880 = vunpack.c.h.b16 %v199
    %v881 = vunpack.c.l.b16 %v200
    %v882 = vunpack.c.h.b16 %v200
    %v883 = vunpack.c.l.b16 %v201
    %v884 = vunpack.c.h.b16 %v201
    %v885 = vunpack.c.l.b16 %v202
    %v886 = vunpack.c.h.b16 %v202
    %v887 = vunpack.c.l.b16 %v203
    %v888 = vunpack.c.h.b16 %v203
    %v889 = vunpack.c.l.b16 %v204
    %v890 = vunpack.c.h.b16 %v204
    %v891 = vunpack.c.l.b16 %v205
    %v892 = vunpack.c.h.b16 %v205
    %v893 = vunpack.c.l.b16 %v206
    %v894 = vunpack.c.h.b16 %v206
    %v895 = vunpack.c.l.b16 %v207
    %v896 = vunpack.c.h.b16 %v207
    %v897 = vunpack.c.l.b16 %v208
    %v898 = vunpack.c.h.b16 %v208
    %v899 = vunpack.c.l.b16 %v209
    %v900 = vunpack.c.h.b16 %v209
    %v901 = vunpack.c.l.b16 %v210
    %v902 = vunpack.c.h.b16 %v210
    %v903 = vunpack.c.l.b16 %v211
    %v904 = vunpack.c.h.b16 %v211
    %v905 = vunpack.c.l.b16 %v212
    %v906 = vunpack.c.h.b16 %v212
    %v907 = vunpack.c.l.b16 %v213
    %v908 = vunpack.c.h.b16 %v213
    %v909 = vunpack.c.l.b16 %v214
    %v910 = vunpack.c.h.b16 %v214
    %v911 = vunpack.c.l.b16 %v215
    %v912 = vunpack.c.h.b16 %v215
    %v913 = vunpack.c.l.b16 %v216
    %v914 = vunpack.c.h.b16 %v216
    %v915 = vunpack.c.l.b16 %v217
    %v916 = vunpack.c.h.b16 %v217
    %v917 = vunpack.c.l.b16 %v218
    %v918 = vunpack.c.h.b16 %v218
    %v919 = vunpack.c.l.b16 %v219
    %v920 = vunpack.c.h.b16 %v219
    %v921 = vunpack.c.l.b16 %v220
    %v922 = vunpack.c.h.b16 %v220
    %v923 = vunpack.c.l.b16 %v221
    %v924 = vunpack.c.h.b16 %v221
    %v925 = vunpack.c.l.b16 %v222
    %v926 = vunpack.c.h.b16 %v222
    %v927 = vunpack.c.l.b16 %v223
    %v928 = vunpack.c.h.b16 %v223
    %v929 = vunpack.c.l.b16 %v224
    %v930 = vunpack.c.h.b16 %v224
    %v931 = vunpack.c.l.b16 %v225
    %v932 = vunpack.c.h.b16 %v225
    %v933 = vunpack.c.l.b16 %v226
    %v934 = vunpack.c.h.b16 %v226
    %v935 = vunpack.c.l.b16 %v227
    %v936 = vunpack.c.h.b16 %v227
    %v937 = vunpack.c.l.b16 %v228
    %v938 = vunpack.c.h.b16 %v228
    %v939 = vunpack.c.l.b16 %v229
    %v940 = vunpack.c.h.b16 %v229
    %v941 = vunpack.c.l.b16 %v230
    %v942 = vunpack.c.h.b16 %v230
    %v943 = vunpack.c.l.b16 %v231
    %v944 = vunpack.c.h.b16 %v231
    %v945 = vunpack.c.l.b16 %v232
    %v946 = vunpack.c.h.b16 %v232
    %v947 = vunpack.c.l.b16 %v233
    %v948 = vunpack.c.h.b16 %v233
    %v949 = vunpack.c.l.b16 %v234
    %v950 = vunpack.c.h.b16 %v234
    %v951 = vunpack.c.l.b16 %v235
    %v952 = vunpack.c.h.b16 %v235
    %v953 = vunpack.c.l.b16 %v236
    %v954 = vunpack.c.h.b16 %v236
    %v955 = vunpack.c.l.b16 %v237
    %v956 = vunpack.c.h.b16 %v237
    %v957 = vunpack.c.l.b16 %v238
    %v958 = vunpack.c.h.b16 %v238
    %v959 = vunpack.c.l.b16 %v239
    %v960 = vunpack.c.h.b16 %v239
    %v961 = vunpack.c.l.b16 %v240
    %v962 = vunpack.c.h.b16 %v240
    %v963 = vunpack.c.l.b16 %v241
    %v964 = vunpack.c.h.b16 %v241
    %v965 = vunpack.c.l.b16 %v242
    %v966 = vunpack.c.h.b16 %v242
    %v967 = vunpack.c.l.b16 %v243
    %v968 = vunpack.c.h.b16 %v243
    %v969 = vunpack.c.l.b16 %v244
    %v970 = vunpack.c.h.b16 %v244
    %v971 = vunpack.c.l.b16 %v245
    %v972 = vunpack.c.h.b16 %v245
    %v973 = vunpack.c.l.b16 %v246
    %v974 = vunpack.c.h.b16 %v246
    %v975 = vunpack.c.l.b16 %v247
    %v976 = vunpack.c.h.b16 %v247
    %v977 = vunpack.c.l.b16 %v248
    %v978 = vunpack.c.h.b16 %v248
    %v979 = vunpack.c.l.b16 %v249
    %v980 = vunpack.c.h.b16 %v249
    %v981 = vunpack.c.l.b16 %v250
    %v982 = vunpack.c.h.b16 %v250
    %v983 = vunpack.c.l.b16 %v251
    %v984 = vunpack.c.h.b16 %v251
    %v985 = vunpack.c.l.b16 %v252
    %v986 = vunpack.c.h.b16 %v252
    %v987 = vunpack.c.l.b16 %v253
    %v988 = vunpack.c.h.b16 %v253
    %v989 = vunpack.c.l.b16 %v254
    %v990 = vunpack.c.h.b16 %v254
    %v991 = vunpack.c.l.b16 %v255
    %v992 = vunpack.c.h.b16 %v255
    %v993 = vunpack.c.l.b16 %v256
    %v994 = vunpack.c.h.b16 %v256
    %v995 = vunpack.c.l.b16 %v257
    %v996 = vunpack.c.h.b16 %v257
    %v997 = vunpack.c.l.b16 %v258
    %v998 = vunpack.c.h.b16 %v258
    %v999 = vunpack.c.l.b16 %v259
    %v1000 = vunpack.c.h.b16 %v259
    %v1001 = vunpack.c.l.b16 %v260
    %v1002 = vunpack.c.h.b16 %v260
    %v1003 = vunpack.c.l.b16 %v261
    %v1004 = vunpack.c.h.b16 %v261
    %v1005 = vunpack.c.l.b16 %v262
    %v1006 = vunpack.c.h.b16 %v262
    %v1007 = vunpack.c.l.b16 %v263
    %v1008 = vunpack.c.h.b16 %v263
    %v1009 = vunpack.c.l.b16 %v264
    %v1010 = vunpack.c.h.b16 %v264
    %v1011 = vunpack.c.l.b16 %v265
    %v1012 = vunpack.c.h.b16 %v265
    %v1013 = vunpack.c.l.b16 %v266
    %v1014 = vunpack.c.h.b16 %v266
    %v1015 = vunpack.c.l.b16 %v267
    %v1016 = vunpack.c.h.b16 %v267
    %v1017 = vunpack.c.l.b16 %v268
    %v1018 = vunpack.c.h.b16 %v268
    %v1019 = vunpack.c.l.b16 %v269
    %v1020 = vunpack.c.h.b16 %v269
    %v1021 = vunpack.c.l.b16 %v270
    %v1022 = vunpack.c.h.b16 %v270
    %v1023 = vunpack.c.l.b16 %v271
    %v1024 = vunpack.c.h.b16 %v271
    %v1025 = vunpack.c.l.b16 %v272
    %v1026 = vunpack.c.h.b16 %v272
    %v1027 = vunpack.c.l.b16 %v273
    %v1028 = vunpack.c.h.b16 %v273
    %v1029 = vunpack.c.l.b16 %v274
    %v1030 = vunpack.c.h.b16 %v274
    %v1031 = vunpack.c.l.b16 %v275
    %v1032 = vunpack.c.h.b16 %v275
    %v1033 = vunpack.c.l.b16 %v276
    %v1034 = vunpack.c.h.b16 %v276
    %v1035 = vunpack.c.l.b16 %v277
    %v1036 = vunpack.c.h.b16 %v277
    %v1037 = vunpack.c.l.b16 %v278
    %v1038 = vunpack.c.h.b16 %v278
    %v1039 = vunpack.c.l.b16 %v279
    %v1040 = vunpack.c.h.b16 %v279
    %v1041 = vunpack.c.l.b16 %v280
    %v1042 = vunpack.c.h.b16 %v280
    %v1043 = vunpack.c.l.b16 %v281
    %v1044 = vunpack.c.h.b16 %v281
    %v1045 = vunpack.c.l.b16 %v282
    %v1046 = vunpack.c.h.b16 %v282
    %v1047 = vunpack.c.l.b16 %v283
    %v1048 = vunpack.c.h.b16 %v283
    %v1049 = vunpack.c.l.b16 %v284
    %v1050 = vunpack.c.h.b16 %v284
    %v1051 = vunpack.c.l.b16 %v285
    %v1052 = vunpack.c.h.b16 %v285
    %v1053 = vunpack.c.l.b16 %v286
    %v1054 = vunpack.c.h.b16 %v286
    %v1055 = vunpack.c.l.b16 %v287
    %v1056 = vunpack.c.h.b16 %v287
    %v1057 = vunpack.c.l.b16 %v288
    %v1058 = vunpack.c.h.b16 %v288
    %v1059 = vunpack.c.l.b16 %v289
    %v1060 = vunpack.c.h.b16 %v289
    %v1061 = vunpack.c.l.b16 %v290
    %v1062 = vunpack.c.h.b16 %v290
    %v1063 = vunpack.c.l.b16 %v291
    %v1064 = vunpack.c.h.b16 %v291
    %v1065 = vunpack.c.l.b16 %v292
    %v1066 = vunpack.c.h.b16 %v292
    %v1067 = vunpack.c.l.b16 %v293
    %v1068 = vunpack.c.h.b16 %v293
    %v1069 = vunpack.c.l.b16 %v294
    %v1070 = vunpack.c.h.b16 %v294
    %v1071 = vunpack.c.l.b16 %v295
    %v1072 = vunpack.c.h.b16 %v295
    %v1073 = vunpack.c.l.b16 %v296
    %v1074 = vunpack.c.h.b16 %v296
    %v1075 = vunpack.c.l.b16 %v297
    %v1076 = vunpack.c.h.b16 %v297
    %v1077 = vunpack.c.l.b16 %v298
    %v1078 = vunpack.c.h.b16 %v298
    %v1079 = vunpack.c.l.b16 %v299
    %v1080 = vunpack.c.h.b16 %v299
    %v1081 = vunpack.c.l.b16 %v300
    %v1082 = vunpack.c.h.b16 %v300
    %v1083 = vunpack.c.l.b16 %v301
    %v1084 = vunpack.c.h.b16 %v301
    %v1085 = vunpack.c.l.b16 %v302
    %v1086 = vunpack.c.h.b16 %v302
    %v1087 = vunpack.c.l.b16 %v303
    %v1088 = vunpack.c.h.b16 %v303
    %v1089 = vunpack.c.l.b16 %v304
    %v1090 = vunpack.c.h.b16 %v304
    %v1091 = vunpack.c.l.b16 %v305
    %v1092 = vunpack.c.h.b16 %v305
    %v1093 = vunpack.c.l.b16 %v306
    %v1094 = vunpack.c.h.b16 %v306
    %v1095 = vunpack.c.l.b16 %v307
    %v1096 = vunpack.c.h.b16 %v307
    %v1097 = vunpack.c.l.b16 %v308
    %v1098 = vunpack.c.h.b16 %v308
    %v1099 = vunpack.c.l.b16 %v309
    %v1100 = vunpack.c.h.b16 %v309
    %v1101 = vunpack.c.l.b16 %v310
    %v1102 = vunpack.c.h.b16 %v310
    %v1103 = vunpack.c.l.b16 %v311
    %v1104 = vunpack.c.h.b16 %v311
    %v1105 = vunpack.c.l.b16 %v312
    %v1106 = vunpack.c.h.b16 %v312
    %v1107 = vunpack.c.l.b16 %v313
    %v1108 = vunpack.c.h.b16 %v313
    %v1109 = vunpack.c.l.b16 %v314
    %v1110 = vunpack.c.h.b16 %v314
    %v1111 = vunpack.c.l.b16 %v315
    %v1112 = vunpack.c.h.b16 %v315
    %v1113 = vunpack.c.l.b16 %v316
    %v1114 = vunpack.c.h.b16 %v316
    %v1115 = vunpack.c.l.b16 %v317
    %v1116 = vunpack.c.h.b16 %v317
    %v1117 = vunpack.c.l.b16 %v318
    %v1118 = vunpack.c.h.b16 %v318
    %v1119 = vunpack.c.l.b16 %v319
    %v1120 = vunpack.c.h.b16 %v319
    %v1121 = vunpack.c.l.b16 %v320
    %v1122 = vunpack.c.h.b16 %v320
    %v1123 = vunpack.c.l.b16 %v321
    %v1124 = vunpack.c.h.b16 %v321
    %v1125 = vunpack.c.l.b16 %v322
    %v1126 = vunpack.c.h.b16 %v322
    %v1127 = vunpack.c.l.b16 %v323
    %v1128 = vunpack.c.h.b16 %v323
    %v1129 = vunpack.c.l.b16 %v324
    %v1130 = vunpack.c.h.b16 %v324
    %v1131 = vunpack.c.l.b16 %v325
    %v1132 = vunpack.c.h.b16 %v325
    %v1133 = vunpack.c.l.b16 %v326
    %v1134 = vunpack.c.h.b16 %v326
    %v1135 = vunpack.c.l.b16 %v327
    %v1136 = vunpack.c.h.b16 %v327
    %v1137 = vunpack.c.l.b16 %v328
    %v1138 = vunpack.c.h.b16 %v328
    %v1139 = vunpack.c.l.b16 %v329
    %v1140 = vunpack.c.h.b16 %v329
    %v1141 = vunpack.c.l.b16 %v330
    %v1142 = vunpack.c.h.b16 %v330
    %v1143 = vunpack.c.l.b16 %v331
    %v1144 = vunpack.c.h.b16 %v331
    %v1145 = vunpack.c.l.b16 %v332
    %v1146 = vunpack.c.h.b16 %v332
    %v1147 = vunpack.c.l.b16 %v333
    %v1148 = vunpack.c.h.b16 %v333
    %v1149 = vunpack.c.l.b16 %v334
    %v1150 = vunpack.c.h.b16 %v334
    %v1151 = vunpack.c.l.b16 %v335
    %v1152 = vunpack.c.h.b16 %v335
    %v1153 = vunpack.c.l.b16 %v336
    %v1154 = vunpack.c.h.b16 %v336
    %v1155 = vunpack.c.l.b16 %v337
    %v1156 = vunpack.c.h.b16 %v337
    %v1157 = vunpack.c.l.b16 %v338
    %v1158 = vunpack.c.h.b16 %v338
    %v1159 = vunpack.c.l.b16 %v339
    %v1160 = vunpack.c.h.b16 %v339
    %v1161 = vunpack.c.l.b16 %v340
    %v1162 = vunpack.c.h.b16 %v340
    %v1163 = vunpack.c.l.b16 %v341
    %v1164 = vunpack.c.h.b16 %v341
    %v1165 = vunpack.c.l.b16 %v342
    %v1166 = vunpack.c.h.b16 %v342
    %v1167 = vunpack.c.l.b16 %v343
    %v1168 = vunpack.c.h.b16 %v343
    %v1169 = vunpack.c.l.b16 %v344
    %v1170 = vunpack.c.h.b16 %v344
    %v1171 = vunpack.c.l.b16 %v345
    %v1172 = vunpack.c.h.b16 %v345
    %v1173 = vunpack.c.l.b16 %v346
    %v1174 = vunpack.c.h.b16 %v346
    %v1175 = vunpack.c.l.b16 %v347
    %v1176 = vunpack.c.h.b16 %v347
    %v1177 = vunpack.c.l.b16 %v348
    %v1178 = vunpack.c.h.b16 %v348
    %v1179 = vunpack.c.l.b16 %v349
    %v1180 = vunpack.c.h.b16 %v349
    %v1181 = vunpack.c.l.b16 %v350
    %v1182 = vunpack.c.h.b16 %v350
    %v1183 = vunpack.c.l.b16 %v351
    %v1184 = vunpack.c.h.b16 %v351
    %v1185 = vunpack.c.l.b16 %v352
    %v1186 = vunpack.c.h.b16 %v352
    %v1187 = vunpack.c.l.b16 %v353
    %v1188 = vunpack.c.h.b16 %v353
    %v1189 = vunpack.c.l.b16 %v354
    %v1190 = vunpack.c.h.b16 %v354
    %v1191 = vunpack.c.l.b16 %v355
    %v1192 = vunpack.c.h.b16 %v355
    %v1193 = vunpack.c.l.b16 %v356
    %v1194 = vunpack.c.h.b16 %v356
    %v1195 = vunpack.c.l.b16 %v357
    %v1196 = vunpack.c.h.b16 %v357
    %v1197 = vunpack.c.l.b16 %v358
    %v1198 = vunpack.c.h.b16 %v358
    %v1199 = vunpack.c.l.b16 %v359
    %v1200 = vunpack.c.h.b16 %v359
    %v1201 = vunpack.c.l.b16 %v360
    %v1202 = vunpack.c.h.b16 %v360
    %v1203 = vunpack.c.l.b16 %v361
    %v1204 = vunpack.c.h.b16 %v361
    %v1205 = vunpack.c.l.b16 %v362
    %v1206 = vunpack.c.h.b16 %v362
    %v1207 = vunpack.c.l.b16 %v363
    %v1208 = vunpack.c.h.b16 %v363
    %v1209 = vunpack.c.l.b16 %v364
    %v1210 = vunpack.c.h.b16 %v364
    %v1211 = vunpack.c.l.b16 %v365
    %v1212 = vunpack.c.h.b16 %v365
    %v1213 = vunpack.c.l.b16 %v366
    %v1214 = vunpack.c.h.b16 %v366
    %v1215 = vunpack.c.l.b16 %v367
    %v1216 = vunpack.c.h.b16 %v367
    %v1217 = vunpack.c.l.b16 %v368
    %v1218 = vunpack.c.h.b16 %v368
    %v1219 = vunpack.c.l.b16 %v369
    %v1220 = vunpack.c.h.b16 %v369
    %v1221 = vunpack.c.l.b16 %v370
    %v1222 = vunpack.c.h.b16 %v370
    %v1223 = vunpack.c.l.b16 %v371
    %v1224 = vunpack.c.h.b16 %v371
    %v1225 = vunpack.c.l.b16 %v372
    %v1226 = vunpack.c.h.b16 %v372
    %v1227 = vunpack.c.l.b16 %v373
    %v1228 = vunpack.c.h.b16 %v373
    %v1229 = vunpack.c.l.b16 %v374
    %v1230 = vunpack.c.h.b16 %v374
    %v1231 = vunpack.c.l.b16 %v375
    %v1232 = vunpack.c.h.b16 %v375
    %v1233 = vunpack.c.l.b16 %v376
    %v1234 = vunpack.c.h.b16 %v376
    %v1235 = vunpack.c.l.b16 %v377
    %v1236 = vunpack.c.h.b16 %v377
    %v1237 = vunpack.c.l.b16 %v378
    %v1238 = vunpack.c.h.b16 %v378
    %v1239 = vunpack.c.l.b16 %v379
    %v1240 = vunpack.c.h.b16 %v379
    %v1241 = vunpack.c.l.b16 %v380
    %v1242 = vunpack.c.h.b16 %v380
    %v1243 = vunpack.c.l.b16 %v381
    %v1244 = vunpack.c.h.b16 %v381
    %v1245 = vunpack.c.l.b16 %v382
    %v1246 = vunpack.c.h.b16 %v382
    %v1247 = vunpack.c.l.b16 %v383
    %v1248 = vunpack.c.h.b16 %v383
    %v1249 = vunpack.c.l.b16 %v384
    %v1250 = vunpack.c.h.b16 %v384
    %v1251 = vunpack.c.l.b16 %v385
    %v1252 = vunpack.c.h.b16 %v385
    %v1253 = vunpack.c.l.b16 %v386
    %v1254 = vunpack.c.h.b16 %v386
    %v1255 = vunpack.c.l.b16 %v387
    %v1256 = vunpack.c.h.b16 %v387
    %v1257 = vunpack.c.l.b16 %v388
    %v1258 = vunpack.c.h.b16 %v388
    %v1259 = vunpack.c.l.b16 %v389
    %v1260 = vunpack.c.h.b16 %v389
    %v1261 = vunpack.c.l.b16 %v390
    %v1262 = vunpack.c.h.b16 %v390
    %v1263 = vunpack.c.l.b16 %v391
    %v1264 = vunpack.c.h.b16 %v391
    %v1265 = vunpack.c.l.b16 %v392
    %v1266 = vunpack.c.h.b16 %v392
    %v1267 = vunpack.c.l.b16 %v393
    %v1268 = vunpack.c.h.b16 %v393
    %v1269 = vunpack.c.l.b16 %v394
    %v1270 = vunpack.c.h.b16 %v394
    %v1271 = vunpack.c.l.b16 %v395
    %v1272 = vunpack.c.h.b16 %v395
    %v1273 = vunpack.c.l.b16 %v396
    %v1274 = vunpack.c.h.b16 %v396
    %v1275 = vunpack.c.l.b16 %v397
    %v1276 = vunpack.c.h.b16 %v397
    %v1277 = vunpack.c.l.b16 %v398
    %v1278 = vunpack.c.h.b16 %v398
    %v1279 = vunpack.c.l.b16 %v399
    %v1280 = vunpack.c.h.b16 %v399
    %v1281 = vunpack.c.l.b16 %v400
    %v1282 = vunpack.c.h.b16 %v400
    %v1283 = vunpack.c.l.b16 %v401
    %v1284 = vunpack.c.h.b16 %v401
    %v1285 = vunpack.c.l.b16 %v402
    %v1286 = vunpack.c.h.b16 %v402
    %v1287 = vunpack.c.l.b16 %v403
    %v1288 = vunpack.c.h.b16 %v403
    %v1289 = vunpack.c.l.b16 %v404
    %v1290 = vunpack.c.h.b16 %v404
    %v1291 = vunpack.c.l.b16 %v405
    %v1292 = vunpack.c.h.b16 %v405
    %v1293 = vunpack.c.l.b16 %v406
    %v1294 = vunpack.c.h.b16 %v406
    %v1295 = vunpack.c.l.b16 %v407
    %v1296 = vunpack.c.h.b16 %v407
    %v1297 = vunpack.c.l.b16 %v408
    %v1298 = vunpack.c.h.b16 %v408
    %v1299 = vunpack.c.l.b16 %v409
    %v1300 = vunpack.c.h.b16 %v409
    %v1301 = vunpack.c.l.b16 %v410
    %v1302 = vunpack.c.h.b16 %v410
    %v1303 = vunpack.c.l.b16 %v411
    %v1304 = vunpack.c.h.b16 %v411
    %v1305 = vunpack.c.l.b16 %v412
    %v1306 = vunpack.c.h.b16 %v412
    %v1307 = vunpack.c.l.b16 %v413
    %v1308 = vunpack.c.h.b16 %v413
    %v1309 = vunpack.c.l.b16 %v414
    %v1310 = vunpack.c.h.b16 %v414
    %v1311 = vpack.c.b16 %v741, %v735
    %v1312 = vpack.c.b16 %v742, %v736
    %v1313 = vpack.c.b16 %v743, %v737
    %v1314 = vpack.c.b16 %v744, %v738
    %v1315 = vpack.c.b16 %v745, %v739
    %v1316 = vpack.c.b16 %v746, %v740
    %v1317 = vpack.c.b16 %v753, %v747
    %v1318 = vpack.c.b16 %v754, %v748
    %v1319 = vpack.c.b16 %v755, %v749
    %v1320 = vpack.c.b16 %v756, %v750
    %v1321 = vpack.c.b16 %v757, %v751
    %v1322 = vpack.c.b16 %v758, %v752
    %v1323 = vpack.c.b16 %v765, %v759
    %v1324 = vpack.c.b16 %v766, %v760
    %v1325 = vpack.c.b16 %v767, %v761
    %v1326 = vpack.c.b16 %v768, %v762
    %v1327 = vpack.c.b16 %v769, %v763
    %v1328 = vpack.c.b16 %v770, %v764
    %v1329 = vpack.c.b16 %v777, %v771
    %v1330 = vpack.c.b16 %v778, %v772
    %v1331 = vpack.c.b16 %v779, %v773
    %v1332 = vpack.c.b16 %v780, %v774
    %v1333 = vpack.c.b16 %v781, %v775
    %v1334 = vpack.c.b16 %v782, %v776
    %v1335 = vpack.c.b16 %v789, %v783
    %v1336 = vpack.c.b16 %v790, %v784
    %v1337 = vpack.c.b16 %v791, %v785
    %v1338 = vpack.c.b16 %v792, %v786
    %v1339 = vpack.c.b16 %v793, %v787
    %v1340 = vpack.c.b16 %v794, %v788
    %v1341 = vpack.c.b16 %v801, %v795
    %v1342 = vpack.c.b16 %v802, %v796
    %v1343 = vpack.c.b16 %v803, %v797
    %v1344 = vpack.c.b16 %v804, %v798
    %v1345 = vpack.c.b16 %v805, %v799
    %v1346 = vpack.c.b16 %v806, %v800
    %v1347 = vpack.c.b16 %v813, %v807
    %v1348 = vpack.c.b16 %v814, %v808
    %v1349 = vpack.c.b16 %v815, %v809
    %v1350 = vpack.c.b16 %v816, %v810
    %v1351 = vpack.c.b16 %v817, %v811
    %v1352 = vpack.c.b16 %v818, %v812
    %v1353 = vpack.c.b16 %v825, %v819
    %v1354 = vpack.c.b16 %v826, %v820
    %v1355 = vpack.c.b16 %v827, %v821
    %v1356 = vpack.c.b16 %v828, %v822
    %v1357 = vpack.c.b16 %v829, %v823
    %v1358 = vpack.c.b16 %v830, %v824
    %v1359 = vpack.c.b16 %v837, %v831
    %v1360 = vpack.c.b16 %v838, %v832
    %v1361 = vpack.c.b16 %v839, %v833
    %v1362 = vpack.c.b16 %v840, %v834
    %v1363 = vpack.c.b16 %v841, %v835
    %v1364 = vpack.c.b16 %v842, %v836
    %v1365 = vpack.c.b16 %v849, %v843
    %v1366 = vpack.c.b16 %v850, %v844
    %v1367 = vpack.c.b16 %v851, %v845
    %v1368 = vpack.c.b16 %v852, %v846
    %v1369 = vpack.c.b16 %v853, %v847
    %v1370 = vpack.c.b16 %v854, %v848
    %v1371 = vpack.c.b16 %v861, %v855
    %v1372 = vpack.c.b16 %v862, %v856
    %v1373 = vpack.c.b16 %v863, %v857
    %v1374 = vpack.c.b16 %v864, %v858
    %v1375 = vpack.c.b16 %v865, %v859
    %v1376 = vpack.c.b16 %v866, %v860
    %v1377 = vpack.c.b16 %v873, %v867
    %v1378 = vpack.c.b16 %v874, %v868
    %v1379 = vpack.c.b16 %v875, %v869
    %v1380 = vpack.c.b16 %v876, %v870
    %v1381 = vpack.c.b16 %v877, %v871
    %v1382 = vpack.c.b16 %v878, %v872
    %v1383 = vpack.c.b16 %v885, %v879
    %v1384 = vpack.c.b16 %v886, %v880
    %v1385 = vpack.c.b16 %v887, %v881
    %v1386 = vpack.c.b16 %v888, %v882
    %v1387 = vpack.c.b16 %v889, %v883
    %v1388 = vpack.c.b16 %v890, %v884
    %v1389 = vpack.c.b16 %v897, %v891
    %v1390 = vpack.c.b16 %v898, %v892
    %v1391 = vpack.c.b16 %v899, %v893
    %v1392 = vpack.c.b16 %v900, %v894
    %v1393 = vpack.c.b16 %v901, %v895
    %v1394 = vpack.c.b16 %v902, %v896
    %v1395 = vpack.c.b16 %v909, %v903
    %v1396 = vpack.c.b16 %v910, %v904
    %v1397 = vpack.c.b16 %v911, %v905
    %v1398 = vpack.c.b16 %v912, %v906
    %v1399 = vpack.c.b16 %v913, %v907
    %v1400 = vpack.c.b16 %v914, %v908
    %v1401 = vpack.c.b16 %v921, %v915
    %v1402 = vpack.c.b16 %v922, %v916
    %v1403 = vpack.c.b16 %v923, %v917
    %v1404 = vpack.c.b16 %v924, %v918
    %v1405 = vpack.c.b16 %v925, %v919
    %v1406 = vpack.c.b16 %v926, %v920
    %v1407 = vpack.c.b16 %v933, %v927
    %v1408 = vpack.c.b16 %v934, %v928
    %v1409 = vpack.c.b16 %v935, %v929
    %v1410 = vpack.c.b16 %v936, %v930
    %v1411 = vpack.c.b16 %v937, %v931
    %v1412 = vpack.c.b16 %v938, %v932
    %v1413 = vpack.c.b16 %v945, %v939
    %v1414 = vpack.c.b16 %v946, %v940
    %v1415 = vpack.c.b16 %v947, %v941
    %v1416 = vpack.c.b16 %v948, %v942
    %v1417 = vpack.c.b16 %v949, %v943
    %v1418 = vpack.c.b16 %v950, %v944
    %v1419 = vpack.c.b16 %v957, %v951
    %v1420 = vpack.c.b16 %v958, %v952
    %v1421 = vpack.c.b16 %v959, %v953
    %v1422 = vpack.c.b16 %v960, %v954
    %v1423 = vpack.c.b16 %v961, %v955
    %v1424 = vpack.c.b16 %v962, %v956
    %v1425 = vpack.c.b16 %v969, %v963
    %v1426 = vpack.c.b16 %v970, %v964
    %v1427 = vpack.c.b16 %v971, %v965
    %v1428 = vpack.c.b16 %v972, %v966
    %v1429 = vpack.c.b16 %v973, %v967
    %v1430 = vpack.c.b16 %v974, %v968
    %v1431 = vpack.c.b16 %v981, %v975
    %v1432 = vpack.c.b16 %v982, %v976
    %v1433 = vpack.c.b16 %v983, %v977
    %v1434 = vpack.c.b16 %v984, %v978
    %v1435 = vpack.c.b16 %v985, %v979
    %v1436 = vpack.c.b16 %v986, %v980
    %v1437 = vpack.c.b16 %v993, %v987
    %v1438 = vpack.c.b16 %v994, %v988
    %v1439 = vpack.c.b16 %v995, %v989
    %v1440 = vpack.c.b16 %v996, %v990
    %v1441 = vpack.c.b16 %v997, %v991
    %v1442 = vpack.c.b16 %v998, %v992
    %v1443 = vpack.c.b16 %v1005, %v999
    %v1444 = vpack.c.b16 %v1006, %v1000
    %v1445 = vpack.c.b16 %v1007, %v1001
    %v1446 = vpack.c.b16 %v1008, %v1002
    %v1447 = vpack.c.b16 %v1009, %v1003
    %v1448 = vpack.c.b16 %v1010, %v1004
    %v1449 = vpack.c.b16 %v1017, %v1011
    %v1450 = vpack.c.b16 %v1018, %v1012
    %v1451 = vpack.c.b16 %v1019, %v1013
    %v1452 = vpack.c.b16 %v1020, %v1014
    %v1453 = vpack.c.b16 %v1021, %v1015
    %v1454 = vpack.c.b16 %v1022, %v1016
    %v1455 = vpack.c.b16 %v1029, %v1023
    %v1456 = vpack.c.b16 %v1030, %v1024
    %v1457 = vpack.c.b16 %v1031, %v1025
    %v1458 = vpack.c.b16 %v1032, %v1026
    %v1459 = vpack.c.b16 %v1033, %v1027
    %v1460 = vpack.c.b16 %v1034, %v1028
    %v1461 = vpack.c.b16 %v1041, %v1035
    %v1462 = vpack.c.b16 %v1042, %v1036
    %v1463 = vpack.c.b16 %v1043, %v1037
    %v1464 = vpack.c.b16 %v1044, %v1038
    %v1465 = vpack.c.b16 %v1045, %v1039
    %v1466 = vpack.c.b16 %v1046, %v1040
    %v1467 = vpack.c.b16 %v1053, %v1047
    %v1468 = vpack.c.b16 %v1054, %v1048
    %v1469 = vpack.c.b16 %v1055, %v1049
    %v1470 = vpack.c.b16 %v1056, %v1050
    %v1471 = vpack.c.b16 %v1057, %v1051
    %v1472 = vpack.c.b16 %v1058, %v1052
    %v1473 = vpack.c.b16 %v1065, %v1059
    %v1474 = vpack.c.b16 %v1066, %v1060
    %v1475 = vpack.c.b16 %v1067, %v1061
    %v1476 = vpack.c.b16 %v1068, %v1062
    %v1477 = vpack.c.b16 %v1069, %v1063
    %v1478 = vpack.c.b16 %v1070, %v1064
    %v1479 = vpack.c.b16 %v1077, %v1071
    %v1480 = vpack.c.b16 %v1078, %v1072
    %v1481 = vpack.c.b16 %v1079, %v1073
    %v1482 = vpack.c.b16 %v1080, %v1074
    %v1483 = vpack.c.b16 %v1081, %v1075
    %v1484 = vpack.c.b16 %v1082, %v1076
    %v1485 = vpack.c.b16 %v1089, %v1083
    %v1486 = vpack.c.b16 %v1090, %v1084
    %v1487 = vpack.c.b16 %v1091, %v1085
    %v1488 = vpack.c.b16 %v1092, %v1086
    %v1489 = vpack.c.b16 %v1093, %v1087
    %v1490 = vpack.c.b16 %v1094, %v1088
    %v1491 = vpack.c.b16 %v1101, %v1095
    %v1492 = vpack.c.b16 %v1102, %v1096
    %v1493 = vpack.c.b16 %v1103, %v1097
    %v1494 = vpack.c.b16 %v1104, %v1098
    %v1495 = vpack.c.b16 %v1105, %v1099
    %v1496 = vpack.c.b16 %v1106, %v1100
    %v1497 = vpack.c.b16 %v1113, %v1107
    %v1498 = vpack.c.b16 %v1114, %v1108
    %v1499 = vpack.c.b16 %v1115, %v1109
    %v1500 = vpack.c.b16 %v1116, %v1110
    %v1501 = vpack.c.b16 %v1117, %v1111
    %v1502 = vpack.c.b16 %v1118, %v1112
    %v1503 = vpack.c.b16 %v1125, %v1119
    %v1504 = vpack.c.b16 %v1126, %v1120
    %v1505 = vpack.c.b16 %v1127, %v1121
    %v1506 = vpack.c.b16 %v1128, %v1122
    %v1507 = vpack.c.b16 %v1129, %v1123
    %v1508 = vpack.c.b16 %v1130, %v1124
    %v1509 = vpack.c.b16 %v1137, %v1131
    %v1510 = vpack.c.b16 %v1138, %v1132
    %v1511 = vpack.c.b16 %v1139, %v1133
    %v1512 = vpack.c.b16 %v1140, %v1134
    %v1513 = vpack.c.b16 %v1141, %v1135
    %v1514 = vpack.c.b16 %v1142, %v1136
    %v1515 = vpack.c.b16 %v1149, %v1143
    %v1516 = vpack.c.b16 %v1150, %v1144
    %v1517 = vpack.c.b16 %v1151, %v1145
    %v1518 = vpack.c.b16 %v1152, %v1146
    %v1519 = vpack.c.b16 %v1153, %v1147
    %v1520 = vpack.c.b16 %v1154, %v1148
    %v1521 = vpack.c.b16 %v1161, %v1155
    %v1522 = vpack.c.b16 %v1162, %v1156
    %v1523 = vpack.c.b16 %v1163, %v1157
    %v1524 = vpack.c.b16 %v1164, %v1158
    %v1525 = vpack.c.b16 %v1165, %v1159
    %v1526 = vpack.c.b16 %v1166, %v1160
    %v1527 = vpack.c.b16 %v1173, %v1167
    %v1528 = vpack.c.b16 %v1174, %v1168
    %v1529 = vpack.c.b16 %v1175, %v1169
    %v1530 = vpack.c.b16 %v1176, %v1170
    %v1531 = vpack.c.b16 %v1177, %v1171
    %v1532 = vpack.c.b16 %v1178, %v1172
    %v1533 = vpack.c.b16 %v1185, %v1179
    %v1534 = vpack.c.b16 %v1186, %v1180
    %v1535 = vpack.c.b16 %v1187, %v1181
    %v1536 = vpack.c.b16 %v1188, %v1182
    %v1537 = vpack.c.b16 %v1189, %v1183
    %v1538 = vpack.c.b16 %v1190, %v1184
    %v1539 = vpack.c.b16 %v1197, %v1191
    %v1540 = vpack.c.b16 %v1198, %v1192
    %v1541 = vpack.c.b16 %v1199, %v1193
    %v1542 = vpack.c.b16 %v1200, %v1194
    %v1543 = vpack.c.b16 %v1201, %v1195
    %v1544 = vpack.c.b16 %v1202, %v1196
    %v1545 = vpack.c.b16 %v1209, %v1203
    %v1546 = vpack.c.b16 %v1210, %v1204
    %v1547 = vpack.c.b16 %v1211, %v1205
    %v1548 = vpack.c.b16 %v1212, %v1206
    %v1549 = vpack.c.b16 %v1213, %v1207
    %v1550 = vpack.c.b16 %v1214, %v1208
    %v1551 = vpack.c.b16 %v1221, %v1215
    %v1552 = vpack.c.b16 %v1222, %v1216
    %v1553 = vpack.c.b16 %v1223, %v1217
    %v1554 = vpack.c.b16 %v1224, %v1218
    %v1555 = vpack.c.b16 %v1225, %v1219
    %v1556 = vpack.c.b16 %v1226, %v1220
    %v1557 = vpack.c.b16 %v1233, %v1227
    %v1558 = vpack.c.b16 %v1234, %v1228
    %v1559 = vpack.c.b16 %v1235, %v1229
    %v1560 = vpack.c.b16 %v1236, %v1230
    %v1561 = vpack.c.b16 %v1237, %v1231
    %v1562 = vpack.c.b16 %v1238, %v1232
    %v1563 = vpack.c.b16 %v1245, %v1239
    %v1564 = vpack.c.b16 %v1246, %v1240
    %v1565 = vpack.c.b16 %v1247, %v1241
    %v1566 = vpack.c.b16 %v1248, %v1242
    %v1567 = vpack.c.b16 %v1249, %v1243
    %v1568 = vpack.c.b16 %v1250, %v1244
    %v1569 = vpack.c.b16 %v1257, %v1251
    %v1570 = vpack.c.b16 %v1258, %v1252
    %v1571 = vpack.c.b16 %v1259, %v1253
    %v1572 = vpack.c.b16 %v1260, %v1254
    %v1573 = vpack.c.b16 %v1261, %v1255
    %v1574 = vpack.c.b16 %v1262, %v1256
    %v1575 = vpack.c.b16 %v1269, %v1263
    %v1576 = vpack.c.b16 %v1270, %v1264
    %v1577 = vpack.c.b16 %v1271, %v1265
    %v1578 = vpack.c.b16 %v1272, %v1266
    %v1579 = vpack.c.b16 %v1273, %v1267
    %v1580 = vpack.c.b16 %v1274, %v1268
    %v1581 = vpack.c.b16 %v1281, %v1275
    %v1582 = vpack.c.b16 %v1282, %v1276
    %v1583 = vpack.c.b16 %v1283, %v1277
    %v1584 = vpack.c.b16 %v1284, %v1278
    %v1585 = vpack.c.b16 %v1285, %v1279
    %v1586 = vpack.c.b16 %v1286, %v1280
    %v1587 = vpack.c.b16 %v1293, %v1287
    %v1588 = vpack.c.b16 %v1294, %v1288
    %v1589 = vpack.c.b16 %v1295, %v1289
    %v1590 = vpack.c.b16 %v1296, %v1290
    %v1591 = vpack.c.b16 %v1297, %v1291
    %v1592 = vpack.c.b16 %v1298, %v1292
    %v1593 = vpack.c.b16 %v1305, %v1299
    %v1594 = vpack.c.b16 %v1306, %v1300
    %v1595 = vpack.c.b16 %v1307, %v1301
    %v1596 = vpack.c.b16 %v1308, %v1302
    %v1597 = vpack.c.b16 %v1309, %v1303
    %v1598 = vpack.c.b16 %v1310, %v1304
    %1887 = vmatprep.subr.bf16.mxu0 %v1312
    %1888 = vmatpush1.bf16.msra.mxu0 %v1311
    %1889 = vmatprep.subr.bf16.mxu0 %v1318
    %1890 = vmatpush1.bf16.msra.mxu0 %v1317
    %1891 = vmatprep.subr.bf16.mxu0 %v1324
    %1892 = vmatpush1.bf16.msra.mxu0 %v1323
    %1893 = vmatprep.subr.bf16.mxu0 %v1330
    %1894 = vmatpush1.bf16.msra.mxu0 %v1329
    %1895 = vmatprep.subr.bf16.mxu0 %v1336
    %1896 = vmatpush1.bf16.msra.mxu0 %v1335
    %1897 = vmatprep.subr.bf16.mxu0 %v1342
    %1898 = vmatpush1.bf16.msra.mxu0 %v1341
    %1899 = vmatprep.subr.bf16.mxu0 %v1348
    %1900 = vmatpush1.bf16.msra.mxu0 %v1347
    %1901 = vmatprep.subr.bf16.mxu0 %v1354
    %1902 = vmatpush1.bf16.msra.mxu0 %v1353
    %1903 = vmatprep.subr.bf16.mxu0 %v1360
    %1904 = vmatpush1.bf16.msra.mxu0 %v1359
    %1905 = vmatprep.subr.bf16.mxu0 %v1366
    %1906 = vmatpush1.bf16.msra.mxu0 %v1365
    %1907 = vmatprep.subr.bf16.mxu0 %v1372
    %1908 = vmatpush1.bf16.msra.mxu0 %v1371
    %1909 = vmatprep.subr.bf16.mxu0 %v1378
    %1910 = vmatpush1.bf16.msra.mxu0 %v1377
    %1911 = vmatprep.subr.bf16.mxu0 %v1384
    %1912 = vmatpush1.bf16.msra.mxu0 %v1383
    %1913 = vmatprep.subr.bf16.mxu0 %v1390
    %1914 = vmatpush1.bf16.msra.mxu0 %v1389
    %1915 = vmatprep.subr.bf16.mxu0 %v1396
    %1916 = vmatpush1.bf16.msra.mxu0 %v1395
    %1917 = vmatprep.subr.bf16.mxu0 %v1402
    %1918 = vmatpush1.bf16.msra.mxu0 %v1401
    %1919 = vmatprep.mubr.bf16.mxu0 %v122
    %1920 = vmatmul.mubr.bf16.gmra.mrb[0].mxu0 %v121
    %v1921 = vpop.f32.mrb[0].mxu0
    %v1922 = vadd.f32 %v420, %v1921
    %v1923 = vpop.f32.mrb[0].mxu0
    %v1924 = vadd.f32 %v424, %v1923
    %v1925 = vpop.f32.mrb[0].mxu0
    %v1926 = vpop.f32.mrb[0].mxu0
    %1927 = vdwg.mxu0
    %1928 = vmatprep.subr.bf16.mxu0 %v1408
    %1929 = vmatpush1.bf16.msra.mxu0 %v1407
    %1930 = vmatprep.subr.bf16.mxu0 %v1414
    %1931 = vmatpush1.bf16.msra.mxu0 %v1413
    %1932 = vmatprep.subr.bf16.mxu0 %v1420
    %1933 = vmatpush1.bf16.msra.mxu0 %v1419
    %1934 = vmatprep.subr.bf16.mxu0 %v1426
    %1935 = vmatpush1.bf16.msra.mxu0 %v1425
    %1936 = vmatprep.subr.bf16.mxu0 %v1432
    %1937 = vmatpush1.bf16.msra.mxu0 %v1431
    %1938 = vmatprep.subr.bf16.mxu0 %v1438
    %1939 = vmatpush1.bf16.msra.mxu0 %v1437
    %1940 = vmatprep.subr.bf16.mxu0 %v1444
    %1941 = vmatpush1.bf16.msra.mxu0 %v1443
    %1942 = vmatprep.subr.bf16.mxu0 %v1450
    %1943 = vmatpush1.bf16.msra.mxu0 %v1449
    %1944 = vmatprep.subr.bf16.mxu0 %v1456
    %1945 = vmatpush1.bf16.msra.mxu0 %v1455
    %1946 = vmatprep.subr.bf16.mxu0 %v1462
    %1947 = vmatpush1.bf16.msra.mxu0 %v1461
    %1948 = vmatprep.subr.bf16.mxu0 %v1468
    %1949 = vmatpush1.bf16.msra.mxu0 %v1467
    %1950 = vmatprep.subr.bf16.mxu0 %v1474
    %1951 = vmatpush1.bf16.msra.mxu0 %v1473
    %1952 = vmatprep.subr.bf16.mxu0 %v1480
    %1953 = vmatpush1.bf16.msra.mxu0 %v1479
    %1954 = vmatprep.subr.bf16.mxu0 %v1486
    %1955 = vmatpush1.bf16.msra.mxu0 %v1485
    %1956 = vmatprep.subr.bf16.mxu0 %v1492
    %1957 = vmatpush1.bf16.msra.mxu0 %v1491
    %1958 = vmatprep.subr.bf16.mxu0 %v1498
    %1959 = vmatpush1.bf16.msra.mxu0 %v1497
    %1960 = vmatprep.mubr.bf16.mxu0 %v124
    %1961 = vmatmul.mubr.bf16.gmra.mrb[0].mxu0 %v123
    %v1962 = vpop.f32.mrb[0].mxu0
    %v1963 = vadd.f32 %v1922, %v1962
    %v1964 = vpop.f32.mrb[0].mxu0
    %v1965 = vadd.f32 %v1924, %v1964
    %v1966 = vpop.f32.mrb[0].mxu0
    %v1967 = vpop.f32.mrb[0].mxu0
    %1968 = vdwg.mxu0
    %1969 = vmatprep.subr.bf16.mxu0 %v1504
    %1970 = vmatpush1.bf16.msra.mxu0 %v1503
    %1971 = vmatprep.subr.bf16.mxu0 %v1510
    %1972 = vmatpush1.bf16.msra.mxu0 %v1509
    %1973 = vmatprep.subr.bf16.mxu0 %v1516
    %1974 = vmatpush1.bf16.msra.mxu0 %v1515
    %1975 = vmatprep.subr.bf16.mxu0 %v1522
    %1976 = vmatpush1.bf16.msra.mxu0 %v1521
    %1977 = vmatprep.subr.bf16.mxu0 %v1528
    %1978 = vmatpush1.bf16.msra.mxu0 %v1527
    %1979 = vmatprep.subr.bf16.mxu0 %v1534
    %1980 = vmatpush1.bf16.msra.mxu0 %v1533
    %1981 = vmatprep.subr.bf16.mxu0 %v1540
    %1982 = vmatpush1.bf16.msra.mxu0 %v1539
    %1983 = vmatprep.subr.bf16.mxu0 %v1546
    %1984 = vmatpush1.bf16.msra.mxu0 %v1545
    %1985 = vmatprep.subr.bf16.mxu0 %v1552
    %1986 = vmatpush1.bf16.msra.mxu0 %v1551
    %1987 = vmatprep.subr.bf16.mxu0 %v1558
    %1988 = vmatpush1.bf16.msra.mxu0 %v1557
    %1989 = vmatprep.subr.bf16.mxu0 %v1564
    %1990 = vmatpush1.bf16.msra.mxu0 %v1563
    %1991 = vmatprep.subr.bf16.mxu0 %v1570
    %1992 = vmatpush1.bf16.msra.mxu0 %v1569
    %1993 = vmatprep.subr.bf16.mxu0 %v1576
    %1994 = vmatpush1.bf16.msra.mxu0 %v1575
    %1995 = vmatprep.subr.bf16.mxu0 %v1582
    %1996 = vmatpush1.bf16.msra.mxu0 %v1581
    %1997 = vmatprep.subr.bf16.mxu0 %v1588
    %1998 = vmatpush1.bf16.msra.mxu0 %v1587
    %1999 = vmatprep.subr.bf16.mxu0 %v1594
    %2000 = vmatpush1.bf16.msra.mxu0 %v1593
    %2001 = vmatprep.mubr.bf16.mxu0 %v126
    %2002 = vmatmul.mubr.bf16.gmra.mrb[0].mxu0 %v125
    %v2003 = vpop.f32.mrb[0].mxu0
    %v2004 = vadd.f32 %v1963, %v2003
    %v2005 = vpop.f32.mrb[0].mxu0
    %v2006 = vadd.f32 %v1965, %v2005
    %v2007 = vpop.f32.mrb[0].mxu0
    %v2008 = vpop.f32.mrb[0].mxu0
    %2009 = vdwg.mxu0
    %2010 = vmatprep.subr.bf16.mxu0 %v1314
    %2011 = vmatpush1.bf16.msra.mxu0 %v1313
    %2012 = vmatprep.subr.bf16.mxu0 %v1320
    %2013 = vmatpush1.bf16.msra.mxu0 %v1319
    %2014 = vmatprep.subr.bf16.mxu0 %v1326
    %2015 = vmatpush1.bf16.msra.mxu0 %v1325
    %2016 = vmatprep.subr.bf16.mxu0 %v1332
    %2017 = vmatpush1.bf16.msra.mxu0 %v1331
    %2018 = vmatprep.subr.bf16.mxu0 %v1338
    %2019 = vmatpush1.bf16.msra.mxu0 %v1337
    %2020 = vmatprep.subr.bf16.mxu0 %v1344
    %2021 = vmatpush1.bf16.msra.mxu0 %v1343
    %2022 = vmatprep.subr.bf16.mxu0 %v1350
    %2023 = vmatpush1.bf16.msra.mxu0 %v1349
    %2024 = vmatprep.subr.bf16.mxu0 %v1356
    %2025 = vmatpush1.bf16.msra.mxu0 %v1355
    %2026 = vmatprep.subr.bf16.mxu0 %v1362
    %2027 = vmatpush1.bf16.msra.mxu0 %v1361
    %2028 = vmatprep.subr.bf16.mxu0 %v1368
    %2029 = vmatpush1.bf16.msra.mxu0 %v1367
    %2030 = vmatprep.subr.bf16.mxu0 %v1374
    %2031 = vmatpush1.bf16.msra.mxu0 %v1373
    %2032 = vmatprep.subr.bf16.mxu0 %v1380
    %2033 = vmatpush1.bf16.msra.mxu0 %v1379
    %2034 = vmatprep.subr.bf16.mxu0 %v1386
    %2035 = vmatpush1.bf16.msra.mxu0 %v1385
    %2036 = vmatprep.subr.bf16.mxu0 %v1392
    %2037 = vmatpush1.bf16.msra.mxu0 %v1391
    %2038 = vmatprep.subr.bf16.mxu0 %v1398
    %2039 = vmatpush1.bf16.msra.mxu0 %v1397
    %2040 = vmatprep.subr.bf16.mxu0 %v1404
    %2041 = vmatpush1.bf16.msra.mxu0 %v1403
    %2042 = vmatprep.mubr.bf16.mxu0 %v122
    %2043 = vmatmul.mubr.bf16.gmra.mrb[0].mxu0 %v121
    %v2044 = vpop.f32.mrb[0].mxu0
    %v2045 = vadd.f32 %v428, %v2044
    %v2046 = vpop.f32.mrb[0].mxu0
    %v2047 = vadd.f32 %v432, %v2046
    %v2048 = vpop.f32.mrb[0].mxu0
    %v2049 = vpop.f32.mrb[0].mxu0
    %2050 = vdwg.mxu0
    %2051 = vmatprep.subr.bf16.mxu0 %v1410
    %2052 = vmatpush1.bf16.msra.mxu0 %v1409
    %2053 = vmatprep.subr.bf16.mxu0 %v1416
    %2054 = vmatpush1.bf16.msra.mxu0 %v1415
    %2055 = vmatprep.subr.bf16.mxu0 %v1422
    %2056 = vmatpush1.bf16.msra.mxu0 %v1421
    %2057 = vmatprep.subr.bf16.mxu0 %v1428
    %2058 = vmatpush1.bf16.msra.mxu0 %v1427
    %2059 = vmatprep.subr.bf16.mxu0 %v1434
    %2060 = vmatpush1.bf16.msra.mxu0 %v1433
    %2061 = vmatprep.subr.bf16.mxu0 %v1440
    %2062 = vmatpush1.bf16.msra.mxu0 %v1439
    %2063 = vmatprep.subr.bf16.mxu0 %v1446
    %2064 = vmatpush1.bf16.msra.mxu0 %v1445
    %2065 = vmatprep.subr.bf16.mxu0 %v1452
    %2066 = vmatpush1.bf16.msra.mxu0 %v1451
    %2067 = vmatprep.subr.bf16.mxu0 %v1458
    %2068 = vmatpush1.bf16.msra.mxu0 %v1457
    %2069 = vmatprep.subr.bf16.mxu0 %v1464
    %2070 = vmatpush1.bf16.msra.mxu0 %v1463
    %2071 = vmatprep.subr.bf16.mxu0 %v1470
    %2072 = vmatpush1.bf16.msra.mxu0 %v1469
    %2073 = vmatprep.subr.bf16.mxu0 %v1476
    %2074 = vmatpush1.bf16.msra.mxu0 %v1475
    %2075 = vmatprep.subr.bf16.mxu0 %v1482
    %2076 = vmatpush1.bf16.msra.mxu0 %v1481
    %2077 = vmatprep.subr.bf16.mxu0 %v1488
    %2078 = vmatpush1.bf16.msra.mxu0 %v1487
    %2079 = vmatprep.subr.bf16.mxu0 %v1494
    %2080 = vmatpush1.bf16.msra.mxu0 %v1493
    %2081 = vmatprep.subr.bf16.mxu0 %v1500
    %2082 = vmatpush1.bf16.msra.mxu0 %v1499
    %2083 = vmatprep.mubr.bf16.mxu0 %v124
    %2084 = vmatmul.mubr.bf16.gmra.mrb[0].mxu0 %v123
    %v2085 = vpop.f32.mrb[0].mxu0
    %v2086 = vadd.f32 %v2045, %v2085
    %v2087 = vpop.f32.mrb[0].mxu0
    %v2088 = vadd.f32 %v2047, %v2087
    %v2089 = vpop.f32.mrb[0].mxu0
    %v2090 = vpop.f32.mrb[0].mxu0
    %2091 = vdwg.mxu0
    %2092 = vmatprep.subr.bf16.mxu0 %v1506
    %2093 = vmatpush1.bf16.msra.mxu0 %v1505
    %2094 = vmatprep.subr.bf16.mxu0 %v1512
    %2095 = vmatpush1.bf16.msra.mxu0 %v1511
    %2096 = vmatprep.subr.bf16.mxu0 %v1518
    %2097 = vmatpush1.bf16.msra.mxu0 %v1517
    %2098 = vmatprep.subr.bf16.mxu0 %v1524
    %2099 = vmatpush1.bf16.msra.mxu0 %v1523
    %2100 = vmatprep.subr.bf16.mxu0 %v1530
    %2101 = vmatpush1.bf16.msra.mxu0 %v1529
    %2102 = vmatprep.subr.bf16.mxu0 %v1536
    %2103 = vmatpush1.bf16.msra.mxu0 %v1535
    %2104 = vmatprep.subr.bf16.mxu0 %v1542
    %2105 = vmatpush1.bf16.msra.mxu0 %v1541
    %2106 = vmatprep.subr.bf16.mxu0 %v1548
    %2107 = vmatpush1.bf16.msra.mxu0 %v1547
    %2108 = vmatprep.subr.bf16.mxu0 %v1554
    %2109 = vmatpush1.bf16.msra.mxu0 %v1553
    %2110 = vmatprep.subr.bf16.mxu0 %v1560
    %2111 = vmatpush1.bf16.msra.mxu0 %v1559
    %2112 = vmatprep.subr.bf16.mxu0 %v1566
    %2113 = vmatpush1.bf16.msra.mxu0 %v1565
    %2114 = vmatprep.subr.bf16.mxu0 %v1572
    %2115 = vmatpush1.bf16.msra.mxu0 %v1571
    %2116 = vmatprep.subr.bf16.mxu0 %v1578
    %2117 = vmatpush1.bf16.msra.mxu0 %v1577
    %2118 = vmatprep.subr.bf16.mxu0 %v1584
    %2119 = vmatpush1.bf16.msra.mxu0 %v1583
    %2120 = vmatprep.subr.bf16.mxu0 %v1590
    %2121 = vmatpush1.bf16.msra.mxu0 %v1589
    %2122 = vmatprep.subr.bf16.mxu0 %v1596
    %2123 = vmatpush1.bf16.msra.mxu0 %v1595
    %2124 = vmatprep.mubr.bf16.mxu0 %v126
    %2125 = vmatmul.mubr.bf16.gmra.mrb[0].mxu0 %v125
    %v2126 = vpop.f32.mrb[0].mxu0
    %v2127 = vadd.f32 %v2086, %v2126
    %v2128 = vpop.f32.mrb[0].mxu0
    %v2129 = vadd.f32 %v2088, %v2128
    %v2130 = vpop.f32.mrb[0].mxu0
    %v2131 = vpop.f32.mrb[0].mxu0
    %2132 = vdwg.mxu0
    %2133 = vmatprep.subr.bf16.mxu0 %v1316
    %2134 = vmatpush1.bf16.msra.mxu0 %v1315
    %2135 = vmatprep.subr.bf16.mxu0 %v1322
    %2136 = vmatpush1.bf16.msra.mxu0 %v1321
    %2137 = vmatprep.subr.bf16.mxu0 %v1328
    %2138 = vmatpush1.bf16.msra.mxu0 %v1327
    %2139 = vmatprep.subr.bf16.mxu0 %v1334
    %2140 = vmatpush1.bf16.msra.mxu0 %v1333
    %2141 = vmatprep.subr.bf16.mxu0 %v1340
    %2142 = vmatpush1.bf16.msra.mxu0 %v1339
    %2143 = vmatprep.subr.bf16.mxu0 %v1346
    %2144 = vmatpush1.bf16.msra.mxu0 %v1345
    %2145 = vmatprep.subr.bf16.mxu0 %v1352
    %2146 = vmatpush1.bf16.msra.mxu0 %v1351
    %2147 = vmatprep.subr.bf16.mxu0 %v1358
    %2148 = vmatpush1.bf16.msra.mxu0 %v1357
    %2149 = vmatprep.subr.bf16.mxu0 %v1364
    %2150 = vmatpush1.bf16.msra.mxu0 %v1363
    %2151 = vmatprep.subr.bf16.mxu0 %v1370
    %2152 = vmatpush1.bf16.msra.mxu0 %v1369
    %2153 = vmatprep.subr.bf16.mxu0 %v1376
    %2154 = vmatpush1.bf16.msra.mxu0 %v1375
    %2155 = vmatprep.subr.bf16.mxu0 %v1382
    %2156 = vmatpush1.bf16.msra.mxu0 %v1381
    %2157 = vmatprep.subr.bf16.mxu0 %v1388
    %2158 = vmatpush1.bf16.msra.mxu0 %v1387
    %2159 = vmatprep.subr.bf16.mxu0 %v1394
    %2160 = vmatpush1.bf16.msra.mxu0 %v1393
    %2161 = vmatprep.subr.bf16.mxu0 %v1400
    %2162 = vmatpush1.bf16.msra.mxu0 %v1399
    %2163 = vmatprep.subr.bf16.mxu0 %v1406
    %2164 = vmatpush1.bf16.msra.mxu0 %v1405
    %2165 = vmatprep.mubr.bf16.mxu0 %v122
    %2166 = vmatmul.mubr.bf16.gmra.mrb[0].mxu0 %v121
    %v2167 = vpop.f32.mrb[0].mxu0
    %v2168 = vadd.f32 %v436, %v2167
    %v2169 = vpop.f32.mrb[0].mxu0
    %v2170 = vadd.f32 %v440, %v2169
    %v2171 = vpop.f32.mrb[0].mxu0
    %v2172 = vpop.f32.mrb[0].mxu0
    %2173 = vdwg.mxu0
    %2174 = vmatprep.subr.bf16.mxu0 %v1412
    %2175 = vmatpush1.bf16.msra.mxu0 %v1411
    %2176 = vmatprep.subr.bf16.mxu0 %v1418
    %2177 = vmatpush1.bf16.msra.mxu0 %v1417
    %2178 = vmatprep.subr.bf16.mxu0 %v1424
    %2179 = vmatpush1.bf16.msra.mxu0 %v1423
    %2180 = vmatprep.subr.bf16.mxu0 %v1430
    %2181 = vmatpush1.bf16.msra.mxu0 %v1429
    %2182 = vmatprep.subr.bf16.mxu0 %v1436
    %2183 = vmatpush1.bf16.msra.mxu0 %v1435
    %2184 = vmatprep.subr.bf16.mxu0 %v1442
    %2185 = vmatpush1.bf16.msra.mxu0 %v1441
    %2186 = vmatprep.subr.bf16.mxu0 %v1448
    %2187 = vmatpush1.bf16.msra.mxu0 %v1447
    %2188 = vmatprep.subr.bf16.mxu0 %v1454
    %2189 = vmatpush1.bf16.msra.mxu0 %v1453
    %2190 = vmatprep.subr.bf16.mxu0 %v1460
    %2191 = vmatpush1.bf16.msra.mxu0 %v1459
    %2192 = vmatprep.subr.bf16.mxu0 %v1466
    %2193 = vmatpush1.bf16.msra.mxu0 %v1465
    %2194 = vmatprep.subr.bf16.mxu0 %v1472
    %2195 = vmatpush1.bf16.msra.mxu0 %v1471
    %2196 = vmatprep.subr.bf16.mxu0 %v1478
    %2197 = vmatpush1.bf16.msra.mxu0 %v1477
    %2198 = vmatprep.subr.bf16.mxu0 %v1484
    %2199 = vmatpush1.bf16.msra.mxu0 %v1483
    %2200 = vmatprep.subr.bf16.mxu0 %v1490
    %2201 = vmatpush1.bf16.msra.mxu0 %v1489
    %2202 = vmatprep.subr.bf16.mxu0 %v1496
    %2203 = vmatpush1.bf16.msra.mxu0 %v1495
    %2204 = vmatprep.subr.bf16.mxu0 %v1502
    %2205 = vmatpush1.bf16.msra.mxu0 %v1501
    %2206 = vmatprep.mubr.bf16.mxu0 %v124
    %2207 = vmatmul.mubr.bf16.gmra.mrb[0].mxu0 %v123
    %v2208 = vpop.f32.mrb[0].mxu0
    %v2209 = vadd.f32 %v2168, %v2208
    %v2210 = vpop.f32.mrb[0].mxu0
    %v2211 = vadd.f32 %v2170, %v2210
    %v2212 = vpop.f32.mrb[0].mxu0
    %v2213 = vpop.f32.mrb[0].mxu0
    %2214 = vdwg.mxu0
    %2215 = vmatprep.subr.bf16.mxu0 %v1508
    %2216 = vmatpush1.bf16.msra.mxu0 %v1507
    %2217 = vmatprep.subr.bf16.mxu0 %v1514
    %2218 = vmatpush1.bf16.msra.mxu0 %v1513
    %2219 = vmatprep.subr.bf16.mxu0 %v1520
    %2220 = vmatpush1.bf16.msra.mxu0 %v1519
    %2221 = vmatprep.subr.bf16.mxu0 %v1526
    %2222 = vmatpush1.bf16.msra.mxu0 %v1525
    %2223 = vmatprep.subr.bf16.mxu0 %v1532
    %2224 = vmatpush1.bf16.msra.mxu0 %v1531
    %2225 = vmatprep.subr.bf16.mxu0 %v1538
    %2226 = vmatpush1.bf16.msra.mxu0 %v1537
    %2227 = vmatprep.subr.bf16.mxu0 %v1544
    %2228 = vmatpush1.bf16.msra.mxu0 %v1543
    %2229 = vmatprep.subr.bf16.mxu0 %v1550
    %2230 = vmatpush1.bf16.msra.mxu0 %v1549
    %2231 = vmatprep.subr.bf16.mxu0 %v1556
    %2232 = vmatpush1.bf16.msra.mxu0 %v1555
    %2233 = vmatprep.subr.bf16.mxu0 %v1562
    %2234 = vmatpush1.bf16.msra.mxu0 %v1561
    %2235 = vmatprep.subr.bf16.mxu0 %v1568
    %2236 = vmatpush1.bf16.msra.mxu0 %v1567
    %2237 = vmatprep.subr.bf16.mxu0 %v1574
    %2238 = vmatpush1.bf16.msra.mxu0 %v1573
    %2239 = vmatprep.subr.bf16.mxu0 %v1580
    %2240 = vmatpush1.bf16.msra.mxu0 %v1579
    %2241 = vmatprep.subr.bf16.mxu0 %v1586
    %2242 = vmatpush1.bf16.msra.mxu0 %v1585
    %2243 = vmatprep.subr.bf16.mxu0 %v1592
    %2244 = vmatpush1.bf16.msra.mxu0 %v1591
    %2245 = vmatprep.subr.bf16.mxu0 %v1598
    %2246 = vmatpush1.bf16.msra.mxu0 %v1597
    %2247 = vmatprep.mubr.bf16.mxu0 %v126
    %2248 = vmatmul.mubr.bf16.gmra.mrb[0].mxu0 %v125
    %v2249 = vpop.f32.mrb[0].mxu0
    %v2250 = vadd.f32 %v2209, %v2249
    %v2251 = vpop.f32.mrb[0].mxu0
    %v2252 = vadd.f32 %v2211, %v2251
    %v2253 = vpop.f32.mrb[0].mxu0
    %v2254 = vpop.f32.mrb[0].mxu0
    %2255 = vdwg.mxu0
    %v2256 = vtanh.pop %v2004
    %v2257 = vtanh.pop %v2006
    %v2258 = vtanh.pop %v2127
    %v2259 = vtanh.pop %v2129
    %v2260 = vtanh.pop %v2250
    %v2261 = vtanh.pop %v2252
    %v2262 = vpack.c.bf16 %v2256, %v2256
    %v2263 = vpack.c.bf16 %v2257, %v2257
    %v2264 = vpack.c.bf16 %v2258, %v2258
    %v2265 = vpack.c.bf16 %v2259, %v2259
    %v2266 = vpack.c.bf16 %v2260, %v2260
    %v2267 = vpack.c.bf16 %v2261, %v2261
    %v2268 = vld [vmem:[#allocation8] sm:$0xff]
    %v2269 = vld [vmem:[#allocation8 + $0x8] sm:$0xff]
    %v2270 = vld [vmem:[#allocation8 + $0x10] sm:$0xff]
    %v2271 = vld [vmem:[#allocation8 + $0x18] sm:$0xff]
    %v2272 = vld [vmem:[#allocation8 + $0x20] sm:$0xff]
    %v2273 = vld [vmem:[#allocation8 + $0x28] sm:$0xff]
    %v2274 = vld [vmem:[#allocation8 + $0x30] sm:$0xff]
    %v2275 = vld [vmem:[#allocation8 + $0x38] sm:$0xff]
    %v2276 = vld [vmem:[#allocation8 + $0x40] sm:$0xff]
    %v2277 = vld [vmem:[#allocation8 + $0x48] sm:$0xff]
    %v2278 = vld [vmem:[#allocation8 + $0x50] sm:$0xff]
    %v2279 = vld [vmem:[#allocation8 + $0x58] sm:$0xff]
    %v2280 = vld [vmem:[#allocation8 + $0x60] sm:$0xff]
    %v2281 = vld [vmem:[#allocation8 + $0x68] sm:$0xff]
    %v2282 = vld [vmem:[#allocation8 + $0x70] sm:$0xff]
    %v2283 = vld [vmem:[#allocation8 + $0x78] sm:$0xff]
    %v2284 = vld [vmem:[#allocation8 + $0x80] sm:$0xff]
    %v2285 = vld [vmem:[#allocation8 + $0x88] sm:$0xff]
    %v2286 = vld [vmem:[#allocation8 + $0x90] sm:$0xff]
    %v2287 = vld [vmem:[#allocation8 + $0x98] sm:$0xff]
    %v2288 = vld [vmem:[#allocation8 + $0xa0] sm:$0xff]
    %v2289 = vld [vmem:[#allocation8 + $0xa8] sm:$0xff]
    %v2290 = vld [vmem:[#allocation8 + $0xb0] sm:$0xff]
    %v2291 = vld [vmem:[#allocation8 + $0xb8] sm:$0xff]
    %v2292 = vld [vmem:[#allocation8 + $0xc0] sm:$0xff]
    %v2293 = vld [vmem:[#allocation8 + $0xc8] sm:$0xff]
    %v2294 = vld [vmem:[#allocation8 + $0xd0] sm:$0xff]
    %v2295 = vld [vmem:[#allocation8 + $0xd8] sm:$0xff]
    %v2296 = vld [vmem:[#allocation8 + $0xe0] sm:$0xff]
    %v2297 = vld [vmem:[#allocation8 + $0xe8] sm:$0xff]
    %v2298 = vld [vmem:[#allocation8 + $0xf0] sm:$0xff]
    %v2299 = vld [vmem:[#allocation8 + $0xf8] sm:$0xff]
    %v2300 = vld [vmem:[#allocation8 + $0x100] sm:$0xff]
    %v2301 = vld [vmem:[#allocation8 + $0x108] sm:$0xff]
    %v2302 = vld [vmem:[#allocation8 + $0x110] sm:$0xff]
    %v2303 = vld [vmem:[#allocation8 + $0x118] sm:$0xff]
    %v2304 = vld [vmem:[#allocation8 + $0x120] sm:$0xff]
    %v2305 = vld [vmem:[#allocation8 + $0x128] sm:$0xff]
    %v2306 = vld [vmem:[#allocation8 + $0x130] sm:$0xff]
    %v2307 = vld [vmem:[#allocation8 + $0x138] sm:$0xff]
    %v2308 = vld [vmem:[#allocation8 + $0x140] sm:$0xff]
    %v2309 = vld [vmem:[#allocation8 + $0x148] sm:$0xff]
    %v2310 = vld [vmem:[#allocation8 + $0x150] sm:$0xff]
    %v2311 = vld [vmem:[#allocation8 + $0x158] sm:$0xff]
    %v2312 = vld [vmem:[#allocation8 + $0x160] sm:$0xff]
    %v2313 = vld [vmem:[#allocation8 + $0x168] sm:$0xff]
    %v2314 = vld [vmem:[#allocation8 + $0x170] sm:$0xff]
    %v2315 = vld [vmem:[#allocation8 + $0x178] sm:$0xff]
    %v2316 = vld [vmem:[#allocation8 + $0x180] sm:$0xff]
    %v2317 = vld [vmem:[#allocation8 + $0x188] sm:$0xff]
    %v2318 = vld [vmem:[#allocation8 + $0x190] sm:$0xff]
    %v2319 = vld [vmem:[#allocation8 + $0x198] sm:$0xff]
    %v2320 = vld [vmem:[#allocation8 + $0x1a0] sm:$0xff]
    %v2321 = vld [vmem:[#allocation8 + $0x1a8] sm:$0xff]
    %v2322 = vld [vmem:[#allocation8 + $0x1b0] sm:$0xff]
    %v2323 = vld [vmem:[#allocation8 + $0x1b8] sm:$0xff]
    %v2324 = vld [vmem:[#allocation8 + $0x1c0] sm:$0xff]
    %v2325 = vld [vmem:[#allocation8 + $0x1c8] sm:$0xff]
    %v2326 = vld [vmem:[#allocation8 + $0x1d0] sm:$0xff]
    %v2327 = vld [vmem:[#allocation8 + $0x1d8] sm:$0xff]
    %v2328 = vld [vmem:[#allocation8 + $0x1e0] sm:$0xff]
    %v2329 = vld [vmem:[#allocation8 + $0x1e8] sm:$0xff]
    %v2330 = vld [vmem:[#allocation8 + $0x1f0] sm:$0xff]
    %v2331 = vld [vmem:[#allocation8 + $0x1f8] sm:$0xff]
    %v2332 = vld [vmem:[#allocation8 + $0x200] sm:$0xff]
    %v2333 = vld [vmem:[#allocation8 + $0x208] sm:$0xff]
    %v2334 = vld [vmem:[#allocation8 + $0x210] sm:$0xff]
    %v2335 = vld [vmem:[#allocation8 + $0x218] sm:$0xff]
    %v2336 = vld [vmem:[#allocation8 + $0x220] sm:$0xff]
    %v2337 = vld [vmem:[#allocation8 + $0x228] sm:$0xff]
    %v2338 = vld [vmem:[#allocation8 + $0x230] sm:$0xff]
    %v2339 = vld [vmem:[#allocation8 + $0x238] sm:$0xff]
    %v2340 = vld [vmem:[#allocation8 + $0x240] sm:$0xff]
    %v2341 = vld [vmem:[#allocation8 + $0x248] sm:$0xff]
    %v2342 = vld [vmem:[#allocation8 + $0x250] sm:$0xff]
    %v2343 = vld [vmem:[#allocation8 + $0x258] sm:$0xff]
    %v2344 = vld [vmem:[#allocation8 + $0x260] sm:$0xff]
    %v2345 = vld [vmem:[#allocation8 + $0x268] sm:$0xff]
    %v2346 = vld [vmem:[#allocation8 + $0x270] sm:$0xff]
    %v2347 = vld [vmem:[#allocation8 + $0x278] sm:$0xff]
    %v2348 = vld [vmem:[#allocation8 + $0x280] sm:$0xff]
    %v2349 = vld [vmem:[#allocation8 + $0x288] sm:$0xff]
    %v2350 = vld [vmem:[#allocation8 + $0x290] sm:$0xff]
    %v2351 = vld [vmem:[#allocation8 + $0x298] sm:$0xff]
    %v2352 = vld [vmem:[#allocation8 + $0x2a0] sm:$0xff]
    %v2353 = vld [vmem:[#allocation8 + $0x2a8] sm:$0xff]
    %v2354 = vld [vmem:[#allocation8 + $0x2b0] sm:$0xff]
    %v2355 = vld [vmem:[#allocation8 + $0x2b8] sm:$0xff]
    %v2356 = vld [vmem:[#allocation8 + $0x2c0] sm:$0xff]
    %v2357 = vld [vmem:[#allocation8 + $0x2c8] sm:$0xff]
    %v2358 = vld [vmem:[#allocation8 + $0x2d0] sm:$0xff]
    %v2359 = vld [vmem:[#allocation8 + $0x2d8] sm:$0xff]
    %v2360 = vld [vmem:[#allocation8 + $0x2e0] sm:$0xff]
    %v2361 = vld [vmem:[#allocation8 + $0x2e8] sm:$0xff]
    %v2362 = vld [vmem:[#allocation8 + $0x2f0] sm:$0xff]
    %v2363 = vld [vmem:[#allocation8 + $0x2f8] sm:$0xff]
    %v2364 = vld [vmem:[#allocation8 + $0x300] sm:$0xff]
    %v2365 = vld [vmem:[#allocation8 + $0x308] sm:$0xff]
    %v2366 = vld [vmem:[#allocation8 + $0x310] sm:$0xff]
    %v2367 = vld [vmem:[#allocation8 + $0x318] sm:$0xff]
    %v2368 = vld [vmem:[#allocation8 + $0x320] sm:$0xff]
    %v2369 = vld [vmem:[#allocation8 + $0x328] sm:$0xff]
    %v2370 = vld [vmem:[#allocation8 + $0x330] sm:$0xff]
    %v2371 = vld [vmem:[#allocation8 + $0x338] sm:$0xff]
    %v2372 = vld [vmem:[#allocation8 + $0x340] sm:$0xff]
    %v2373 = vld [vmem:[#allocation8 + $0x348] sm:$0xff]
    %v2374 = vld [vmem:[#allocation8 + $0x350] sm:$0xff]
    %v2375 = vld [vmem:[#allocation8 + $0x358] sm:$0xff]
    %v2376 = vld [vmem:[#allocation8 + $0x360] sm:$0xff]
    %v2377 = vld [vmem:[#allocation8 + $0x368] sm:$0xff]
    %v2378 = vld [vmem:[#allocation8 + $0x370] sm:$0xff]
    %v2379 = vld [vmem:[#allocation8 + $0x378] sm:$0xff]
    %v2380 = vld [vmem:[#allocation8 + $0x380] sm:$0xff]
    %v2381 = vld [vmem:[#allocation8 + $0x388] sm:$0xff]
    %v2382 = vld [vmem:[#allocation8 + $0x390] sm:$0xff]
    %v2383 = vld [vmem:[#allocation8 + $0x398] sm:$0xff]
    %v2384 = vld [vmem:[#allocation8 + $0x3a0] sm:$0xff]
    %v2385 = vld [vmem:[#allocation8 + $0x3a8] sm:$0xff]
    %v2386 = vld [vmem:[#allocation8 + $0x3b0] sm:$0xff]
    %v2387 = vld [vmem:[#allocation8 + $0x3b8] sm:$0xff]
    %v2388 = vld [vmem:[#allocation8 + $0x3c0] sm:$0xff]
    %v2389 = vld [vmem:[#allocation8 + $0x3c8] sm:$0xff]
    %v2390 = vld [vmem:[#allocation8 + $0x3d0] sm:$0xff]
    %v2391 = vld [vmem:[#allocation8 + $0x3d8] sm:$0xff]
    %v2392 = vld [vmem:[#allocation8 + $0x3e0] sm:$0xff]
    %v2393 = vld [vmem:[#allocation8 + $0x3e8] sm:$0xff]
    %v2394 = vld [vmem:[#allocation8 + $0x3f0] sm:$0xff]
    %v2395 = vld [vmem:[#allocation8 + $0x3f8] sm:$0xff]
    %v2396 = vld [vmem:[#allocation8 + $0x400] sm:$0xff]
    %v2397 = vld [vmem:[#allocation8 + $0x408] sm:$0xff]
    %v2398 = vld [vmem:[#allocation8 + $0x410] sm:$0xff]
    %v2399 = vld [vmem:[#allocation8 + $0x418] sm:$0xff]
    %v2400 = vld [vmem:[#allocation8 + $0x420] sm:$0xff]
    %v2401 = vld [vmem:[#allocation8 + $0x428] sm:$0xff]
    %v2402 = vld [vmem:[#allocation8 + $0x430] sm:$0xff]
    %v2403 = vld [vmem:[#allocation8 + $0x438] sm:$0xff]
    %v2404 = vld [vmem:[#allocation8 + $0x440] sm:$0xff]
    %v2405 = vld [vmem:[#allocation8 + $0x448] sm:$0xff]
    %v2406 = vld [vmem:[#allocation8 + $0x450] sm:$0xff]
    %v2407 = vld [vmem:[#allocation8 + $0x458] sm:$0xff]
    %v2408 = vld [vmem:[#allocation8 + $0x460] sm:$0xff]
    %v2409 = vld [vmem:[#allocation8 + $0x468] sm:$0xff]
    %v2410 = vld [vmem:[#allocation8 + $0x470] sm:$0xff]
    %v2411 = vld [vmem:[#allocation8 + $0x478] sm:$0xff]
    %v2412 = vld [vmem:[#allocation8 + $0x480] sm:$0xff]
    %v2413 = vld [vmem:[#allocation8 + $0x488] sm:$0xff]
    %v2414 = vld [vmem:[#allocation8 + $0x490] sm:$0xff]
    %v2415 = vld [vmem:[#allocation8 + $0x498] sm:$0xff]
    %v2416 = vld [vmem:[#allocation8 + $0x4a0] sm:$0xff]
    %v2417 = vld [vmem:[#allocation8 + $0x4a8] sm:$0xff]
    %v2418 = vld [vmem:[#allocation8 + $0x4b0] sm:$0xff]
    %v2419 = vld [vmem:[#allocation8 + $0x4b8] sm:$0xff]
    %v2420 = vld [vmem:[#allocation8 + $0x4c0] sm:$0xff]
    %v2421 = vld [vmem:[#allocation8 + $0x4c8] sm:$0xff]
    %v2422 = vld [vmem:[#allocation8 + $0x4d0] sm:$0xff]
    %v2423 = vld [vmem:[#allocation8 + $0x4d8] sm:$0xff]
    %v2424 = vld [vmem:[#allocation8 + $0x4e0] sm:$0xff]
    %v2425 = vld [vmem:[#allocation8 + $0x4e8] sm:$0xff]
    %v2426 = vld [vmem:[#allocation8 + $0x4f0] sm:$0xff]
    %v2427 = vld [vmem:[#allocation8 + $0x4f8] sm:$0xff]
    %v2428 = vld [vmem:[#allocation8 + $0x500] sm:$0xff]
    %v2429 = vld [vmem:[#allocation8 + $0x508] sm:$0xff]
    %v2430 = vld [vmem:[#allocation8 + $0x510] sm:$0xff]
    %v2431 = vld [vmem:[#allocation8 + $0x518] sm:$0xff]
    %v2432 = vld [vmem:[#allocation8 + $0x520] sm:$0xff]
    %v2433 = vld [vmem:[#allocation8 + $0x528] sm:$0xff]
    %v2434 = vld [vmem:[#allocation8 + $0x530] sm:$0xff]
    %v2435 = vld [vmem:[#allocation8 + $0x538] sm:$0xff]
    %v2436 = vld [vmem:[#allocation8 + $0x540] sm:$0xff]
    %v2437 = vld [vmem:[#allocation8 + $0x548] sm:$0xff]
    %v2438 = vld [vmem:[#allocation8 + $0x550] sm:$0xff]
    %v2439 = vld [vmem:[#allocation8 + $0x558] sm:$0xff]
    %v2440 = vld [vmem:[#allocation8 + $0x560] sm:$0xff]
    %v2441 = vld [vmem:[#allocation8 + $0x568] sm:$0xff]
    %v2442 = vld [vmem:[#allocation8 + $0x570] sm:$0xff]
    %v2443 = vld [vmem:[#allocation8 + $0x578] sm:$0xff]
    %v2444 = vld [vmem:[#allocation8 + $0x580] sm:$0xff]
    %v2445 = vld [vmem:[#allocation8 + $0x588] sm:$0xff]
    %v2446 = vld [vmem:[#allocation8 + $0x590] sm:$0xff]
    %v2447 = vld [vmem:[#allocation8 + $0x598] sm:$0xff]
    %v2448 = vld [vmem:[#allocation8 + $0x5a0] sm:$0xff]
    %v2449 = vld [vmem:[#allocation8 + $0x5a8] sm:$0xff]
    %v2450 = vld [vmem:[#allocation8 + $0x5b0] sm:$0xff]
    %v2451 = vld [vmem:[#allocation8 + $0x5b8] sm:$0xff]
    %v2452 = vld [vmem:[#allocation8 + $0x5c0] sm:$0xff]
    %v2453 = vld [vmem:[#allocation8 + $0x5c8] sm:$0xff]
    %v2454 = vld [vmem:[#allocation8 + $0x5d0] sm:$0xff]
    %v2455 = vld [vmem:[#allocation8 + $0x5d8] sm:$0xff]
    %v2456 = vld [vmem:[#allocation8 + $0x5e0] sm:$0xff]
    %v2457 = vld [vmem:[#allocation8 + $0x5e8] sm:$0xff]
    %v2458 = vld [vmem:[#allocation8 + $0x5f0] sm:$0xff]
    %v2459 = vld [vmem:[#allocation8 + $0x5f8] sm:$0xff]
    %v2460 = vld [vmem:[#allocation10] sm:$0xf]
    %v2462 = vlaneseq
    %v2463 = vshrl.u32 %v2462, 7
    %v2464 = vsub.s32 0, %v2463
    %v2465 = vrot.slane %v2460, %v2464
    %v2466 = vlaneseq
    %v2467 = vshrl.u32 %v2466, 7
    %v2468 = vsub.s32 1, %v2467
    %v2469 = vrot.slane %v2460, %v2468
    %v2470 = vlaneseq
    %v2471 = vshrl.u32 %v2470, 7
    %v2472 = vsub.s32 2, %v2471
    %v2473 = vrot.slane %v2460, %v2472
    %v2474 = vlaneseq
    %v2475 = vshrl.u32 %v2474, 7
    %v2476 = vsub.s32 3, %v2475
    %v2477 = vrot.slane %v2460, %v2476
    %v2674 = vunpack.c.l.b16 %v2268
    %v2675 = vunpack.c.h.b16 %v2268
    %v2676 = vunpack.c.l.b16 %v2269
    %v2677 = vunpack.c.h.b16 %v2269
    %v2678 = vunpack.c.l.b16 %v2270
    %v2679 = vunpack.c.h.b16 %v2270
    %v2680 = vunpack.c.l.b16 %v2271
    %v2681 = vunpack.c.h.b16 %v2271
    %v2682 = vunpack.c.l.b16 %v2272
    %v2683 = vunpack.c.h.b16 %v2272
    %v2684 = vunpack.c.l.b16 %v2273
    %v2685 = vunpack.c.h.b16 %v2273
    %v2686 = vunpack.c.l.b16 %v2274
    %v2687 = vunpack.c.h.b16 %v2274
    %v2688 = vunpack.c.l.b16 %v2275
    %v2689 = vunpack.c.h.b16 %v2275
    %v2690 = vunpack.c.l.b16 %v2276
    %v2691 = vunpack.c.h.b16 %v2276
    %v2692 = vunpack.c.l.b16 %v2277
    %v2693 = vunpack.c.h.b16 %v2277
    %v2694 = vunpack.c.l.b16 %v2278
    %v2695 = vunpack.c.h.b16 %v2278
    %v2696 = vunpack.c.l.b16 %v2279
    %v2697 = vunpack.c.h.b16 %v2279
    %v2698 = vunpack.c.l.b16 %v2280
    %v2699 = vunpack.c.h.b16 %v2280
    %v2700 = vunpack.c.l.b16 %v2281
    %v2701 = vunpack.c.h.b16 %v2281
    %v2702 = vunpack.c.l.b16 %v2282
    %v2703 = vunpack.c.h.b16 %v2282
    %v2704 = vunpack.c.l.b16 %v2283
    %v2705 = vunpack.c.h.b16 %v2283
    %v2706 = vunpack.c.l.b16 %v2284
    %v2707 = vunpack.c.h.b16 %v2284
    %v2708 = vunpack.c.l.b16 %v2285
    %v2709 = vunpack.c.h.b16 %v2285
    %v2710 = vunpack.c.l.b16 %v2286
    %v2711 = vunpack.c.h.b16 %v2286
    %v2712 = vunpack.c.l.b16 %v2287
    %v2713 = vunpack.c.h.b16 %v2287
    %v2714 = vunpack.c.l.b16 %v2288
    %v2715 = vunpack.c.h.b16 %v2288
    %v2716 = vunpack.c.l.b16 %v2289
    %v2717 = vunpack.c.h.b16 %v2289
    %v2718 = vunpack.c.l.b16 %v2290
    %v2719 = vunpack.c.h.b16 %v2290
    %v2720 = vunpack.c.l.b16 %v2291
    %v2721 = vunpack.c.h.b16 %v2291
    %v2722 = vunpack.c.l.b16 %v2292
    %v2723 = vunpack.c.h.b16 %v2292
    %v2724 = vunpack.c.l.b16 %v2293
    %v2725 = vunpack.c.h.b16 %v2293
    %v2726 = vunpack.c.l.b16 %v2294
    %v2727 = vunpack.c.h.b16 %v2294
    %v2728 = vunpack.c.l.b16 %v2295
    %v2729 = vunpack.c.h.b16 %v2295
    %v2730 = vunpack.c.l.b16 %v2296
    %v2731 = vunpack.c.h.b16 %v2296
    %v2732 = vunpack.c.l.b16 %v2297
    %v2733 = vunpack.c.h.b16 %v2297
    %v2734 = vunpack.c.l.b16 %v2298
    %v2735 = vunpack.c.h.b16 %v2298
    %v2736 = vunpack.c.l.b16 %v2299
    %v2737 = vunpack.c.h.b16 %v2299
    %v2738 = vunpack.c.l.b16 %v2300
    %v2739 = vunpack.c.h.b16 %v2300
    %v2740 = vunpack.c.l.b16 %v2301
    %v2741 = vunpack.c.h.b16 %v2301
    %v2742 = vunpack.c.l.b16 %v2302
    %v2743 = vunpack.c.h.b16 %v2302
    %v2744 = vunpack.c.l.b16 %v2303
    %v2745 = vunpack.c.h.b16 %v2303
    %v2746 = vunpack.c.l.b16 %v2304
    %v2747 = vunpack.c.h.b16 %v2304
    %v2748 = vunpack.c.l.b16 %v2305
    %v2749 = vunpack.c.h.b16 %v2305
    %v2750 = vunpack.c.l.b16 %v2306
    %v2751 = vunpack.c.h.b16 %v2306
    %v2752 = vunpack.c.l.b16 %v2307
    %v2753 = vunpack.c.h.b16 %v2307
    %v2754 = vunpack.c.l.b16 %v2308
    %v2755 = vunpack.c.h.b16 %v2308
    %v2756 = vunpack.c.l.b16 %v2309
    %v2757 = vunpack.c.h.b16 %v2309
    %v2758 = vunpack.c.l.b16 %v2310
    %v2759 = vunpack.c.h.b16 %v2310
    %v2760 = vunpack.c.l.b16 %v2311
    %v2761 = vunpack.c.h.b16 %v2311
    %v2762 = vunpack.c.l.b16 %v2312
    %v2763 = vunpack.c.h.b16 %v2312
    %v2764 = vunpack.c.l.b16 %v2313
    %v2765 = vunpack.c.h.b16 %v2313
    %v2766 = vunpack.c.l.b16 %v2314
    %v2767 = vunpack.c.h.b16 %v2314
    %v2768 = vunpack.c.l.b16 %v2315
    %v2769 = vunpack.c.h.b16 %v2315
    %v2770 = vunpack.c.l.b16 %v2316
    %v2771 = vunpack.c.h.b16 %v2316
    %v2772 = vunpack.c.l.b16 %v2317
    %v2773 = vunpack.c.h.b16 %v2317
    %v2774 = vunpack.c.l.b16 %v2318
    %v2775 = vunpack.c.h.b16 %v2318
    %v2776 = vunpack.c.l.b16 %v2319
    %v2777 = vunpack.c.h.b16 %v2319
    %v2778 = vunpack.c.l.b16 %v2320
    %v2779 = vunpack.c.h.b16 %v2320
    %v2780 = vunpack.c.l.b16 %v2321
    %v2781 = vunpack.c.h.b16 %v2321
    %v2782 = vunpack.c.l.b16 %v2322
    %v2783 = vunpack.c.h.b16 %v2322
    %v2784 = vunpack.c.l.b16 %v2323
    %v2785 = vunpack.c.h.b16 %v2323
    %v2786 = vunpack.c.l.b16 %v2324
    %v2787 = vunpack.c.h.b16 %v2324
    %v2788 = vunpack.c.l.b16 %v2325
    %v2789 = vunpack.c.h.b16 %v2325
    %v2790 = vunpack.c.l.b16 %v2326
    %v2791 = vunpack.c.h.b16 %v2326
    %v2792 = vunpack.c.l.b16 %v2327
    %v2793 = vunpack.c.h.b16 %v2327
    %v2794 = vunpack.c.l.b16 %v2328
    %v2795 = vunpack.c.h.b16 %v2328
    %v2796 = vunpack.c.l.b16 %v2329
    %v2797 = vunpack.c.h.b16 %v2329
    %v2798 = vunpack.c.l.b16 %v2330
    %v2799 = vunpack.c.h.b16 %v2330
    %v2800 = vunpack.c.l.b16 %v2331
    %v2801 = vunpack.c.h.b16 %v2331
    %v2802 = vunpack.c.l.b16 %v2332
    %v2803 = vunpack.c.h.b16 %v2332
    %v2804 = vunpack.c.l.b16 %v2333
    %v2805 = vunpack.c.h.b16 %v2333
    %v2806 = vunpack.c.l.b16 %v2334
    %v2807 = vunpack.c.h.b16 %v2334
    %v2808 = vunpack.c.l.b16 %v2335
    %v2809 = vunpack.c.h.b16 %v2335
    %v2810 = vunpack.c.l.b16 %v2336
    %v2811 = vunpack.c.h.b16 %v2336
    %v2812 = vunpack.c.l.b16 %v2337
    %v2813 = vunpack.c.h.b16 %v2337
    %v2814 = vunpack.c.l.b16 %v2338
    %v2815 = vunpack.c.h.b16 %v2338
    %v2816 = vunpack.c.l.b16 %v2339
    %v2817 = vunpack.c.h.b16 %v2339
    %v2818 = vunpack.c.l.b16 %v2340
    %v2819 = vunpack.c.h.b16 %v2340
    %v2820 = vunpack.c.l.b16 %v2341
    %v2821 = vunpack.c.h.b16 %v2341
    %v2822 = vunpack.c.l.b16 %v2342
    %v2823 = vunpack.c.h.b16 %v2342
    %v2824 = vunpack.c.l.b16 %v2343
    %v2825 = vunpack.c.h.b16 %v2343
    %v2826 = vunpack.c.l.b16 %v2344
    %v2827 = vunpack.c.h.b16 %v2344
    %v2828 = vunpack.c.l.b16 %v2345
    %v2829 = vunpack.c.h.b16 %v2345
    %v2830 = vunpack.c.l.b16 %v2346
    %v2831 = vunpack.c.h.b16 %v2346
    %v2832 = vunpack.c.l.b16 %v2347
    %v2833 = vunpack.c.h.b16 %v2347
    %v2834 = vunpack.c.l.b16 %v2348
    %v2835 = vunpack.c.h.b16 %v2348
    %v2836 = vunpack.c.l.b16 %v2349
    %v2837 = vunpack.c.h.b16 %v2349
    %v2838 = vunpack.c.l.b16 %v2350
    %v2839 = vunpack.c.h.b16 %v2350
    %v2840 = vunpack.c.l.b16 %v2351
    %v2841 = vunpack.c.h.b16 %v2351
    %v2842 = vunpack.c.l.b16 %v2352
    %v2843 = vunpack.c.h.b16 %v2352
    %v2844 = vunpack.c.l.b16 %v2353
    %v2845 = vunpack.c.h.b16 %v2353
    %v2846 = vunpack.c.l.b16 %v2354
    %v2847 = vunpack.c.h.b16 %v2354
    %v2848 = vunpack.c.l.b16 %v2355
    %v2849 = vunpack.c.h.b16 %v2355
    %v2850 = vunpack.c.l.b16 %v2356
    %v2851 = vunpack.c.h.b16 %v2356
    %v2852 = vunpack.c.l.b16 %v2357
    %v2853 = vunpack.c.h.b16 %v2357
    %v2854 = vunpack.c.l.b16 %v2358
    %v2855 = vunpack.c.h.b16 %v2358
    %v2856 = vunpack.c.l.b16 %v2359
    %v2857 = vunpack.c.h.b16 %v2359
    %v2858 = vunpack.c.l.b16 %v2360
    %v2859 = vunpack.c.h.b16 %v2360
    %v2860 = vunpack.c.l.b16 %v2361
    %v2861 = vunpack.c.h.b16 %v2361
    %v2862 = vunpack.c.l.b16 %v2362
    %v2863 = vunpack.c.h.b16 %v2362
    %v2864 = vunpack.c.l.b16 %v2363
    %v2865 = vunpack.c.h.b16 %v2363
    %v2866 = vunpack.c.l.b16 %v2364
    %v2867 = vunpack.c.h.b16 %v2364
    %v2868 = vunpack.c.l.b16 %v2365
    %v2869 = vunpack.c.h.b16 %v2365
    %v2870 = vunpack.c.l.b16 %v2366
    %v2871 = vunpack.c.h.b16 %v2366
    %v2872 = vunpack.c.l.b16 %v2367
    %v2873 = vunpack.c.h.b16 %v2367
    %v2874 = vunpack.c.l.b16 %v2368
    %v2875 = vunpack.c.h.b16 %v2368
    %v2876 = vunpack.c.l.b16 %v2369
    %v2877 = vunpack.c.h.b16 %v2369
    %v2878 = vunpack.c.l.b16 %v2370
    %v2879 = vunpack.c.h.b16 %v2370
    %v2880 = vunpack.c.l.b16 %v2371
    %v2881 = vunpack.c.h.b16 %v2371
    %v2882 = vunpack.c.l.b16 %v2372
    %v2883 = vunpack.c.h.b16 %v2372
    %v2884 = vunpack.c.l.b16 %v2373
    %v2885 = vunpack.c.h.b16 %v2373
    %v2886 = vunpack.c.l.b16 %v2374
    %v2887 = vunpack.c.h.b16 %v2374
    %v2888 = vunpack.c.l.b16 %v2375
    %v2889 = vunpack.c.h.b16 %v2375
    %v2890 = vunpack.c.l.b16 %v2376
    %v2891 = vunpack.c.h.b16 %v2376
    %v2892 = vunpack.c.l.b16 %v2377
    %v2893 = vunpack.c.h.b16 %v2377
    %v2894 = vunpack.c.l.b16 %v2378
    %v2895 = vunpack.c.h.b16 %v2378
    %v2896 = vunpack.c.l.b16 %v2379
    %v2897 = vunpack.c.h.b16 %v2379
    %v2898 = vunpack.c.l.b16 %v2380
    %v2899 = vunpack.c.h.b16 %v2380
    %v2900 = vunpack.c.l.b16 %v2381
    %v2901 = vunpack.c.h.b16 %v2381
    %v2902 = vunpack.c.l.b16 %v2382
    %v2903 = vunpack.c.h.b16 %v2382
    %v2904 = vunpack.c.l.b16 %v2383
    %v2905 = vunpack.c.h.b16 %v2383
    %v2906 = vunpack.c.l.b16 %v2384
    %v2907 = vunpack.c.h.b16 %v2384
    %v2908 = vunpack.c.l.b16 %v2385
    %v2909 = vunpack.c.h.b16 %v2385
    %v2910 = vunpack.c.l.b16 %v2386
    %v2911 = vunpack.c.h.b16 %v2386
    %v2912 = vunpack.c.l.b16 %v2387
    %v2913 = vunpack.c.h.b16 %v2387
    %v2914 = vunpack.c.l.b16 %v2388
    %v2915 = vunpack.c.h.b16 %v2388
    %v2916 = vunpack.c.l.b16 %v2389
    %v2917 = vunpack.c.h.b16 %v2389
    %v2918 = vunpack.c.l.b16 %v2390
    %v2919 = vunpack.c.h.b16 %v2390
    %v2920 = vunpack.c.l.b16 %v2391
    %v2921 = vunpack.c.h.b16 %v2391
    %v2922 = vunpack.c.l.b16 %v2392
    %v2923 = vunpack.c.h.b16 %v2392
    %v2924 = vunpack.c.l.b16 %v2393
    %v2925 = vunpack.c.h.b16 %v2393
    %v2926 = vunpack.c.l.b16 %v2394
    %v2927 = vunpack.c.h.b16 %v2394
    %v2928 = vunpack.c.l.b16 %v2395
    %v2929 = vunpack.c.h.b16 %v2395
    %v2930 = vunpack.c.l.b16 %v2396
    %v2931 = vunpack.c.h.b16 %v2396
    %v2932 = vunpack.c.l.b16 %v2397
    %v2933 = vunpack.c.h.b16 %v2397
    %v2934 = vunpack.c.l.b16 %v2398
    %v2935 = vunpack.c.h.b16 %v2398
    %v2936 = vunpack.c.l.b16 %v2399
    %v2937 = vunpack.c.h.b16 %v2399
    %v2938 = vunpack.c.l.b16 %v2400
    %v2939 = vunpack.c.h.b16 %v2400
    %v2940 = vunpack.c.l.b16 %v2401
    %v2941 = vunpack.c.h.b16 %v2401
    %v2942 = vunpack.c.l.b16 %v2402
    %v2943 = vunpack.c.h.b16 %v2402
    %v2944 = vunpack.c.l.b16 %v2403
    %v2945 = vunpack.c.h.b16 %v2403
    %v2946 = vunpack.c.l.b16 %v2404
    %v2947 = vunpack.c.h.b16 %v2404
    %v2948 = vunpack.c.l.b16 %v2405
    %v2949 = vunpack.c.h.b16 %v2405
    %v2950 = vunpack.c.l.b16 %v2406
    %v2951 = vunpack.c.h.b16 %v2406
    %v2952 = vunpack.c.l.b16 %v2407
    %v2953 = vunpack.c.h.b16 %v2407
    %v2954 = vunpack.c.l.b16 %v2408
    %v2955 = vunpack.c.h.b16 %v2408
    %v2956 = vunpack.c.l.b16 %v2409
    %v2957 = vunpack.c.h.b16 %v2409
    %v2958 = vunpack.c.l.b16 %v2410
    %v2959 = vunpack.c.h.b16 %v2410
    %v2960 = vunpack.c.l.b16 %v2411
    %v2961 = vunpack.c.h.b16 %v2411
    %v2962 = vunpack.c.l.b16 %v2412
    %v2963 = vunpack.c.h.b16 %v2412
    %v2964 = vunpack.c.l.b16 %v2413
    %v2965 = vunpack.c.h.b16 %v2413
    %v2966 = vunpack.c.l.b16 %v2414
    %v2967 = vunpack.c.h.b16 %v2414
    %v2968 = vunpack.c.l.b16 %v2415
    %v2969 = vunpack.c.h.b16 %v2415
    %v2970 = vunpack.c.l.b16 %v2416
    %v2971 = vunpack.c.h.b16 %v2416
    %v2972 = vunpack.c.l.b16 %v2417
    %v2973 = vunpack.c.h.b16 %v2417
    %v2974 = vunpack.c.l.b16 %v2418
    %v2975 = vunpack.c.h.b16 %v2418
    %v2976 = vunpack.c.l.b16 %v2419
    %v2977 = vunpack.c.h.b16 %v2419
    %v2978 = vunpack.c.l.b16 %v2420
    %v2979 = vunpack.c.h.b16 %v2420
    %v2980 = vunpack.c.l.b16 %v2421
    %v2981 = vunpack.c.h.b16 %v2421
    %v2982 = vunpack.c.l.b16 %v2422
    %v2983 = vunpack.c.h.b16 %v2422
    %v2984 = vunpack.c.l.b16 %v2423
    %v2985 = vunpack.c.h.b16 %v2423
    %v2986 = vunpack.c.l.b16 %v2424
    %v2987 = vunpack.c.h.b16 %v2424
    %v2988 = vunpack.c.l.b16 %v2425
    %v2989 = vunpack.c.h.b16 %v2425
    %v2990 = vunpack.c.l.b16 %v2426
    %v2991 = vunpack.c.h.b16 %v2426
    %v2992 = vunpack.c.l.b16 %v2427
    %v2993 = vunpack.c.h.b16 %v2427
    %v2994 = vunpack.c.l.b16 %v2428
    %v2995 = vunpack.c.h.b16 %v2428
    %v2996 = vunpack.c.l.b16 %v2429
    %v2997 = vunpack.c.h.b16 %v2429
    %v2998 = vunpack.c.l.b16 %v2430
    %v2999 = vunpack.c.h.b16 %v2430
    %v3000 = vunpack.c.l.b16 %v2431
    %v3001 = vunpack.c.h.b16 %v2431
    %v3002 = vunpack.c.l.b16 %v2432
    %v3003 = vunpack.c.h.b16 %v2432
    %v3004 = vunpack.c.l.b16 %v2433
    %v3005 = vunpack.c.h.b16 %v2433
    %v3006 = vunpack.c.l.b16 %v2434
    %v3007 = vunpack.c.h.b16 %v2434
    %v3008 = vunpack.c.l.b16 %v2435
    %v3009 = vunpack.c.h.b16 %v2435
    %v3010 = vunpack.c.l.b16 %v2436
    %v3011 = vunpack.c.h.b16 %v2436
    %v3012 = vunpack.c.l.b16 %v2437
    %v3013 = vunpack.c.h.b16 %v2437
    %v3014 = vunpack.c.l.b16 %v2438
    %v3015 = vunpack.c.h.b16 %v2438
    %v3016 = vunpack.c.l.b16 %v2439
    %v3017 = vunpack.c.h.b16 %v2439
    %v3018 = vunpack.c.l.b16 %v2440
    %v3019 = vunpack.c.h.b16 %v2440
    %v3020 = vunpack.c.l.b16 %v2441
    %v3021 = vunpack.c.h.b16 %v2441
    %v3022 = vunpack.c.l.b16 %v2442
    %v3023 = vunpack.c.h.b16 %v2442
    %v3024 = vunpack.c.l.b16 %v2443
    %v3025 = vunpack.c.h.b16 %v2443
    %v3026 = vunpack.c.l.b16 %v2444
    %v3027 = vunpack.c.h.b16 %v2444
    %v3028 = vunpack.c.l.b16 %v2445
    %v3029 = vunpack.c.h.b16 %v2445
    %v3030 = vunpack.c.l.b16 %v2446
    %v3031 = vunpack.c.h.b16 %v2446
    %v3032 = vunpack.c.l.b16 %v2447
    %v3033 = vunpack.c.h.b16 %v2447
    %v3034 = vunpack.c.l.b16 %v2448
    %v3035 = vunpack.c.h.b16 %v2448
    %v3036 = vunpack.c.l.b16 %v2449
    %v3037 = vunpack.c.h.b16 %v2449
    %v3038 = vunpack.c.l.b16 %v2450
    %v3039 = vunpack.c.h.b16 %v2450
    %v3040 = vunpack.c.l.b16 %v2451
    %v3041 = vunpack.c.h.b16 %v2451
    %v3042 = vunpack.c.l.b16 %v2452
    %v3043 = vunpack.c.h.b16 %v2452
    %v3044 = vunpack.c.l.b16 %v2453
    %v3045 = vunpack.c.h.b16 %v2453
    %v3046 = vunpack.c.l.b16 %v2454
    %v3047 = vunpack.c.h.b16 %v2454
    %v3048 = vunpack.c.l.b16 %v2455
    %v3049 = vunpack.c.h.b16 %v2455
    %v3050 = vunpack.c.l.b16 %v2456
    %v3051 = vunpack.c.h.b16 %v2456
    %v3052 = vunpack.c.l.b16 %v2457
    %v3053 = vunpack.c.h.b16 %v2457
    %v3054 = vunpack.c.l.b16 %v2458
    %v3055 = vunpack.c.h.b16 %v2458
    %v3056 = vunpack.c.l.b16 %v2459
    %v3057 = vunpack.c.h.b16 %v2459
    %v3058 = vpack.c.b16 %v2678, %v2674
    %v3059 = vpack.c.b16 %v2679, %v2675
    %v3060 = vpack.c.b16 %v2680, %v2676
    %v3061 = vpack.c.b16 %v2681, %v2677
    %v3062 = vpack.c.b16 %v2686, %v2682
    %v3063 = vpack.c.b16 %v2687, %v2683
    %v3064 = vpack.c.b16 %v2688, %v2684
    %v3065 = vpack.c.b16 %v2689, %v2685
    %v3066 = vpack.c.b16 %v2694, %v2690
    %v3067 = vpack.c.b16 %v2695, %v2691
    %v3068 = vpack.c.b16 %v2696, %v2692
    %v3069 = vpack.c.b16 %v2697, %v2693
    %v3070 = vpack.c.b16 %v2702, %v2698
    %v3071 = vpack.c.b16 %v2703, %v2699
    %v3072 = vpack.c.b16 %v2704, %v2700
    %v3073 = vpack.c.b16 %v2705, %v2701
    %v3074 = vpack.c.b16 %v2710, %v2706
    %v3075 = vpack.c.b16 %v2711, %v2707
    %v3076 = vpack.c.b16 %v2712, %v2708
    %v3077 = vpack.c.b16 %v2713, %v2709
    %v3078 = vpack.c.b16 %v2718, %v2714
    %v3079 = vpack.c.b16 %v2719, %v2715
    %v3080 = vpack.c.b16 %v2720, %v2716
    %v3081 = vpack.c.b16 %v2721, %v2717
    %v3082 = vpack.c.b16 %v2726, %v2722
    %v3083 = vpack.c.b16 %v2727, %v2723
    %v3084 = vpack.c.b16 %v2728, %v2724
    %v3085 = vpack.c.b16 %v2729, %v2725
    %v3086 = vpack.c.b16 %v2734, %v2730
    %v3087 = vpack.c.b16 %v2735, %v2731
    %v3088 = vpack.c.b16 %v2736, %v2732
    %v3089 = vpack.c.b16 %v2737, %v2733
    %v3090 = vpack.c.b16 %v2742, %v2738
    %v3091 = vpack.c.b16 %v2743, %v2739
    %v3092 = vpack.c.b16 %v2744, %v2740
    %v3093 = vpack.c.b16 %v2745, %v2741
    %v3094 = vpack.c.b16 %v2750, %v2746
    %v3095 = vpack.c.b16 %v2751, %v2747
    %v3096 = vpack.c.b16 %v2752, %v2748
    %v3097 = vpack.c.b16 %v2753, %v2749
    %v3098 = vpack.c.b16 %v2758, %v2754
    %v3099 = vpack.c.b16 %v2759, %v2755
    %v3100 = vpack.c.b16 %v2760, %v2756
    %v3101 = vpack.c.b16 %v2761, %v2757
    %v3102 = vpack.c.b16 %v2766, %v2762
    %v3103 = vpack.c.b16 %v2767, %v2763
    %v3104 = vpack.c.b16 %v2768, %v2764
    %v3105 = vpack.c.b16 %v2769, %v2765
    %v3106 = vpack.c.b16 %v2774, %v2770
    %v3107 = vpack.c.b16 %v2775, %v2771
    %v3108 = vpack.c.b16 %v2776, %v2772
    %v3109 = vpack.c.b16 %v2777, %v2773
    %v3110 = vpack.c.b16 %v2782, %v2778
    %v3111 = vpack.c.b16 %v2783, %v2779
    %v3112 = vpack.c.b16 %v2784, %v2780
    %v3113 = vpack.c.b16 %v2785, %v2781
    %v3114 = vpack.c.b16 %v2790, %v2786
    %v3115 = vpack.c.b16 %v2791, %v2787
    %v3116 = vpack.c.b16 %v2792, %v2788
    %v3117 = vpack.c.b16 %v2793, %v2789
    %v3118 = vpack.c.b16 %v2798, %v2794
    %v3119 = vpack.c.b16 %v2799, %v2795
    %v3120 = vpack.c.b16 %v2800, %v2796
    %v3121 = vpack.c.b16 %v2801, %v2797
    %v3122 = vpack.c.b16 %v2806, %v2802
    %v3123 = vpack.c.b16 %v2807, %v2803
    %v3124 = vpack.c.b16 %v2808, %v2804
    %v3125 = vpack.c.b16 %v2809, %v2805
    %v3126 = vpack.c.b16 %v2814, %v2810
    %v3127 = vpack.c.b16 %v2815, %v2811
    %v3128 = vpack.c.b16 %v2816, %v2812
    %v3129 = vpack.c.b16 %v2817, %v2813
    %v3130 = vpack.c.b16 %v2822, %v2818
    %v3131 = vpack.c.b16 %v2823, %v2819
    %v3132 = vpack.c.b16 %v2824, %v2820
    %v3133 = vpack.c.b16 %v2825, %v2821
    %v3134 = vpack.c.b16 %v2830, %v2826
    %v3135 = vpack.c.b16 %v2831, %v2827
    %v3136 = vpack.c.b16 %v2832, %v2828
    %v3137 = vpack.c.b16 %v2833, %v2829
    %v3138 = vpack.c.b16 %v2838, %v2834
    %v3139 = vpack.c.b16 %v2839, %v2835
    %v3140 = vpack.c.b16 %v2840, %v2836
    %v3141 = vpack.c.b16 %v2841, %v2837
    %v3142 = vpack.c.b16 %v2846, %v2842
    %v3143 = vpack.c.b16 %v2847, %v2843
    %v3144 = vpack.c.b16 %v2848, %v2844
    %v3145 = vpack.c.b16 %v2849, %v2845
    %v3146 = vpack.c.b16 %v2854, %v2850
    %v3147 = vpack.c.b16 %v2855, %v2851
    %v3148 = vpack.c.b16 %v2856, %v2852
    %v3149 = vpack.c.b16 %v2857, %v2853
    %v3150 = vpack.c.b16 %v2862, %v2858
    %v3151 = vpack.c.b16 %v2863, %v2859
    %v3152 = vpack.c.b16 %v2864, %v2860
    %v3153 = vpack.c.b16 %v2865, %v2861
    %v3154 = vpack.c.b16 %v2870, %v2866
    %v3155 = vpack.c.b16 %v2871, %v2867
    %v3156 = vpack.c.b16 %v2872, %v2868
    %v3157 = vpack.c.b16 %v2873, %v2869
    %v3158 = vpack.c.b16 %v2878, %v2874
    %v3159 = vpack.c.b16 %v2879, %v2875
    %v3160 = vpack.c.b16 %v2880, %v2876
    %v3161 = vpack.c.b16 %v2881, %v2877
    %v3162 = vpack.c.b16 %v2886, %v2882
    %v3163 = vpack.c.b16 %v2887, %v2883
    %v3164 = vpack.c.b16 %v2888, %v2884
    %v3165 = vpack.c.b16 %v2889, %v2885
    %v3166 = vpack.c.b16 %v2894, %v2890
    %v3167 = vpack.c.b16 %v2895, %v2891
    %v3168 = vpack.c.b16 %v2896, %v2892
    %v3169 = vpack.c.b16 %v2897, %v2893
    %v3170 = vpack.c.b16 %v2902, %v2898
    %v3171 = vpack.c.b16 %v2903, %v2899
    %v3172 = vpack.c.b16 %v2904, %v2900
    %v3173 = vpack.c.b16 %v2905, %v2901
    %v3174 = vpack.c.b16 %v2910, %v2906
    %v3175 = vpack.c.b16 %v2911, %v2907
    %v3176 = vpack.c.b16 %v2912, %v2908
    %v3177 = vpack.c.b16 %v2913, %v2909
    %v3178 = vpack.c.b16 %v2918, %v2914
    %v3179 = vpack.c.b16 %v2919, %v2915
    %v3180 = vpack.c.b16 %v2920, %v2916
    %v3181 = vpack.c.b16 %v2921, %v2917
    %v3182 = vpack.c.b16 %v2926, %v2922
    %v3183 = vpack.c.b16 %v2927, %v2923
    %v3184 = vpack.c.b16 %v2928, %v2924
    %v3185 = vpack.c.b16 %v2929, %v2925
    %v3186 = vpack.c.b16 %v2934, %v2930
    %v3187 = vpack.c.b16 %v2935, %v2931
    %v3188 = vpack.c.b16 %v2936, %v2932
    %v3189 = vpack.c.b16 %v2937, %v2933
    %v3190 = vpack.c.b16 %v2942, %v2938
    %v3191 = vpack.c.b16 %v2943, %v2939
    %v3192 = vpack.c.b16 %v2944, %v2940
    %v3193 = vpack.c.b16 %v2945, %v2941
    %v3194 = vpack.c.b16 %v2950, %v2946
    %v3195 = vpack.c.b16 %v2951, %v2947
    %v3196 = vpack.c.b16 %v2952, %v2948
    %v3197 = vpack.c.b16 %v2953, %v2949
    %v3198 = vpack.c.b16 %v2958, %v2954
    %v3199 = vpack.c.b16 %v2959, %v2955
    %v3200 = vpack.c.b16 %v2960, %v2956
    %v3201 = vpack.c.b16 %v2961, %v2957
    %v3202 = vpack.c.b16 %v2966, %v2962
    %v3203 = vpack.c.b16 %v2967, %v2963
    %v3204 = vpack.c.b16 %v2968, %v2964
    %v3205 = vpack.c.b16 %v2969, %v2965
    %v3206 = vpack.c.b16 %v2974, %v2970
    %v3207 = vpack.c.b16 %v2975, %v2971
    %v3208 = vpack.c.b16 %v2976, %v2972
    %v3209 = vpack.c.b16 %v2977, %v2973
    %v3210 = vpack.c.b16 %v2982, %v2978
    %v3211 = vpack.c.b16 %v2983, %v2979
    %v3212 = vpack.c.b16 %v2984, %v2980
    %v3213 = vpack.c.b16 %v2985, %v2981
    %v3214 = vpack.c.b16 %v2990, %v2986
    %v3215 = vpack.c.b16 %v2991, %v2987
    %v3216 = vpack.c.b16 %v2992, %v2988
    %v3217 = vpack.c.b16 %v2993, %v2989
    %v3218 = vpack.c.b16 %v2998, %v2994
    %v3219 = vpack.c.b16 %v2999, %v2995
    %v3220 = vpack.c.b16 %v3000, %v2996
    %v3221 = vpack.c.b16 %v3001, %v2997
    %v3222 = vpack.c.b16 %v3006, %v3002
    %v3223 = vpack.c.b16 %v3007, %v3003
    %v3224 = vpack.c.b16 %v3008, %v3004
    %v3225 = vpack.c.b16 %v3009, %v3005
    %v3226 = vpack.c.b16 %v3014, %v3010
    %v3227 = vpack.c.b16 %v3015, %v3011
    %v3228 = vpack.c.b16 %v3016, %v3012
    %v3229 = vpack.c.b16 %v3017, %v3013
    %v3230 = vpack.c.b16 %v3022, %v3018
    %v3231 = vpack.c.b16 %v3023, %v3019
    %v3232 = vpack.c.b16 %v3024, %v3020
    %v3233 = vpack.c.b16 %v3025, %v3021
    %v3234 = vpack.c.b16 %v3030, %v3026
    %v3235 = vpack.c.b16 %v3031, %v3027
    %v3236 = vpack.c.b16 %v3032, %v3028
    %v3237 = vpack.c.b16 %v3033, %v3029
    %v3238 = vpack.c.b16 %v3038, %v3034
    %v3239 = vpack.c.b16 %v3039, %v3035
    %v3240 = vpack.c.b16 %v3040, %v3036
    %v3241 = vpack.c.b16 %v3041, %v3037
    %v3242 = vpack.c.b16 %v3046, %v3042
    %v3243 = vpack.c.b16 %v3047, %v3043
    %v3244 = vpack.c.b16 %v3048, %v3044
    %v3245 = vpack.c.b16 %v3049, %v3045
    %v3246 = vpack.c.b16 %v3054, %v3050
    %v3247 = vpack.c.b16 %v3055, %v3051
    %v3248 = vpack.c.b16 %v3056, %v3052
    %v3249 = vpack.c.b16 %v3057, %v3053
    %3442 = vmatprep.subr.bf16.mxu0 %v3059
    %3443 = vmatpush1.bf16.msra.mxu0 %v3058
    %3444 = vmatprep.subr.bf16.mxu0 %v3063
    %3445 = vmatpush1.bf16.msra.mxu0 %v3062
    %3446 = vmatprep.subr.bf16.mxu0 %v3067
    %3447 = vmatpush1.bf16.msra.mxu0 %v3066
    %3448 = vmatprep.subr.bf16.mxu0 %v3071
    %3449 = vmatpush1.bf16.msra.mxu0 %v3070
    %3450 = vmatprep.subr.bf16.mxu0 %v3075
    %3451 = vmatpush1.bf16.msra.mxu0 %v3074
    %3452 = vmatprep.subr.bf16.mxu0 %v3079
    %3453 = vmatpush1.bf16.msra.mxu0 %v3078
    %3454 = vmatprep.subr.bf16.mxu0 %v3083
    %3455 = vmatpush1.bf16.msra.mxu0 %v3082
    %3456 = vmatprep.subr.bf16.mxu0 %v3087
    %3457 = vmatpush1.bf16.msra.mxu0 %v3086
    %3458 = vmatprep.subr.bf16.mxu0 %v3091
    %3459 = vmatpush1.bf16.msra.mxu0 %v3090
    %3460 = vmatprep.subr.bf16.mxu0 %v3095
    %3461 = vmatpush1.bf16.msra.mxu0 %v3094
    %3462 = vmatprep.subr.bf16.mxu0 %v3099
    %3463 = vmatpush1.bf16.msra.mxu0 %v3098
    %3464 = vmatprep.subr.bf16.mxu0 %v3103
    %3465 = vmatpush1.bf16.msra.mxu0 %v3102
    %3466 = vmatprep.subr.bf16.mxu0 %v3107
    %3467 = vmatpush1.bf16.msra.mxu0 %v3106
    %3468 = vmatprep.subr.bf16.mxu0 %v3111
    %3469 = vmatpush1.bf16.msra.mxu0 %v3110
    %3470 = vmatprep.subr.bf16.mxu0 %v3115
    %3471 = vmatpush1.bf16.msra.mxu0 %v3114
    %3472 = vmatprep.subr.bf16.mxu0 %v3119
    %3473 = vmatpush1.bf16.msra.mxu0 %v3118
    %3474 = vmatprep.mubr.bf16.mxu0 %v2263
    %3475 = vmatmul.mubr.bf16.gmra.mrb[0].mxu0 %v2262
    %v3476 = vpop.f32.mrb[0].mxu0
    %v3477 = vadd.f32 %v2465, %v3476
    %v3478 = vpop.f32.mrb[0].mxu0
    %v3479 = vadd.f32 %v2469, %v3478
    %v3480 = vpop.f32.mrb[0].mxu0
    %v3481 = vpop.f32.mrb[0].mxu0
    %3482 = vdwg.mxu0
    %3483 = vmatprep.subr.bf16.mxu0 %v3123
    %3484 = vmatpush1.bf16.msra.mxu0 %v3122
    %3485 = vmatprep.subr.bf16.mxu0 %v3127
    %3486 = vmatpush1.bf16.msra.mxu0 %v3126
    %3487 = vmatprep.subr.bf16.mxu0 %v3131
    %3488 = vmatpush1.bf16.msra.mxu0 %v3130
    %3489 = vmatprep.subr.bf16.mxu0 %v3135
    %3490 = vmatpush1.bf16.msra.mxu0 %v3134
    %3491 = vmatprep.subr.bf16.mxu0 %v3139
    %3492 = vmatpush1.bf16.msra.mxu0 %v3138
    %3493 = vmatprep.subr.bf16.mxu0 %v3143
    %3494 = vmatpush1.bf16.msra.mxu0 %v3142
    %3495 = vmatprep.subr.bf16.mxu0 %v3147
    %3496 = vmatpush1.bf16.msra.mxu0 %v3146
    %3497 = vmatprep.subr.bf16.mxu0 %v3151
    %3498 = vmatpush1.bf16.msra.mxu0 %v3150
    %3499 = vmatprep.subr.bf16.mxu0 %v3155
    %3500 = vmatpush1.bf16.msra.mxu0 %v3154
    %3501 = vmatprep.subr.bf16.mxu0 %v3159
    %3502 = vmatpush1.bf16.msra.mxu0 %v3158
    %3503 = vmatprep.subr.bf16.mxu0 %v3163
    %3504 = vmatpush1.bf16.msra.mxu0 %v3162
    %3505 = vmatprep.subr.bf16.mxu0 %v3167
    %3506 = vmatpush1.bf16.msra.mxu0 %v3166
    %3507 = vmatprep.subr.bf16.mxu0 %v3171
    %3508 = vmatpush1.bf16.msra.mxu0 %v3170
    %3509 = vmatprep.subr.bf16.mxu0 %v3175
    %3510 = vmatpush1.bf16.msra.mxu0 %v3174
    %3511 = vmatprep.subr.bf16.mxu0 %v3179
    %3512 = vmatpush1.bf16.msra.mxu0 %v3178
    %3513 = vmatprep.subr.bf16.mxu0 %v3183
    %3514 = vmatpush1.bf16.msra.mxu0 %v3182
    %3515 = vmatprep.mubr.bf16.mxu0 %v2265
    %3516 = vmatmul.mubr.bf16.gmra.mrb[0].mxu0 %v2264
    %v3517 = vpop.f32.mrb[0].mxu0
    %v3518 = vadd.f32 %v3477, %v3517
    %v3519 = vpop.f32.mrb[0].mxu0
    %v3520 = vadd.f32 %v3479, %v3519
    %v3521 = vpop.f32.mrb[0].mxu0
    %v3522 = vpop.f32.mrb[0].mxu0
    %3523 = vdwg.mxu0
    %3524 = vmatprep.subr.bf16.mxu0 %v3187
    %3525 = vmatpush1.bf16.msra.mxu0 %v3186
    %3526 = vmatprep.subr.bf16.mxu0 %v3191
    %3527 = vmatpush1.bf16.msra.mxu0 %v3190
    %3528 = vmatprep.subr.bf16.mxu0 %v3195
    %3529 = vmatpush1.bf16.msra.mxu0 %v3194
    %3530 = vmatprep.subr.bf16.mxu0 %v3199
    %3531 = vmatpush1.bf16.msra.mxu0 %v3198
    %3532 = vmatprep.subr.bf16.mxu0 %v3203
    %3533 = vmatpush1.bf16.msra.mxu0 %v3202
    %3534 = vmatprep.subr.bf16.mxu0 %v3207
    %3535 = vmatpush1.bf16.msra.mxu0 %v3206
    %3536 = vmatprep.subr.bf16.mxu0 %v3211
    %3537 = vmatpush1.bf16.msra.mxu0 %v3210
    %3538 = vmatprep.subr.bf16.mxu0 %v3215
    %3539 = vmatpush1.bf16.msra.mxu0 %v3214
    %3540 = vmatprep.subr.bf16.mxu0 %v3219
    %3541 = vmatpush1.bf16.msra.mxu0 %v3218
    %3542 = vmatprep.subr.bf16.mxu0 %v3223
    %3543 = vmatpush1.bf16.msra.mxu0 %v3222
    %3544 = vmatprep.subr.bf16.mxu0 %v3227
    %3545 = vmatpush1.bf16.msra.mxu0 %v3226
    %3546 = vmatprep.subr.bf16.mxu0 %v3231
    %3547 = vmatpush1.bf16.msra.mxu0 %v3230
    %3548 = vmatprep.subr.bf16.mxu0 %v3235
    %3549 = vmatpush1.bf16.msra.mxu0 %v3234
    %3550 = vmatprep.subr.bf16.mxu0 %v3239
    %3551 = vmatpush1.bf16.msra.mxu0 %v3238
    %3552 = vmatprep.subr.bf16.mxu0 %v3243
    %3553 = vmatpush1.bf16.msra.mxu0 %v3242
    %3554 = vmatprep.subr.bf16.mxu0 %v3247
    %3555 = vmatpush1.bf16.msra.mxu0 %v3246
    %3556 = vmatprep.mubr.bf16.mxu0 %v2267
    %3557 = vmatmul.mubr.bf16.gmra.mrb[0].mxu0 %v2266
    %v3558 = vpop.f32.mrb[0].mxu0
    %v3559 = vadd.f32 %v3518, %v3558
    %v3560 = vpop.f32.mrb[0].mxu0
    %v3561 = vadd.f32 %v3520, %v3560
    %v3562 = vpop.f32.mrb[0].mxu0
    %v3563 = vpop.f32.mrb[0].mxu0
    %3564 = vdwg.mxu0
    %3565 = vmatprep.subr.bf16.mxu0 %v3061
    %3566 = vmatpush1.bf16.msra.mxu0 %v3060
    %3567 = vmatprep.subr.bf16.mxu0 %v3065
    %3568 = vmatpush1.bf16.msra.mxu0 %v3064
    %3569 = vmatprep.subr.bf16.mxu0 %v3069
    %3570 = vmatpush1.bf16.msra.mxu0 %v3068
    %3571 = vmatprep.subr.bf16.mxu0 %v3073
    %3572 = vmatpush1.bf16.msra.mxu0 %v3072
    %3573 = vmatprep.subr.bf16.mxu0 %v3077
    %3574 = vmatpush1.bf16.msra.mxu0 %v3076
    %3575 = vmatprep.subr.bf16.mxu0 %v3081
    %3576 = vmatpush1.bf16.msra.mxu0 %v3080
    %3577 = vmatprep.subr.bf16.mxu0 %v3085
    %3578 = vmatpush1.bf16.msra.mxu0 %v3084
    %3579 = vmatprep.subr.bf16.mxu0 %v3089
    %3580 = vmatpush1.bf16.msra.mxu0 %v3088
    %3581 = vmatprep.subr.bf16.mxu0 %v3093
    %3582 = vmatpush1.bf16.msra.mxu0 %v3092
    %3583 = vmatprep.subr.bf16.mxu0 %v3097
    %3584 = vmatpush1.bf16.msra.mxu0 %v3096
    %3585 = vmatprep.subr.bf16.mxu0 %v3101
    %3586 = vmatpush1.bf16.msra.mxu0 %v3100
    %3587 = vmatprep.subr.bf16.mxu0 %v3105
    %3588 = vmatpush1.bf16.msra.mxu0 %v3104
    %3589 = vmatprep.subr.bf16.mxu0 %v3109
    %3590 = vmatpush1.bf16.msra.mxu0 %v3108
    %3591 = vmatprep.subr.bf16.mxu0 %v3113
    %3592 = vmatpush1.bf16.msra.mxu0 %v3112
    %3593 = vmatprep.subr.bf16.mxu0 %v3117
    %3594 = vmatpush1.bf16.msra.mxu0 %v3116
    %3595 = vmatprep.subr.bf16.mxu0 %v3121
    %3596 = vmatpush1.bf16.msra.mxu0 %v3120
    %3597 = vmatprep.mubr.bf16.mxu0 %v2263
    %3598 = vmatmul.mubr.bf16.gmra.mrb[0].mxu0 %v2262
    %v3599 = vpop.f32.mrb[0].mxu0
    %v3600 = vadd.f32 %v2473, %v3599
    %v3601 = vpop.f32.mrb[0].mxu0
    %v3602 = vadd.f32 %v2477, %v3601
    %v3603 = vpop.f32.mrb[0].mxu0
    %v3604 = vpop.f32.mrb[0].mxu0
    %3605 = vdwg.mxu0
    %3606 = vmatprep.subr.bf16.mxu0 %v3125
    %3607 = vmatpush1.bf16.msra.mxu0 %v3124
    %3608 = vmatprep.subr.bf16.mxu0 %v3129
    %3609 = vmatpush1.bf16.msra.mxu0 %v3128
    %3610 = vmatprep.subr.bf16.mxu0 %v3133
    %3611 = vmatpush1.bf16.msra.mxu0 %v3132
    %3612 = vmatprep.subr.bf16.mxu0 %v3137
    %3613 = vmatpush1.bf16.msra.mxu0 %v3136
    %3614 = vmatprep.subr.bf16.mxu0 %v3141
    %3615 = vmatpush1.bf16.msra.mxu0 %v3140
    %3616 = vmatprep.subr.bf16.mxu0 %v3145
    %3617 = vmatpush1.bf16.msra.mxu0 %v3144
    %3618 = vmatprep.subr.bf16.mxu0 %v3149
    %3619 = vmatpush1.bf16.msra.mxu0 %v3148
    %3620 = vmatprep.subr.bf16.mxu0 %v3153
    %3621 = vmatpush1.bf16.msra.mxu0 %v3152
    %3622 = vmatprep.subr.bf16.mxu0 %v3157
    %3623 = vmatpush1.bf16.msra.mxu0 %v3156
    %3624 = vmatprep.subr.bf16.mxu0 %v3161
    %3625 = vmatpush1.bf16.msra.mxu0 %v3160
    %3626 = vmatprep.subr.bf16.mxu0 %v3165
    %3627 = vmatpush1.bf16.msra.mxu0 %v3164
    %3628 = vmatprep.subr.bf16.mxu0 %v3169
    %3629 = vmatpush1.bf16.msra.mxu0 %v3168
    %3630 = vmatprep.subr.bf16.mxu0 %v3173
    %3631 = vmatpush1.bf16.msra.mxu0 %v3172
    %3632 = vmatprep.subr.bf16.mxu0 %v3177
    %3633 = vmatpush1.bf16.msra.mxu0 %v3176
    %3634 = vmatprep.subr.bf16.mxu0 %v3181
    %3635 = vmatpush1.bf16.msra.mxu0 %v3180
    %3636 = vmatprep.subr.bf16.mxu0 %v3185
    %3637 = vmatpush1.bf16.msra.mxu0 %v3184
    %3638 = vmatprep.mubr.bf16.mxu0 %v2265
    %3639 = vmatmul.mubr.bf16.gmra.mrb[0].mxu0 %v2264
    %v3640 = vpop.f32.mrb[0].mxu0
    %v3641 = vadd.f32 %v3600, %v3640
    %v3642 = vpop.f32.mrb[0].mxu0
    %v3643 = vadd.f32 %v3602, %v3642
    %v3644 = vpop.f32.mrb[0].mxu0
    %v3645 = vpop.f32.mrb[0].mxu0
    %3646 = vdwg.mxu0
    %3647 = vmatprep.subr.bf16.mxu0 %v3189
    %3648 = vmatpush1.bf16.msra.mxu0 %v3188
    %3649 = vmatprep.subr.bf16.mxu0 %v3193
    %3650 = vmatpush1.bf16.msra.mxu0 %v3192
    %3651 = vmatprep.subr.bf16.mxu0 %v3197
    %3652 = vmatpush1.bf16.msra.mxu0 %v3196
    %3653 = vmatprep.subr.bf16.mxu0 %v3201
    %3654 = vmatpush1.bf16.msra.mxu0 %v3200
    %3655 = vmatprep.subr.bf16.mxu0 %v3205
    %3656 = vmatpush1.bf16.msra.mxu0 %v3204
    %3657 = vmatprep.subr.bf16.mxu0 %v3209
    %3658 = vmatpush1.bf16.msra.mxu0 %v3208
    %3659 = vmatprep.subr.bf16.mxu0 %v3213
    %3660 = vmatpush1.bf16.msra.mxu0 %v3212
    %3661 = vmatprep.subr.bf16.mxu0 %v3217
    %3662 = vmatpush1.bf16.msra.mxu0 %v3216
    %3663 = vmatprep.subr.bf16.mxu0 %v3221
    %3664 = vmatpush1.bf16.msra.mxu0 %v3220
    %3665 = vmatprep.subr.bf16.mxu0 %v3225
    %3666 = vmatpush1.bf16.msra.mxu0 %v3224
    %3667 = vmatprep.subr.bf16.mxu0 %v3229
    %3668 = vmatpush1.bf16.msra.mxu0 %v3228
    %3669 = vmatprep.subr.bf16.mxu0 %v3233
    %3670 = vmatpush1.bf16.msra.mxu0 %v3232
    %3671 = vmatprep.subr.bf16.mxu0 %v3237
    %3672 = vmatpush1.bf16.msra.mxu0 %v3236
    %3673 = vmatprep.subr.bf16.mxu0 %v3241
    %3674 = vmatpush1.bf16.msra.mxu0 %v3240
    %3675 = vmatprep.subr.bf16.mxu0 %v3245
    %3676 = vmatpush1.bf16.msra.mxu0 %v3244
    %3677 = vmatprep.subr.bf16.mxu0 %v3249
    %3678 = vmatpush1.bf16.msra.mxu0 %v3248
    %3679 = vmatprep.mubr.bf16.mxu0 %v2267
    %3680 = vmatmul.mubr.bf16.gmra.mrb[0].mxu0 %v2266
    %v3681 = vpop.f32.mrb[0].mxu0
    %v3682 = vadd.f32 %v3641, %v3681
    %v3683 = vpop.f32.mrb[0].mxu0
    %v3684 = vadd.f32 %v3643, %v3683
    %v3685 = vpop.f32.mrb[0].mxu0
    %v3686 = vpop.f32.mrb[0].mxu0
    %3687 = vdwg.mxu0
    %v3688 = vmax.f32 %v3559, 0.0
    %v3689 = vmax.f32 %v3561, 0.0
    %v3690 = vmax.f32 %v3682, 0.0
    %v3691 = vmax.f32 %v3684, 0.0
    %v3692 = vpack.c.bf16 %v3688, %v3688
    %v3693 = vpack.c.bf16 %v3689, %v3689
    %v3694 = vpack.c.bf16 %v3690, %v3690
    %v3695 = vpack.c.bf16 %v3691, %v3691
    %v3696 = vld [vmem:[#allocation11] sm:$0xf]
    %v3697 = vld [vmem:[#allocation11 + $0x4] sm:$0xf]
    %v3698 = vld [vmem:[#allocation11 + $0x8] sm:$0xf]
    %v3699 = vld [vmem:[#allocation11 + $0xc] sm:$0xf]
    %v3700 = vld [vmem:[#allocation11 + $0x10] sm:$0xf]
    %v3701 = vld [vmem:[#allocation11 + $0x14] sm:$0xf]
    %v3702 = vld [vmem:[#allocation11 + $0x18] sm:$0xf]
    %v3703 = vld [vmem:[#allocation11 + $0x1c] sm:$0xf]
    %v3704 = vld [vmem:[#allocation11 + $0x20] sm:$0xf]
    %v3705 = vld [vmem:[#allocation11 + $0x24] sm:$0xf]
    %v3706 = vld [vmem:[#allocation11 + $0x28] sm:$0xf]
    %v3707 = vld [vmem:[#allocation11 + $0x2c] sm:$0xf]
    %v3708 = vld [vmem:[#allocation11 + $0x30] sm:$0xf]
    %v3709 = vld [vmem:[#allocation11 + $0x34] sm:$0xf]
    %v3710 = vld [vmem:[#allocation11 + $0x38] sm:$0xf]
    %v3711 = vld [vmem:[#allocation11 + $0x3c] sm:$0xf]
    %v3712 = vld [vmem:[#allocation11 + $0x40] sm:$0xf]
    %v3713 = vld [vmem:[#allocation11 + $0x44] sm:$0xf]
    %v3714 = vld [vmem:[#allocation11 + $0x48] sm:$0xf]
    %v3715 = vld [vmem:[#allocation11 + $0x4c] sm:$0xf]
    %v3716 = vld [vmem:[#allocation11 + $0x50] sm:$0xf]
    %v3717 = vld [vmem:[#allocation11 + $0x54] sm:$0xf]
    %v3718 = vld [vmem:[#allocation11 + $0x58] sm:$0xf]
    %v3719 = vld [vmem:[#allocation11 + $0x5c] sm:$0xf]
    %v3720 = vld [vmem:[#allocation11 + $0x60] sm:$0xf]
    %v3721 = vld [vmem:[#allocation11 + $0x64] sm:$0xf]
    %v3722 = vld [vmem:[#allocation11 + $0x68] sm:$0xf]
    %v3723 = vld [vmem:[#allocation11 + $0x6c] sm:$0xf]
    %v3724 = vld [vmem:[#allocation11 + $0x70] sm:$0xf]
    %v3725 = vld [vmem:[#allocation11 + $0x74] sm:$0xf]
    %v3726 = vld [vmem:[#allocation11 + $0x78] sm:$0xf]
    %v3727 = vld [vmem:[#allocation11 + $0x7c] sm:$0xf]
    %v3728 = vld [vmem:[#allocation11 + $0x80] sm:$0xf]
    %v3729 = vld [vmem:[#allocation11 + $0x84] sm:$0xf]
    %v3730 = vld [vmem:[#allocation11 + $0x88] sm:$0xf]
    %v3731 = vld [vmem:[#allocation11 + $0x8c] sm:$0xf]
    %v3732 = vld [vmem:[#allocation11 + $0x90] sm:$0xf]
    %v3733 = vld [vmem:[#allocation11 + $0x94] sm:$0xf]
    %v3734 = vld [vmem:[#allocation11 + $0x98] sm:$0xf]
    %v3735 = vld [vmem:[#allocation11 + $0x9c] sm:$0xf]
    %v3736 = vld [vmem:[#allocation11 + $0xa0] sm:$0xf]
    %v3737 = vld [vmem:[#allocation11 + $0xa4] sm:$0xf]
    %v3738 = vld [vmem:[#allocation11 + $0xa8] sm:$0xf]
    %v3739 = vld [vmem:[#allocation11 + $0xac] sm:$0xf]
    %v3740 = vld [vmem:[#allocation11 + $0xb0] sm:$0xf]
    %v3741 = vld [vmem:[#allocation11 + $0xb4] sm:$0xf]
    %v3742 = vld [vmem:[#allocation11 + $0xb8] sm:$0xf]
    %v3743 = vld [vmem:[#allocation11 + $0xbc] sm:$0xf]
    %v3744 = vld [vmem:[#allocation11 + $0xc0] sm:$0xf]
    %v3745 = vld [vmem:[#allocation11 + $0xc4] sm:$0xf]
    %v3746 = vld [vmem:[#allocation11 + $0xc8] sm:$0xf]
    %v3747 = vld [vmem:[#allocation11 + $0xcc] sm:$0xf]
    %v3748 = vld [vmem:[#allocation11 + $0xd0] sm:$0xf]
    %v3749 = vld [vmem:[#allocation11 + $0xd4] sm:$0xf]
    %v3750 = vld [vmem:[#allocation11 + $0xd8] sm:$0xf]
    %v3751 = vld [vmem:[#allocation11 + $0xdc] sm:$0xf]
    %v3752 = vld [vmem:[#allocation11 + $0xe0] sm:$0xf]
    %v3753 = vld [vmem:[#allocation11 + $0xe4] sm:$0xf]
    %v3754 = vld [vmem:[#allocation11 + $0xe8] sm:$0xf]
    %v3755 = vld [vmem:[#allocation11 + $0xec] sm:$0xf]
    %v3756 = vld [vmem:[#allocation11 + $0xf0] sm:$0xf]
    %v3757 = vld [vmem:[#allocation11 + $0xf4] sm:$0xf]
    %v3758 = vld [vmem:[#allocation11 + $0xf8] sm:$0xf]
    %v3759 = vld [vmem:[#allocation11 + $0xfc] sm:$0xf]
    %v3760 = vld [vmem:[#allocation13] sm:$0x1]
    %v3762 = vlaneseq
    %v3763 = vshrl.u32 %v3762, 7
    %v3764 = vsub.s32 0, %v3763
    %v3765 = vrot.slane %v3760, %v3764
    %v3831 = vunpack.c.l.b16 %v3696
    %v3832 = vunpack.c.l.b16 %v3697
    %v3833 = vunpack.c.l.b16 %v3698
    %v3834 = vunpack.c.l.b16 %v3699
    %v3835 = vunpack.c.l.b16 %v3700
    %v3836 = vunpack.c.l.b16 %v3701
    %v3837 = vunpack.c.l.b16 %v3702
    %v3838 = vunpack.c.l.b16 %v3703
    %v3839 = vunpack.c.l.b16 %v3704
    %v3840 = vunpack.c.l.b16 %v3705
    %v3841 = vunpack.c.l.b16 %v3706
    %v3842 = vunpack.c.l.b16 %v3707
    %v3843 = vunpack.c.l.b16 %v3708
    %v3844 = vunpack.c.l.b16 %v3709
    %v3845 = vunpack.c.l.b16 %v3710
    %v3846 = vunpack.c.l.b16 %v3711
    %v3847 = vunpack.c.l.b16 %v3712
    %v3848 = vunpack.c.l.b16 %v3713
    %v3849 = vunpack.c.l.b16 %v3714
    %v3850 = vunpack.c.l.b16 %v3715
    %v3851 = vunpack.c.l.b16 %v3716
    %v3852 = vunpack.c.l.b16 %v3717
    %v3853 = vunpack.c.l.b16 %v3718
    %v3854 = vunpack.c.l.b16 %v3719
    %v3855 = vunpack.c.l.b16 %v3720
    %v3856 = vunpack.c.l.b16 %v3721
    %v3857 = vunpack.c.l.b16 %v3722
    %v3858 = vunpack.c.l.b16 %v3723
    %v3859 = vunpack.c.l.b16 %v3724
    %v3860 = vunpack.c.l.b16 %v3725
    %v3861 = vunpack.c.l.b16 %v3726
    %v3862 = vunpack.c.l.b16 %v3727
    %v3863 = vunpack.c.l.b16 %v3728
    %v3864 = vunpack.c.l.b16 %v3729
    %v3865 = vunpack.c.l.b16 %v3730
    %v3866 = vunpack.c.l.b16 %v3731
    %v3867 = vunpack.c.l.b16 %v3732
    %v3868 = vunpack.c.l.b16 %v3733
    %v3869 = vunpack.c.l.b16 %v3734
    %v3870 = vunpack.c.l.b16 %v3735
    %v3871 = vunpack.c.l.b16 %v3736
    %v3872 = vunpack.c.l.b16 %v3737
    %v3873 = vunpack.c.l.b16 %v3738
    %v3874 = vunpack.c.l.b16 %v3739
    %v3875 = vunpack.c.l.b16 %v3740
    %v3876 = vunpack.c.l.b16 %v3741
    %v3877 = vunpack.c.l.b16 %v3742
    %v3878 = vunpack.c.l.b16 %v3743
    %v3879 = vunpack.c.l.b16 %v3744
    %v3880 = vunpack.c.l.b16 %v3745
    %v3881 = vunpack.c.l.b16 %v3746
    %v3882 = vunpack.c.l.b16 %v3747
    %v3883 = vunpack.c.l.b16 %v3748
    %v3884 = vunpack.c.l.b16 %v3749
    %v3885 = vunpack.c.l.b16 %v3750
    %v3886 = vunpack.c.l.b16 %v3751
    %v3887 = vunpack.c.l.b16 %v3752
    %v3888 = vunpack.c.l.b16 %v3753
    %v3889 = vunpack.c.l.b16 %v3754
    %v3890 = vunpack.c.l.b16 %v3755
    %v3891 = vunpack.c.l.b16 %v3756
    %v3892 = vunpack.c.l.b16 %v3757
    %v3893 = vunpack.c.l.b16 %v3758
    %v3894 = vunpack.c.l.b16 %v3759
    %v3895 = vpack.c.b16 %v3832, %v3831
    %v3896 = vpack.c.b16 %v3834, %v3833
    %v3897 = vpack.c.b16 %v3836, %v3835
    %v3898 = vpack.c.b16 %v3838, %v3837
    %v3899 = vpack.c.b16 %v3840, %v3839
    %v3900 = vpack.c.b16 %v3842, %v3841
    %v3901 = vpack.c.b16 %v3844, %v3843
    %v3902 = vpack.c.b16 %v3846, %v3845
    %v3903 = vpack.c.b16 %v3848, %v3847
    %v3904 = vpack.c.b16 %v3850, %v3849
    %v3905 = vpack.c.b16 %v3852, %v3851
    %v3906 = vpack.c.b16 %v3854, %v3853
    %v3907 = vpack.c.b16 %v3856, %v3855
    %v3908 = vpack.c.b16 %v3858, %v3857
    %v3909 = vpack.c.b16 %v3860, %v3859
    %v3910 = vpack.c.b16 %v3862, %v3861
    %v3911 = vpack.c.b16 %v3864, %v3863
    %v3912 = vpack.c.b16 %v3866, %v3865
    %v3913 = vpack.c.b16 %v3868, %v3867
    %v3914 = vpack.c.b16 %v3870, %v3869
    %v3915 = vpack.c.b16 %v3872, %v3871
    %v3916 = vpack.c.b16 %v3874, %v3873
    %v3917 = vpack.c.b16 %v3876, %v3875
    %v3918 = vpack.c.b16 %v3878, %v3877
    %v3919 = vpack.c.b16 %v3880, %v3879
    %v3920 = vpack.c.b16 %v3882, %v3881
    %v3921 = vpack.c.b16 %v3884, %v3883
    %v3922 = vpack.c.b16 %v3886, %v3885
    %v3923 = vpack.c.b16 %v3888, %v3887
    %v3924 = vpack.c.b16 %v3890, %v3889
    %v3925 = vpack.c.b16 %v3892, %v3891
    %v3926 = vpack.c.b16 %v3894, %v3893
    %3959 = vmatprep.subr.bf16.mxu0 0
    %3960 = vmatpush1.bf16.msra.mxu0 %v3895
    %3961 = vmatprep.subr.bf16.mxu0 0
    %3962 = vmatpush1.bf16.msra.mxu0 %v3896
    %3963 = vmatprep.subr.bf16.mxu0 0
    %3964 = vmatpush1.bf16.msra.mxu0 %v3897
    %3965 = vmatprep.subr.bf16.mxu0 0
    %3966 = vmatpush1.bf16.msra.mxu0 %v3898
    %3967 = vmatprep.subr.bf16.mxu0 0
    %3968 = vmatpush1.bf16.msra.mxu0 %v3899
    %3969 = vmatprep.subr.bf16.mxu0 0
    %3970 = vmatpush1.bf16.msra.mxu0 %v3900
    %3971 = vmatprep.subr.bf16.mxu0 0
    %3972 = vmatpush1.bf16.msra.mxu0 %v3901
    %3973 = vmatprep.subr.bf16.mxu0 0
    %3974 = vmatpush1.bf16.msra.mxu0 %v3902
    %3975 = vmatprep.subr.bf16.mxu0 0
    %3976 = vmatpush1.bf16.msra.mxu0 %v3903
    %3977 = vmatprep.subr.bf16.mxu0 0
    %3978 = vmatpush1.bf16.msra.mxu0 %v3904
    %3979 = vmatprep.subr.bf16.mxu0 0
    %3980 = vmatpush1.bf16.msra.mxu0 %v3905
    %3981 = vmatprep.subr.bf16.mxu0 0
    %3982 = vmatpush1.bf16.msra.mxu0 %v3906
    %3983 = vmatprep.subr.bf16.mxu0 0
    %3984 = vmatpush1.bf16.msra.mxu0 %v3907
    %3985 = vmatprep.subr.bf16.mxu0 0
    %3986 = vmatpush1.bf16.msra.mxu0 %v3908
    %3987 = vmatprep.subr.bf16.mxu0 0
    %3988 = vmatpush1.bf16.msra.mxu0 %v3909
    %3989 = vmatprep.subr.bf16.mxu0 0
    %3990 = vmatpush1.bf16.msra.mxu0 %v3910
    %3991 = vmatprep.mubr.bf16.mxu0 %v3693
    %3992 = vmatmul.mubr.bf16.gmra.mrb[0].mxu0 %v3692
    %v3993 = vpop.f32.mrb[0].mxu0
    %v3994 = vadd.f32 %v3765, %v3993
    %v3995 = vpop.f32.mrb[0].mxu0
    %v3996 = vpop.f32.mrb[0].mxu0
    %v3997 = vpop.f32.mrb[0].mxu0
    %3998 = vdwg.mxu0
    %3999 = vmatprep.subr.bf16.mxu0 0
    %4000 = vmatpush1.bf16.msra.mxu0 %v3911
    %4001 = vmatprep.subr.bf16.mxu0 0
    %4002 = vmatpush1.bf16.msra.mxu0 %v3912
    %4003 = vmatprep.subr.bf16.mxu0 0
    %4004 = vmatpush1.bf16.msra.mxu0 %v3913
    %4005 = vmatprep.subr.bf16.mxu0 0
    %4006 = vmatpush1.bf16.msra.mxu0 %v3914
    %4007 = vmatprep.subr.bf16.mxu0 0
    %4008 = vmatpush1.bf16.msra.mxu0 %v3915
    %4009 = vmatprep.subr.bf16.mxu0 0
    %4010 = vmatpush1.bf16.msra.mxu0 %v3916
    %4011 = vmatprep.subr.bf16.mxu0 0
    %4012 = vmatpush1.bf16.msra.mxu0 %v3917
    %4013 = vmatprep.subr.bf16.mxu0 0
    %4014 = vmatpush1.bf16.msra.mxu0 %v3918
    %4015 = vmatprep.subr.bf16.mxu0 0
    %4016 = vmatpush1.bf16.msra.mxu0 %v3919
    %4017 = vmatprep.subr.bf16.mxu0 0
    %4018 = vmatpush1.bf16.msra.mxu0 %v3920
    %4019 = vmatprep.subr.bf16.mxu0 0
    %4020 = vmatpush1.bf16.msra.mxu0 %v3921
    %4021 = vmatprep.subr.bf16.mxu0 0
    %4022 = vmatpush1.bf16.msra.mxu0 %v3922
    %4023 = vmatprep.subr.bf16.mxu0 0
    %4024 = vmatpush1.bf16.msra.mxu0 %v3923
    %4025 = vmatprep.subr.bf16.mxu0 0
    %4026 = vmatpush1.bf16.msra.mxu0 %v3924
    %4027 = vmatprep.subr.bf16.mxu0 0
    %4028 = vmatpush1.bf16.msra.mxu0 %v3925
    %4029 = vmatprep.subr.bf16.mxu0 0
    %4030 = vmatpush1.bf16.msra.mxu0 %v3926
    %4031 = vmatprep.mubr.bf16.mxu0 %v3695
    %4032 = vmatmul.mubr.bf16.gmra.mrb[0].mxu0 %v3694
    %v4033 = vpop.f32.mrb[0].mxu0
    %v4034 = vadd.f32 %v3994, %v4033
    %v4035 = vpop.f32.mrb[0].mxu0
    %v4036 = vpop.f32.mrb[0].mxu0
    %v4037 = vpop.f32.mrb[0].mxu0
    %4038 = vdwg.mxu0
    %4039 = vmax.xlane.f32.xlu0 %v4034
    %v4040 = vpop.xlane.xlu0 %4039
    %v4041 = vsub.f32 %v4034, %v4040
    %v4042 = vmul.f32 %v4041, 1.442695
    %v4043 = vpow.pop %v4042
    %4044 = vadd.xlane.f32.xlu0 %v4043
    %v4045 = vpop.xlane.xlu0 %4044
    %v4046 = vlog2.pop %v4045
    %v4047 = vmul.f32 %v4046, 0.6931472
    %v4048 = vsub.f32 %v4041, %v4047
    %4049 = vst [vmem:[#allocation14] sm:$0xff] %v4048
    // Predicated region
    $region58: #{tpu_custom_call.1} parent=1 // pred_check
      _
    $region59: #{tpu_custom_call.1} parent=1 // pred_check_branch
      %4051 = sbr.rel (0) target = $region61
    $region60: #{tpu_custom_call.1} parent=1 // pred_region
      %s4053 = ssub.s32 128, 128
      %4054 = vsyncadd [#allocation4], %s4053
      %s4056 = sshll.u32 [#allocation14], 4
      %s4057 = int_to_ptr.vmem [resolvable:$true] %s4056
      %4059 = dma.vmem_to_hbm [thread:$0]  %s4057, 128, %s7, [#allocation4]
    $region61: #{tpu_custom_call.1} parent=1 // pred_fallthru
      _
    // Predicated region
    $region62: #{tpu_custom_call.1} parent=1 // pred_check
      _
    $region63: #{tpu_custom_call.1} parent=1 // pred_check_branch
      %4061 = sbr.rel (0) target = $region65
    $region64: #{tpu_custom_call.1} parent=1 // pred_region
      %4062 = dma.done [#allocation4], 128
    $region65: #{tpu_custom_call.1} parent=1 // pred_fallthru
      _
    %4063 = vsyncpa [#allocation3], 1
    %4064 = vsyncpa [#allocation6], 1
    %4065 = vsyncpa [#allocation9], 1
    %4066 = vsyncpa [#allocation12], 1
    %4067 = vsyncpa [#allocation4], 1

</llo_original>
